<compile_context>
chip_gen: v6e
topology: v6e:2x2x1
jax: 0.10.0
libtpu: 0.0.40
codegen_flags: <defaults>
</compile_context>

<pallas_src>
import functools

import jax
import jax.numpy as jnp
from jax.experimental import pallas as pl
from jax.experimental.pallas import tpu as pltpu


# ----------------------------------------------------------------------------
# Shared helper: shifted-and-masked view  out[t] = z[t + offset] (0 outside)
# ----------------------------------------------------------------------------
def _shifted(z, offset, row, T):
    if offset == 0:
        return z
    s = (-offset) % T
    zz = pltpu.roll(z, shift=s, axis=0) if s != 0 else z
    if offset < 0:
        return jnp.where(row >= -offset, zz, 0.0)
    return jnp.where(row < T - offset, zz, 0.0)


# ----------------------------------------------------------------------------
# Fused encoder: framing -> Conv1D(1,N,L,stride=L/2) + ReLU -> cLN -> 1x1 proj
# ----------------------------------------------------------------------------
def _encoder_kernel(xl_ref, xr_ref, wt_ref, wb_ref, eb_ref, g_ref, bb_ref,
                    pw_ref, pb_ref, wout_ref, yout_ref):
    xl = xl_ref[0]                                   # (T, stride)  first half of frame
    xr = xr_ref[0]                                   # (T, stride)  second half of frame
    # encoder conv as two half-frame matmuls (frame = [xl | xr])
    w = (jnp.dot(xl, wt_ref[...], preferred_element_type=jnp.float32)
         + jnp.dot(xr, wb_ref[...], preferred_element_type=jnp.float32)
         + eb_ref[...])
    w = jnp.maximum(w, 0.0)                          # ReLU, (T, N)
    # channel-wise LayerNorm (per frame, over N channels)
    mean = jnp.mean(w, axis=-1, keepdims=True)
    var = jnp.mean((w - mean) ** 2, axis=-1, keepdims=True)
    wn = (w - mean) * jax.lax.rsqrt(var + 1e-5) * g_ref[...] + bb_ref[...]
    # 1x1 projection N -> B
    yout_ref[0] = jnp.dot(wn, pw_ref[...], preferred_element_type=jnp.float32) + pb_ref[...]
    wout_ref[0] = w


def encoder_fused(x_left, x_right, w_top, w_bot, enc_b, ln_g, ln_b, proj_w, proj_b):
    batch, T, stride = x_left.shape
    N = w_top.shape[1]
    Bc = proj_w.shape[1]
    return pl.pallas_call(
        _encoder_kernel,
        out_shape=(jax.ShapeDtypeStruct((batch, T, N), jnp.float32),
                   jax.ShapeDtypeStruct((batch, T, Bc), jnp.float32)),
        grid=(batch,),
        in_specs=[
            pl.BlockSpec((1, T, stride), lambda n: (n, 0, 0)),
            pl.BlockSpec((1, T, stride), lambda n: (n, 0, 0)),
            pl.BlockSpec((stride, N), lambda n: (0, 0)),
            pl.BlockSpec((stride, N), lambda n: (0, 0)),
            pl.BlockSpec((1, N), lambda n: (0, 0)),
            pl.BlockSpec((1, N), lambda n: (0, 0)),
            pl.BlockSpec((1, N), lambda n: (0, 0)),
            pl.BlockSpec((N, Bc), lambda n: (0, 0)),
            pl.BlockSpec((1, Bc), lambda n: (0, 0)),
        ],
        out_specs=[pl.BlockSpec((1, T, N), lambda n: (n, 0, 0)),
                   pl.BlockSpec((1, T, Bc), lambda n: (n, 0, 0))],
        compiler_params=pltpu.CompilerParams(dimension_semantics=("parallel",)),
    )(x_left, x_right, w_top, w_bot, enc_b.reshape(1, N), ln_g.reshape(1, N),
      ln_b.reshape(1, N), proj_w, proj_b.reshape(1, Bc))


# ----------------------------------------------------------------------------
# Fused TCN repeat: X Conv1DBlocks chained entirely in VMEM.
# Per block:  1x1 -> PReLU -> gLN -> dilated depthwise conv (k=P, 'same')
#             -> PReLU -> gLN -> residual 1x1 (+x)  and skip 1x1 (+skip acc)
# ----------------------------------------------------------------------------
def _tcn_repeat_kernel(x_ref, skipin_ref,
                       w1_ref, b1_ref, a1_ref, g1_ref, be1_ref,
                       wd_ref, bd_ref, a2_ref, g2_ref, be2_ref,
                       ws_ref, bs_ref, wsk_ref, bsk_ref,
                       out_ref, skip_ref, *, dilations, P, T):
    x = x_ref[0]                                                     # (T, B)
    skip = skipin_ref[0]                                             # (T, Sc)
    row = jax.lax.broadcasted_iota(jnp.int32, (T, 1), 0)

    for j, d in enumerate(dilations):                                # unrolled over X blocks
        # ---- 1x1 conv (B -> H) --------------------------------------------
        y = jnp.dot(x, w1_ref[j], preferred_element_type=jnp.float32) + b1_ref[j]

        # ---- PReLU + gLN (global over this sample's (T,H); exact mean-of-means)
        z = jnp.where(y >= 0, y, a1_ref[j] * y)
        mean = jnp.mean(jnp.mean(z, axis=-1, keepdims=True), axis=0, keepdims=True)
        var = jnp.mean(jnp.mean((z - mean) ** 2, axis=-1, keepdims=True),
                       axis=0, keepdims=True)
        z = g1_ref[j] * (z - mean) * jax.lax.rsqrt(var + 1e-5) + be1_ref[j]

        # ---- depthwise dilated conv, kernel=P, 'same' (pad = d*(P-1)//2) ----
        wd = wd_ref[j]                                               # (P, H)
        pad = d * (P - 1) // 2
        y2 = bd_ref[j]
        for k in range(P):
            y2 = y2 + wd[k:k + 1, :] * _shifted(z, k * d - pad, row, T)

        # ---- PReLU + gLN (2) ------------------------------------------------
        z2 = jnp.where(y2 >= 0, y2, a2_ref[j] * y2)
        mean2 = jnp.mean(jnp.mean(z2, axis=-1, keepdims=True), axis=0, keepdims=True)
        var2 = jnp.mean(jnp.mean((z2 - mean2) ** 2, axis=-1, keepdims=True),
                        axis=0, keepdims=True)
        z2 = g2_ref[j] * (z2 - mean2) * jax.lax.rsqrt(var2 + 1e-5) + be2_ref[j]

        # ---- residual and accumulated skip ----------------------------------
        x = x + jnp.dot(z2, ws_ref[j], preferred_element_type=jnp.float32) + bs_ref[j]
        skip = (skip + jnp.dot(z2, wsk_ref[j], preferred_element_type=jnp.float32)
                + bsk_ref[j])

    out_ref[0] = x
    skip_ref[0] = skip


def tcn_repeat(x, skip_in, rep, dilations, P):
    batch, T, Bc = x.shape
    Xb, _, H = rep["w1"].shape
    Sc = rep["wsk"].shape[2]
    kernel = functools.partial(_tcn_repeat_kernel,
                               dilations=tuple(int(d) for d in dilations),
                               P=int(P), T=int(T))
    return pl.pallas_call(
        kernel,
        out_shape=(jax.ShapeDtypeStruct((batch, T, Bc), jnp.float32),
                   jax.ShapeDtypeStruct((batch, T, Sc), jnp.float32)),
        grid=(batch,),
        in_specs=[
            pl.BlockSpec((1, T, Bc), lambda n: (n, 0, 0)),
            pl.BlockSpec((1, T, Sc), lambda n: (n, 0, 0)),
            pl.BlockSpec((Xb, Bc, H), lambda n: (0, 0, 0)),   # w1
            pl.BlockSpec((Xb, 1, H), lambda n: (0, 0, 0)),    # b1
            pl.BlockSpec((Xb, 1, H), lambda n: (0, 0, 0)),    # a1
            pl.BlockSpec((Xb, 1, H), lambda n: (0, 0, 0)),    # g1
            pl.BlockSpec((Xb, 1, H), lambda n: (0, 0, 0)),    # be1
            pl.BlockSpec((Xb, P, H), lambda n: (0, 0, 0)),    # wd
            pl.BlockSpec((Xb, 1, H), lambda n: (0, 0, 0)),    # bd
            pl.BlockSpec((Xb, 1, H), lambda n: (0, 0, 0)),    # a2
            pl.BlockSpec((Xb, 1, H), lambda n: (0, 0, 0)),    # g2
            pl.BlockSpec((Xb, 1, H), lambda n: (0, 0, 0)),    # be2
            pl.BlockSpec((Xb, H, Bc), lambda n: (0, 0, 0)),   # ws
            pl.BlockSpec((Xb, 1, Bc), lambda n: (0, 0, 0)),   # bs
            pl.BlockSpec((Xb, H, Sc), lambda n: (0, 0, 0)),   # wsk
            pl.BlockSpec((Xb, 1, Sc), lambda n: (0, 0, 0)),   # bsk
        ],
        out_specs=[pl.BlockSpec((1, T, Bc), lambda n: (n, 0, 0)),
                   pl.BlockSpec((1, T, Sc), lambda n: (n, 0, 0))],
        compiler_params=pltpu.CompilerParams(dimension_semantics=("parallel",)),
    )(x, skip_in, rep["w1"], rep["b1"], rep["a1"], rep["g1"], rep["be1"],
      rep["wd"], rep["bd"], rep["a2"], rep["g2"], rep["be2"],
      rep["ws"], rep["bs"], rep["wsk"], rep["bsk"])


# ----------------------------------------------------------------------------
# Fused tail: PReLU -> mask 1x1 -> sigmoid -> mask * w_enc -> decoder frames
#             -> in-kernel overlap-add (stride = L/2)
# ----------------------------------------------------------------------------
def _tail_kernel(tc_ref, w_ref, a_ref, mw_ref, mb_ref, dw_ref, o_ref,
                 *, num_spks, N, L, T):
    stride = L // 2
    t = tc_ref[0]                                     # (T, Sc)
    wenc = w_ref[0]                                   # (T, N)
    z = jnp.where(t >= 0, t, a_ref[...] * t)          # PReLU
    e = jnp.dot(z, mw_ref[...], preferred_element_type=jnp.float32) + mb_ref[...]
    m = jax.nn.sigmoid(e)                             # (T, num_spks*N)
    row = jax.lax.broadcasted_iota(jnp.int32, (T, 1), 0)
    for n in range(num_spks):
        s_n = wenc * m[:, n * N:(n + 1) * N]          # masked encoder output (T, N)
        frames = jnp.dot(s_n, dw_ref[...], preferred_element_type=jnp.float32)  # (T, L)
        fa = frames[:, :stride]                       # first half of each frame
        fb = frames[:, stride:]                       # second half of each frame
        # overlap-add: out_chunk[t] = fa[t] + fb[t-1],  out_chunk[T] = fb[T-1]
        fb_prev = _shifted(fb, -1, row, T)
        sig = jnp.concatenate([fa + fb_prev, fb[T - 1:T, :]], axis=0)  # (T+1, stride)
        o_ref[n, 0] = sig


def tail_decoder(total, w_enc, prelu_a, mask_w, mask_b, dec_w, num_spks):
    batch, T, Sc = total.shape
    N = w_enc.shape[2]
    L = dec_w.shape[1]
    stride = L // 2
    return pl.pallas_call(
        functools.partial(_tail_kernel, num_spks=num_spks, N=N, L=L, T=T),
        out_shape=jax.ShapeDtypeStruct((num_spks, batch, T + 1, stride), jnp.float32),
        grid=(batch,),
        in_specs=[
            pl.BlockSpec((1, T, Sc), lambda n: (n, 0, 0)),
            pl.BlockSpec((1, T, N), lambda n: (n, 0, 0)),
            pl.BlockSpec((1, Sc), lambda n: (0, 0)),
            pl.BlockSpec((Sc, num_spks * N), lambda n: (0, 0)),
            pl.BlockSpec((1, num_spks * N), lambda n: (0, 0)),
            pl.BlockSpec((N, L), lambda n: (0, 0)),
        ],
        out_specs=pl.BlockSpec((num_spks, 1, T + 1, stride), lambda n: (0, n, 0, 0)),
        compiler_params=pltpu.CompilerParams(dimension_semantics=("parallel",)),
    )(total, w_enc, prelu_a, mask_w, mask_b.reshape(1, num_spks * N), dec_w)


# ----------------------------------------------------------------------------
# Parameters (TCN block weights stacked along a leading X axis per repeat)
# ----------------------------------------------------------------------------
def init_params(key, *, L, N, B, Sc, H, P, X, R, Slice, num_spks):
    keys = iter(jax.random.split(key, 32 + 16 * Slice * R))

    def nrm(shape, scale=0.1):
        return scale * jax.random.normal(next(keys), shape, dtype=jnp.float32)

    p = {
        "enc_w": nrm((L, N)),            # Conv1D(1, N, L, stride=L//2) as framed matmul
        "enc_b": nrm((N,)),
        "ln_g": jnp.ones((N,), jnp.float32),
        "ln_b": jnp.zeros((N,), jnp.float32),
        "proj_w": nrm((N, B)),           # Conv1D(N, B, 1)
        "proj_b": nrm((B,)),
    }
    repeats = []
    for _s in range(Slice):
        for _r in range(R):
            repeats.append(dict(
                w1=nrm((X, B, H)), b1=nrm((X, 1, H)),
                a1=jnp.full((X, 1, H), 0.25, jnp.float32),
                g1=jnp.ones((X, 1, H), jnp.float32),
                be1=jnp.zeros((X, 1, H), jnp.float32),
                wd=nrm((X, P, H)), bd=nrm((X, 1, H)),
                a2=jnp.full((X, 1, H), 0.25, jnp.float32),
                g2=jnp.ones((X, 1, H), jnp.float32),
                be2=jnp.zeros((X, 1, H), jnp.float32),
                ws=nrm((X, H, B)), bs=nrm((X, 1, B)),
                wsk=nrm((X, H, Sc)), bsk=nrm((X, 1, Sc)),
            ))
    p["repeats"] = repeats
    p["wList"] = jax.random.normal(next(keys), (Slice,), dtype=jnp.float32)
    p["prelu_a"] = jnp.full((1, Sc), 0.25, jnp.float32)
    p["mask_w"] = nrm((Sc, num_spks * N))        # Conv1D(Sc, num_spks*N, 1)
    p["mask_b"] = nrm((num_spks * N,))
    p["dec_w"] = nrm((N, L))                     # ConvTranspose1d(N, 1, L, stride=L//2)
    p["dec_b"] = nrm((1,))                       # scalar bias (1 output channel)
    return p


# ----------------------------------------------------------------------------
# Forward
# ----------------------------------------------------------------------------
def mb_convtasnet_forward(params, x, *, L, N, B, Sc, H, P, X, R, Slice, num_spks):
    if x.ndim == 1:
        x = x[None, :]
    batch, samples = x.shape
    assert L % 2 == 0, "encoder/decoder framing assumes even L (stride = L/2)"
    assert P % 2 == 1, "non-causal 'same' depthwise conv assumes odd kernel size"
    stride = L // 2
    T = (samples - L) // stride + 1
    dilations = tuple(2 ** b for b in range(X))

    # --- fused encoder + cLN + 1x1 proj (framing via stride=L/2 split) ---------
    x_used = x[:, :(T + 1) * stride].reshape(batch, T + 1, stride)
    x_left = x_used[:, :T, :]       # first half of each frame
    x_right = x_used[:, 1:, :]      # second half of each frame
    w_enc, y = encoder_fused(x_left, x_right,
                             params["enc_w"][:stride], params["enc_w"][stride:],
                             params["enc_b"], params["ln_g"], params["ln_b"],
                             params["proj_w"], params["proj_b"])

    # --- TCN slices (one fused kernel per repeat of X Conv1DBlocks) -------------
    slice_input = y
    total = jnp.zeros((batch, T, Sc), jnp.float32)
    rep_idx = 0
    for s in range(Slice):
        skip_acc = jnp.zeros((batch, T, Sc), jnp.float32)
        for _r in range(R):
            y, skip_acc = tcn_repeat(y, skip_acc, params["repeats"][rep_idx],
                                     dilations, P)
            rep_idx += 1
        total = skip_acc * params["wList"][s] + total
        y = slice_input

    # --- fused tail: PReLU -> mask -> sigmoid -> apply -> decoder + overlap-add -
    sig = tail_decoder(total, w_enc, params["prelu_a"], params["mask_w"],
                       params["mask_b"], params["dec_w"], num_spks)
    # sig: (num_spks, batch, T+1, stride) already overlap-added; add decoder bias
    sig = sig.reshape(num_spks, batch, (T + 1) * stride) + params["dec_b"][0]
    return [sig[n] for n in range(num_spks)]


# ----------------------------------------------------------------------------
if __name__ == "__main__":
    # small-but-consistent hyperparameters
    L, N, X, R, B, Sc, Slice, H, P = 16, 32, 3, 1, 16, 16, 1, 32, 3
    num_spks = 2
    batch = 2
    T = 8
    samples = L + (T - 1) * (L // 2)          # 72

    key = jax.random.PRNGKey(0)
    kx, kp = jax.random.split(key)
    x = jax.random.normal(kx, (batch, samples), dtype=jnp.float32)
    params = init_params(kp, L=L, N=N, B=B, Sc=Sc, H=H, P=P, X=X, R=R,
                         Slice=Slice, num_spks=num_spks)

    fwd = jax.jit(functools.partial(mb_convtasnet_forward, L=L, N=N, B=B, Sc=Sc,
                                    H=H, P=P, X=X, R=R, Slice=Slice,
                                    num_spks=num_spks))
    outs = jax.block_until_ready(fwd(params, x))

    assert len(outs) == num_spks
    assert all(o.shape == (batch, samples) for o in outs)
    assert all(bool(jnp.all(jnp.isfinite(o))) for o in outs)
    print("KERNEL_OK")
</pallas_src>

<mosaic_0001>
module attributes {stable_mosaic.version = 11 : i64} {
  func.func @_tail_kernel(%arg0: i32, %arg1: memref<1x8x16xf32, #tpu.memory_space<vmem>>, %arg2: memref<1x8x32xf32, #tpu.memory_space<vmem>>, %arg3: memref<1x16xf32, #tpu.memory_space<vmem>>, %arg4: memref<16x64xf32, #tpu.memory_space<vmem>>, %arg5: memref<1x64xf32, #tpu.memory_space<vmem>>, %arg6: memref<32x16xf32, #tpu.memory_space<vmem>>, %arg7: memref<2x1x9x8xf32, #tpu.memory_space<vmem>>) attributes {dimension_semantics = [#tpu.dimension_semantics<parallel>], iteration_bounds = array<i64: 2>, scalar_prefetch = 0 : i64, scratch_operands = 0 : i64, tpu.core_type = #tpu.core_type<tc>, window_params = [{transform_indices = @transform_0, window_bounds = array<i64: 1, 8, 16>}, {transform_indices = @transform_1, window_bounds = array<i64: 1, 8, 32>}, {pipeline_mode = #tpu.pipeline_mode<synchronous>, transform_indices = @transform_2, window_bounds = array<i64: 1, 16>}, {pipeline_mode = #tpu.pipeline_mode<synchronous>, transform_indices = @transform_3, window_bounds = array<i64: 16, 64>}, {pipeline_mode = #tpu.pipeline_mode<synchronous>, transform_indices = @transform_4, window_bounds = array<i64: 1, 64>}, {pipeline_mode = #tpu.pipeline_mode<synchronous>, transform_indices = @transform_5, window_bounds = array<i64: 32, 16>}, {transform_indices = @transform_6, window_bounds = array<i64: 2, 1, 9, 8>}]} {
    %c0 = arith.constant 0 : index
    %c0_0 = arith.constant 0 : index
    %c0_1 = arith.constant 0 : index
    %0 = vector.load %arg1[%c0, %c0_0, %c0_1] : memref<1x8x16xf32, #tpu.memory_space<vmem>>, vector<1x8x16xf32>
    %1 = vector.shape_cast %0 : vector<1x8x16xf32> to vector<8x16xf32>
    %c0_2 = arith.constant 0 : index
    %c0_3 = arith.constant 0 : index
    %c0_4 = arith.constant 0 : index
    %2 = vector.load %arg2[%c0_2, %c0_3, %c0_4] : memref<1x8x32xf32, #tpu.memory_space<vmem>>, vector<1x8x32xf32>
    %3 = vector.shape_cast %2 : vector<1x8x32xf32> to vector<8x32xf32>
    %cst = arith.constant 0.000000e+00 : f32
    %4 = vector.broadcast %cst : f32 to vector<8x16xf32>
    %5 = arith.cmpf oge, %1, %4 : vector<8x16xf32>
    %c0_5 = arith.constant 0 : index
    %c0_6 = arith.constant 0 : index
    %6 = vector.load %arg3[%c0_5, %c0_6] : memref<1x16xf32, #tpu.memory_space<vmem>>, vector<1x16xf32>
    %7 = vector.broadcast %6 : vector<1x16xf32> to vector<8x16xf32>
    %8 = arith.mulf %7, %1 : vector<8x16xf32>
    %9 = arith.select %5, %1, %8 : vector<8x16xi1>, vector<8x16xf32>
    %c0_7 = arith.constant 0 : index
    %c0_8 = arith.constant 0 : index
    %10 = vector.load %arg4[%c0_7, %c0_8] : memref<16x64xf32, #tpu.memory_space<vmem>>, vector<16x64xf32>
    %cst_9 = arith.constant dense<0.000000e+00> : vector<8x64xf32>
    %11 = tpu.matmul %9, %10, %cst_9 {dimension_numbers = #tpu.dot_dimension_numbers<[1], [0], [0], [1], [0, 0, 1, 1], [], []>} : vector<8x16xf32>, vector<16x64xf32>, vector<8x64xf32> -> vector<8x64xf32>
    %c0_10 = arith.constant 0 : index
    %c0_11 = arith.constant 0 : index
    %12 = vector.load %arg5[%c0_10, %c0_11] : memref<1x64xf32, #tpu.memory_space<vmem>>, vector<1x64xf32>
    %13 = vector.broadcast %12 : vector<1x64xf32> to vector<8x64xf32>
    %14 = arith.addf %11, %13 : vector<8x64xf32>
    %15 = arith.negf %14 : vector<8x64xf32>
    %16 = math.exp %15 : vector<8x64xf32>
    %cst_12 = arith.constant 1.000000e+00 : f32
    %17 = vector.broadcast %cst_12 : f32 to vector<8x64xf32>
    %18 = arith.addf %17, %16 : vector<8x64xf32>
    %19 = arith.divf %17, %18 : vector<8x64xf32>
    %20 = tpu.iota {dimensions = array<i32: 0>} : vector<8x1xi32>
    %21 = vector.extract_strided_slice %19 {offsets = [0, 0], sizes = [8, 32], strides = [1, 1]} : vector<8x64xf32> to vector<8x32xf32>
    %22 = arith.mulf %3, %21 : vector<8x32xf32>
    %c0_13 = arith.constant 0 : index
    %c0_14 = arith.constant 0 : index
    %23 = vector.load %arg6[%c0_13, %c0_14] : memref<32x16xf32, #tpu.memory_space<vmem>>, vector<32x16xf32>
    %cst_15 = arith.constant dense<0.000000e+00> : vector<8x16xf32>
    %24 = tpu.matmul %22, %23, %cst_15 {dimension_numbers = #tpu.dot_dimension_numbers<[1], [0], [0], [1], [0, 0, 1, 1], [], []>} : vector<8x32xf32>, vector<32x16xf32>, vector<8x16xf32> -> vector<8x16xf32>
    %25 = vector.extract_strided_slice %24 {offsets = [0, 0], sizes = [8, 8], strides = [1, 1]} : vector<8x16xf32> to vector<8x8xf32>
    %26 = vector.extract_strided_slice %24 {offsets = [0, 8], sizes = [8, 8], strides = [1, 1]} : vector<8x16xf32> to vector<8x8xf32>
    %c1_i32 = arith.constant 1 : i32
    %27 = tpu.dynamic_rotate %26 by %c1_i32 dim 0 : vector<8x8xf32>, i32 -> vector<8x8xf32>
    %c1_i32_16 = arith.constant 1 : i32
    %28 = vector.broadcast %c1_i32_16 : i32 to vector<8x1xi32>
    %29 = arith.cmpi sge, %20, %28 : vector<8x1xi32>
    %cst_17 = arith.constant 0.000000e+00 : f32
    %30 = vector.shape_cast %29 : vector<8x1xi1> to vector<8x1xi1>
    %31 = vector.broadcast %30 : vector<8x1xi1> to vector<8x8xi1>
    %32 = vector.broadcast %cst_17 : f32 to vector<8x8xf32>
    %33 = arith.select %31, %27, %32 : vector<8x8xi1>, vector<8x8xf32>
    %34 = arith.addf %25, %33 : vector<8x8xf32>
    %35 = vector.extract_strided_slice %26 {offsets = [7, 0], sizes = [1, 8], strides = [1, 1]} : vector<8x8xf32> to vector<1x8xf32>
    %36 = tpu.concatenate %34, %35 in 0 : vector<8x8xf32>, vector<1x8xf32> -> vector<9x8xf32>
    %c0_18 = arith.constant 0 : index
    %c0_19 = arith.constant 0 : index
    %c0_20 = arith.constant 0 : index
    %c0_21 = arith.constant 0 : index
    %37 = vector.load %arg7[%c0_18, %c0_19, %c0_20, %c0_21] : memref<2x1x9x8xf32, #tpu.memory_space<vmem>>, vector<1x1x9x8xf32>
    %38 = vector.shape_cast %37 : vector<1x1x9x8xf32> to vector<9x8xf32>
    %39 = vector.shape_cast %36 : vector<9x8xf32> to vector<1x1x9x8xf32>
    tpu.vector_store %arg7[%c0_18, %c0_19, %c0_20, %c0_21], %39 {strides = array<i32>} : memref<2x1x9x8xf32, #tpu.memory_space<vmem>>, vector<1x1x9x8xf32>,
    %40 = vector.extract_strided_slice %19 {offsets = [0, 32], sizes = [8, 32], strides = [1, 1]} : vector<8x64xf32> to vector<8x32xf32>
    %41 = arith.mulf %3, %40 : vector<8x32xf32>
    %c0_22 = arith.constant 0 : index
    %c0_23 = arith.constant 0 : index
    %42 = vector.load %arg6[%c0_22, %c0_23] : memref<32x16xf32, #tpu.memory_space<vmem>>, vector<32x16xf32>
    %cst_24 = arith.constant dense<0.000000e+00> : vector<8x16xf32>
    %43 = tpu.matmul %41, %42, %cst_24 {dimension_numbers = #tpu.dot_dimension_numbers<[1], [0], [0], [1], [0, 0, 1, 1], [], []>} : vector<8x32xf32>, vector<32x16xf32>, vector<8x16xf32> -> vector<8x16xf32>
    %44 = vector.extract_strided_slice %43 {offsets = [0, 0], sizes = [8, 8], strides = [1, 1]} : vector<8x16xf32> to vector<8x8xf32>
    %45 = vector.extract_strided_slice %43 {offsets = [0, 8], sizes = [8, 8], strides = [1, 1]} : vector<8x16xf32> to vector<8x8xf32>
    %c1_i32_25 = arith.constant 1 : i32
    %46 = tpu.dynamic_rotate %45 by %c1_i32_25 dim 0 : vector<8x8xf32>, i32 -> vector<8x8xf32>
    %c1_i32_26 = arith.constant 1 : i32
    %47 = vector.broadcast %c1_i32_26 : i32 to vector<8x1xi32>
    %48 = arith.cmpi sge, %20, %47 : vector<8x1xi32>
    %cst_27 = arith.constant 0.000000e+00 : f32
    %49 = vector.shape_cast %48 : vector<8x1xi1> to vector<8x1xi1>
    %50 = vector.broadcast %49 : vector<8x1xi1> to vector<8x8xi1>
    %51 = vector.broadcast %cst_27 : f32 to vector<8x8xf32>
    %52 = arith.select %50, %46, %51 : vector<8x8xi1>, vector<8x8xf32>
    %53 = arith.addf %44, %52 : vector<8x8xf32>
    %54 = vector.extract_strided_slice %45 {offsets = [7, 0], sizes = [1, 8], strides = [1, 1]} : vector<8x8xf32> to vector<1x8xf32>
    %55 = tpu.concatenate %53, %54 in 0 : vector<8x8xf32>, vector<1x8xf32> -> vector<9x8xf32>
    %c1 = arith.constant 1 : index
    %c0_28 = arith.constant 0 : index
    %c0_29 = arith.constant 0 : index
    %c0_30 = arith.constant 0 : index
    %56 = vector.load %arg7[%c1, %c0_28, %c0_29, %c0_30] : memref<2x1x9x8xf32, #tpu.memory_space<vmem>>, vector<1x1x9x8xf32>
    %57 = vector.shape_cast %56 : vector<1x1x9x8xf32> to vector<9x8xf32>
    %58 = vector.shape_cast %55 : vector<9x8xf32> to vector<1x1x9x8xf32>
    tpu.vector_store %arg7[%c1, %c0_28, %c0_29, %c0_30], %58 {strides = array<i32>} : memref<2x1x9x8xf32, #tpu.memory_space<vmem>>, vector<1x1x9x8xf32>,
    return
  }
  func.func @transform_0(%arg0: i32) -> (i32, i32, i32) {
    %c0_i32 = arith.constant 0 : i32
    %c0_i32_0 = arith.constant 0 : i32
    %c0_i32_1 = arith.constant 0 : i32
    return %arg0, %c0_i32, %c0_i32_0 : i32, i32, i32
  }
  func.func @transform_1(%arg0: i32) -> (i32, i32, i32) {
    %c0_i32 = arith.constant 0 : i32
    %c0_i32_0 = arith.constant 0 : i32
    %c0_i32_1 = arith.constant 0 : i32
    return %arg0, %c0_i32, %c0_i32_0 : i32, i32, i32
  }
  func.func @transform_2(%arg0: i32) -> (i32, i32) {
    %c0_i32 = arith.constant 0 : i32
    %c0_i32_0 = arith.constant 0 : i32
    %c0_i32_1 = arith.constant 0 : i32
    return %c0_i32, %c0_i32_0 : i32, i32
  }
  func.func @transform_3(%arg0: i32) -> (i32, i32) {
    %c0_i32 = arith.constant 0 : i32
    %c0_i32_0 = arith.constant 0 : i32
    %c0_i32_1 = arith.constant 0 : i32
    return %c0_i32, %c0_i32_0 : i32, i32
  }
  func.func @transform_4(%arg0: i32) -> (i32, i32) {
    %c0_i32 = arith.constant 0 : i32
    %c0_i32_0 = arith.constant 0 : i32
    %c0_i32_1 = arith.constant 0 : i32
    return %c0_i32, %c0_i32_0 : i32, i32
  }
  func.func @transform_5(%arg0: i32) -> (i32, i32) {
    %c0_i32 = arith.constant 0 : i32
    %c0_i32_0 = arith.constant 0 : i32
    %c0_i32_1 = arith.constant 0 : i32
    return %c0_i32, %c0_i32_0 : i32, i32
  }
  func.func @transform_6(%arg0: i32) -> (i32, i32, i32, i32) {
    %c0_i32 = arith.constant 0 : i32
    %c0_i32_0 = arith.constant 0 : i32
    %c0_i32_1 = arith.constant 0 : i32
    %c0_i32_2 = arith.constant 0 : i32
    return %c0_i32, %arg0, %c0_i32_0, %c0_i32_1 : i32, i32, i32, i32
  }
}

module attributes {stable_mosaic.version = 11 : i64} {
  func.func @_encoder_kernel(%arg0: i32, %arg1: memref<1x8x8xf32, #tpu.memory_space<vmem>>, %arg2: memref<1x8x8xf32, #tpu.memory_space<vmem>>, %arg3: memref<8x32xf32, #tpu.memory_space<vmem>>, %arg4: memref<8x32xf32, #tpu.memory_space<vmem>>, %arg5: memref<1x32xf32, #tpu.memory_space<vmem>>, %arg6: memref<1x32xf32, #tpu.memory_space<vmem>>, %arg7: memref<1x32xf32, #tpu.memory_space<vmem>>, %arg8: memref<32x16xf32, #tpu.memory_space<vmem>>, %arg9: memref<1x16xf32, #tpu.memory_space<vmem>>, %arg10: memref<1x8x32xf32, #tpu.memory_space<vmem>>, %arg11: memref<1x8x16xf32, #tpu.memory_space<vmem>>) attributes {dimension_semantics = [#tpu.dimension_semantics<parallel>], iteration_bounds = array<i64: 2>, scalar_prefetch = 0 : i64, scratch_operands = 0 : i64, tpu.core_type = #tpu.core_type<tc>, window_params = [{transform_indices = @transform_0, window_bounds = array<i64: 1, 8, 8>}, {transform_indices = @transform_1, window_bounds = array<i64: 1, 8, 8>}, {pipeline_mode = #tpu.pipeline_mode<synchronous>, transform_indices = @transform_2, window_bounds = array<i64: 8, 32>}, {pipeline_mode = #tpu.pipeline_mode<synchronous>, transform_indices = @transform_3, window_bounds = array<i64: 8, 32>}, {pipeline_mode = #tpu.pipeline_mode<synchronous>, transform_indices = @transform_4, window_bounds = array<i64: 1, 32>}, {pipeline_mode = #tpu.pipeline_mode<synchronous>, transform_indices = @transform_5, window_bounds = array<i64: 1, 32>}, {pipeline_mode = #tpu.pipeline_mode<synchronous>, transform_indices = @transform_6, window_bounds = array<i64: 1, 32>}, {pipeline_mode = #tpu.pipeline_mode<synchronous>, transform_indices = @transform_7, window_bounds = array<i64: 32, 16>}, {pipeline_mode = #tpu.pipeline_mode<synchronous>, transform_indices = @transform_8, window_bounds = array<i64: 1, 16>}, {transform_indices = @transform_9, window_bounds = array<i64: 1, 8, 32>}, {transform_indices = @transform_10, window_bounds = array<i64: 1, 8, 16>}]} {
    %c0 = arith.constant 0 : index
    %c0_0 = arith.constant 0 : index
    %c0_1 = arith.constant 0 : index
    %0 = vector.load %arg1[%c0, %c0_0, %c0_1] : memref<1x8x8xf32, #tpu.memory_space<vmem>>, vector<1x8x8xf32>
    %1 = vector.shape_cast %0 : vector<1x8x8xf32> to vector<8x8xf32>
    %c0_2 = arith.constant 0 : index
    %c0_3 = arith.constant 0 : index
    %c0_4 = arith.constant 0 : index
    %2 = vector.load %arg2[%c0_2, %c0_3, %c0_4] : memref<1x8x8xf32, #tpu.memory_space<vmem>>, vector<1x8x8xf32>
    %3 = vector.shape_cast %2 : vector<1x8x8xf32> to vector<8x8xf32>
    %c0_5 = arith.constant 0 : index
    %c0_6 = arith.constant 0 : index
    %4 = vector.load %arg3[%c0_5, %c0_6] : memref<8x32xf32, #tpu.memory_space<vmem>>, vector<8x32xf32>
    %cst = arith.constant dense<0.000000e+00> : vector<8x32xf32>
    %5 = tpu.matmul %1, %4, %cst {dimension_numbers = #tpu.dot_dimension_numbers<[1], [0], [0], [1], [0, 0, 1, 1], [], []>} : vector<8x8xf32>, vector<8x32xf32>, vector<8x32xf32> -> vector<8x32xf32>
    %c0_7 = arith.constant 0 : index
    %c0_8 = arith.constant 0 : index
    %6 = vector.load %arg4[%c0_7, %c0_8] : memref<8x32xf32, #tpu.memory_space<vmem>>, vector<8x32xf32>
    %cst_9 = arith.constant dense<0.000000e+00> : vector<8x32xf32>
    %7 = tpu.matmul %3, %6, %cst_9 {dimension_numbers = #tpu.dot_dimension_numbers<[1], [0], [0], [1], [0, 0, 1, 1], [], []>} : vector<8x8xf32>, vector<8x32xf32>, vector<8x32xf32> -> vector<8x32xf32>
    %8 = arith.addf %5, %7 : vector<8x32xf32>
    %c0_10 = arith.constant 0 : index
    %c0_11 = arith.constant 0 : index
    %9 = vector.load %arg5[%c0_10, %c0_11] : memref<1x32xf32, #tpu.memory_space<vmem>>, vector<1x32xf32>
    %10 = vector.broadcast %9 : vector<1x32xf32> to vector<8x32xf32>
    %11 = arith.addf %8, %10 : vector<8x32xf32>
    %cst_12 = arith.constant 0.000000e+00 : f32
    %12 = vector.broadcast %cst_12 : f32 to vector<8x32xf32>
    %13 = arith.maximumf %11, %12 : vector<8x32xf32>
    %cst_13 = arith.constant dense<0.000000e+00> : vector<8xf32>
    %14 = vector.multi_reduction <add>, %13, %cst_13 [1] : vector<8x32xf32> to vector<8xf32>
    %15 = vector.shape_cast %14 : vector<8xf32> to vector<8x1xf32>
    %cst_14 = arith.constant 3.200000e+01 : f32
    %16 = vector.broadcast %cst_14 : f32 to vector<8x1xf32>
    %17 = arith.divf %15, %16 : vector<8x1xf32>
    %18 = vector.broadcast %17 : vector<8x1xf32> to vector<8x32xf32>
    %19 = arith.subf %13, %18 : vector<8x32xf32>
    %20 = arith.mulf %19, %19 : vector<8x32xf32>
    %cst_15 = arith.constant dense<0.000000e+00> : vector<8xf32>
    %21 = vector.multi_reduction <add>, %20, %cst_15 [1] : vector<8x32xf32> to vector<8xf32>
    %22 = vector.shape_cast %21 : vector<8xf32> to vector<8x1xf32>
    %cst_16 = arith.constant 3.200000e+01 : f32
    %23 = vector.broadcast %cst_16 : f32 to vector<8x1xf32>
    %24 = arith.divf %22, %23 : vector<8x1xf32>
    %25 = vector.broadcast %17 : vector<8x1xf32> to vector<8x32xf32>
    %26 = arith.subf %13, %25 : vector<8x32xf32>
    %cst_17 = arith.constant 9.99999974E-6 : f32
    %27 = vector.broadcast %cst_17 : f32 to vector<8x1xf32>
    %28 = arith.addf %24, %27 : vector<8x1xf32>
    %29 = math.rsqrt %28 : vector<8x1xf32>
    %30 = vector.broadcast %29 : vector<8x1xf32> to vector<8x32xf32>
    %31 = arith.mulf %26, %30 : vector<8x32xf32>
    %c0_18 = arith.constant 0 : index
    %c0_19 = arith.constant 0 : index
    %32 = vector.load %arg6[%c0_18, %c0_19] : memref<1x32xf32, #tpu.memory_space<vmem>>, vector<1x32xf32>
    %33 = vector.broadcast %32 : vector<1x32xf32> to vector<8x32xf32>
    %34 = arith.mulf %31, %33 : vector<8x32xf32>
    %c0_20 = arith.constant 0 : index
    %c0_21 = arith.constant 0 : index
    %35 = vector.load %arg7[%c0_20, %c0_21] : memref<1x32xf32, #tpu.memory_space<vmem>>, vector<1x32xf32>
    %36 = vector.broadcast %35 : vector<1x32xf32> to vector<8x32xf32>
    %37 = arith.addf %34, %36 : vector<8x32xf32>
    %c0_22 = arith.constant 0 : index
    %c0_23 = arith.constant 0 : index
    %38 = vector.load %arg8[%c0_22, %c0_23] : memref<32x16xf32, #tpu.memory_space<vmem>>, vector<32x16xf32>
    %cst_24 = arith.constant dense<0.000000e+00> : vector<8x16xf32>
    %39 = tpu.matmul %37, %38, %cst_24 {dimension_numbers = #tpu.dot_dimension_numbers<[1], [0], [0], [1], [0, 0, 1, 1], [], []>} : vector<8x32xf32>, vector<32x16xf32>, vector<8x16xf32> -> vector<8x16xf32>
    %c0_25 = arith.constant 0 : index
    %c0_26 = arith.constant 0 : index
    %40 = vector.load %arg9[%c0_25, %c0_26] : memref<1x16xf32, #tpu.memory_space<vmem>>, vector<1x16xf32>
    %41 = vector.broadcast %40 : vector<1x16xf32> to vector<8x16xf32>
    %42 = arith.addf %39, %41 : vector<8x16xf32>
    %c0_27 = arith.constant 0 : index
    %c0_28 = arith.constant 0 : index
    %c0_29 = arith.constant 0 : index
    %43 = vector.load %arg11[%c0_27, %c0_28, %c0_29] : memref<1x8x16xf32, #tpu.memory_space<vmem>>, vector<1x8x16xf32>
    %44 = vector.shape_cast %43 : vector<1x8x16xf32> to vector<8x16xf32>
    %45 = vector.shape_cast %42 : vector<8x16xf32> to vector<1x8x16xf32>
    tpu.vector_store %arg11[%c0_27, %c0_28, %c0_29], %45 {strides = array<i32>} : memref<1x8x16xf32, #tpu.memory_space<vmem>>, vector<1x8x16xf32>,
    %c0_30 = arith.constant 0 : index
    %c0_31 = arith.constant 0 : index
    %c0_32 = arith.constant 0 : index
    %46 = vector.load %arg10[%c0_30, %c0_31, %c0_32] : memref<1x8x32xf32, #tpu.memory_space<vmem>>, vector<1x8x32xf32>
    %47 = vector.shape_cast %46 : vector<1x8x32xf32> to vector<8x32xf32>
    %48 = vector.shape_cast %13 : vector<8x32xf32> to vector<1x8x32xf32>
    tpu.vector_store %arg10[%c0_30, %c0_31, %c0_32], %48 {strides = array<i32>} : memref<1x8x32xf32, #tpu.memory_space<vmem>>, vector<1x8x32xf32>,
    return
  }
  func.func @transform_0(%arg0: i32) -> (i32, i32, i32) {
    %c0_i32 = arith.constant 0 : i32
    %c0_i32_0 = arith.constant 0 : i32
    %c0_i32_1 = arith.constant 0 : i32
    return %arg0, %c0_i32, %c0_i32_0 : i32, i32, i32
  }
  func.func @transform_1(%arg0: i32) -> (i32, i32, i32) {
    %c0_i32 = arith.constant 0 : i32
    %c0_i32_0 = arith.constant 0 : i32
    %c0_i32_1 = arith.constant 0 : i32
    return %arg0, %c0_i32, %c0_i32_0 : i32, i32, i32
  }
  func.func @transform_2(%arg0: i32) -> (i32, i32) {
    %c0_i32 = arith.constant 0 : i32
    %c0_i32_0 = arith.constant 0 : i32
    %c0_i32_1 = arith.constant 0 : i32
    return %c0_i32, %c0_i32_0 : i32, i32
  }
  func.func @transform_3(%arg0: i32) -> (i32, i32) {
    %c0_i32 = arith.constant 0 : i32
    %c0_i32_0 = arith.constant 0 : i32
    %c0_i32_1 = arith.constant 0 : i32
    return %c0_i32, %c0_i32_0 : i32, i32
  }
  func.func @transform_4(%arg0: i32) -> (i32, i32) {
    %c0_i32 = arith.constant 0 : i32
    %c0_i32_0 = arith.constant 0 : i32
    %c0_i32_1 = arith.constant 0 : i32
    return %c0_i32, %c0_i32_0 : i32, i32
  }
  func.func @transform_5(%arg0: i32) -> (i32, i32) {
    %c0_i32 = arith.constant 0 : i32
    %c0_i32_0 = arith.constant 0 : i32
    %c0_i32_1 = arith.constant 0 : i32
    return %c0_i32, %c0_i32_0 : i32, i32
  }
  func.func @transform_6(%arg0: i32) -> (i32, i32) {
    %c0_i32 = arith.constant 0 : i32
    %c0_i32_0 = arith.constant 0 : i32
    %c0_i32_1 = arith.constant 0 : i32
    return %c0_i32, %c0_i32_0 : i32, i32
  }
  func.func @transform_7(%arg0: i32) -> (i32, i32) {
    %c0_i32 = arith.constant 0 : i32
    %c0_i32_0 = arith.constant 0 : i32
    %c0_i32_1 = arith.constant 0 : i32
    return %c0_i32, %c0_i32_0 : i32, i32
  }
  func.func @transform_8(%arg0: i32) -> (i32, i32) {
    %c0_i32 = arith.constant 0 : i32
    %c0_i32_0 = arith.constant 0 : i32
    %c0_i32_1 = arith.constant 0 : i32
    return %c0_i32, %c0_i32_0 : i32, i32
  }
  func.func @transform_9(%arg0: i32) -> (i32, i32, i32) {
    %c0_i32 = arith.constant 0 : i32
    %c0_i32_0 = arith.constant 0 : i32
    %c0_i32_1 = arith.constant 0 : i32
    return %arg0, %c0_i32, %c0_i32_0 : i32, i32, i32
  }
  func.func @transform_10(%arg0: i32) -> (i32, i32, i32) {
    %c0_i32 = arith.constant 0 : i32
    %c0_i32_0 = arith.constant 0 : i32
    %c0_i32_1 = arith.constant 0 : i32
    return %arg0, %c0_i32, %c0_i32_0 : i32, i32, i32
  }
}

module attributes {stable_mosaic.version = 11 : i64} {
  func.func @_tcn_repeat_kernel(%arg0: i32, %arg1: memref<1x8x16xf32, #tpu.memory_space<vmem>>, %arg2: memref<1x8x16xf32, #tpu.memory_space<vmem>>, %arg3: memref<3x16x32xf32, #tpu.memory_space<vmem>>, %arg4: memref<3x1x32xf32, #tpu.memory_space<vmem>>, %arg5: memref<3x1x32xf32, #tpu.memory_space<vmem>>, %arg6: memref<3x1x32xf32, #tpu.memory_space<vmem>>, %arg7: memref<3x1x32xf32, #tpu.memory_space<vmem>>, %arg8: memref<3x3x32xf32, #tpu.memory_space<vmem>>, %arg9: memref<3x1x32xf32, #tpu.memory_space<vmem>>, %arg10: memref<3x1x32xf32, #tpu.memory_space<vmem>>, %arg11: memref<3x1x32xf32, #tpu.memory_space<vmem>>, %arg12: memref<3x1x32xf32, #tpu.memory_space<vmem>>, %arg13: memref<3x32x16xf32, #tpu.memory_space<vmem>>, %arg14: memref<3x1x16xf32, #tpu.memory_space<vmem>>, %arg15: memref<3x32x16xf32, #tpu.memory_space<vmem>>, %arg16: memref<3x1x16xf32, #tpu.memory_space<vmem>>, %arg17: memref<1x8x16xf32, #tpu.memory_space<vmem>>, %arg18: memref<1x8x16xf32, #tpu.memory_space<vmem>>) attributes {dimension_semantics = [#tpu.dimension_semantics<parallel>], iteration_bounds = array<i64: 2>, scalar_prefetch = 0 : i64, scratch_operands = 0 : i64, tpu.core_type = #tpu.core_type<tc>, window_params = [{transform_indices = @transform_0, window_bounds = array<i64: 1, 8, 16>}, {transform_indices = @transform_1, window_bounds = array<i64: 1, 8, 16>}, {pipeline_mode = #tpu.pipeline_mode<synchronous>, transform_indices = @transform_2, window_bounds = array<i64: 3, 16, 32>}, {pipeline_mode = #tpu.pipeline_mode<synchronous>, transform_indices = @transform_3, window_bounds = array<i64: 3, 1, 32>}, {pipeline_mode = #tpu.pipeline_mode<synchronous>, transform_indices = @transform_4, window_bounds = array<i64: 3, 1, 32>}, {pipeline_mode = #tpu.pipeline_mode<synchronous>, transform_indices = @transform_5, window_bounds = array<i64: 3, 1, 32>}, {pipeline_mode = #tpu.pipeline_mode<synchronous>, transform_indices = @transform_6, window_bounds = array<i64: 3, 1, 32>}, {pipeline_mode = #tpu.pipeline_mode<synchronous>, transform_indices = @transform_7, window_bounds = array<i64: 3, 3, 32>}, {pipeline_mode = #tpu.pipeline_mode<synchronous>, transform_indices = @transform_8, window_bounds = array<i64: 3, 1, 32>}, {pipeline_mode = #tpu.pipeline_mode<synchronous>, transform_indices = @transform_9, window_bounds = array<i64: 3, 1, 32>}, {pipeline_mode = #tpu.pipeline_mode<synchronous>, transform_indices = @transform_10, window_bounds = array<i64: 3, 1, 32>}, {pipeline_mode = #tpu.pipeline_mode<synchronous>, transform_indices = @transform_11, window_bounds = array<i64: 3, 1, 32>}, {pipeline_mode = #tpu.pipeline_mode<synchronous>, transform_indices = @transform_12, window_bounds = array<i64: 3, 32, 16>}, {pipeline_mode = #tpu.pipeline_mode<synchronous>, transform_indices = @transform_13, window_bounds = array<i64: 3, 1, 16>}, {pipeline_mode = #tpu.pipeline_mode<synchronous>, transform_indices = @transform_14, window_bounds = array<i64: 3, 32, 16>}, {pipeline_mode = #tpu.pipeline_mode<synchronous>, transform_indices = @transform_15, window_bounds = array<i64: 3, 1, 16>}, {transform_indices = @transform_16, window_bounds = array<i64: 1, 8, 16>}, {transform_indices = @transform_17, window_bounds = array<i64: 1, 8, 16>}]} {
    %c0 = arith.constant 0 : index
    %c0_0 = arith.constant 0 : index
    %c0_1 = arith.constant 0 : index
    %0 = vector.load %arg1[%c0, %c0_0, %c0_1] : memref<1x8x16xf32, #tpu.memory_space<vmem>>, vector<1x8x16xf32>
    %1 = vector.shape_cast %0 : vector<1x8x16xf32> to vector<8x16xf32>
    %c0_2 = arith.constant 0 : index
    %c0_3 = arith.constant 0 : index
    %c0_4 = arith.constant 0 : index
    %2 = vector.load %arg2[%c0_2, %c0_3, %c0_4] : memref<1x8x16xf32, #tpu.memory_space<vmem>>, vector<1x8x16xf32>
    %3 = vector.shape_cast %2 : vector<1x8x16xf32> to vector<8x16xf32>
    %4 = tpu.iota {dimensions = array<i32: 0>} : vector<8x1xi32>
    %c0_5 = arith.constant 0 : index
    %c0_6 = arith.constant 0 : index
    %c0_7 = arith.constant 0 : index
    %5 = vector.load %arg3[%c0_5, %c0_6, %c0_7] : memref<3x16x32xf32, #tpu.memory_space<vmem>>, vector<1x16x32xf32>
    %6 = vector.shape_cast %5 : vector<1x16x32xf32> to vector<16x32xf32>
    %cst = arith.constant dense<0.000000e+00> : vector<8x32xf32>
    %7 = tpu.matmul %1, %6, %cst {dimension_numbers = #tpu.dot_dimension_numbers<[1], [0], [0], [1], [0, 0, 1, 1], [], []>} : vector<8x16xf32>, vector<16x32xf32>, vector<8x32xf32> -> vector<8x32xf32>
    %c0_8 = arith.constant 0 : index
    %c0_9 = arith.constant 0 : index
    %c0_10 = arith.constant 0 : index
    %8 = vector.load %arg4[%c0_8, %c0_9, %c0_10] : memref<3x1x32xf32, #tpu.memory_space<vmem>>, vector<1x1x32xf32>
    %9 = vector.shape_cast %8 : vector<1x1x32xf32> to vector<1x32xf32>
    %10 = vector.broadcast %9 : vector<1x32xf32> to vector<8x32xf32>
    %11 = arith.addf %7, %10 : vector<8x32xf32>
    %cst_11 = arith.constant 0.000000e+00 : f32
    %12 = vector.broadcast %cst_11 : f32 to vector<8x32xf32>
    %13 = arith.cmpf oge, %11, %12 : vector<8x32xf32>
    %c0_12 = arith.constant 0 : index
    %c0_13 = arith.constant 0 : index
    %c0_14 = arith.constant 0 : index
    %14 = vector.load %arg5[%c0_12, %c0_13, %c0_14] : memref<3x1x32xf32, #tpu.memory_space<vmem>>, vector<1x1x32xf32>
    %15 = vector.shape_cast %14 : vector<1x1x32xf32> to vector<1x32xf32>
    %16 = vector.broadcast %15 : vector<1x32xf32> to vector<8x32xf32>
    %17 = arith.mulf %16, %11 : vector<8x32xf32>
    %18 = arith.select %13, %11, %17 : vector<8x32xi1>, vector<8x32xf32>
    %cst_15 = arith.constant dense<0.000000e+00> : vector<8xf32>
    %19 = vector.multi_reduction <add>, %18, %cst_15 [1] : vector<8x32xf32> to vector<8xf32>
    %20 = vector.shape_cast %19 : vector<8xf32> to vector<8x1xf32>
    %cst_16 = arith.constant 3.200000e+01 : f32
    %21 = vector.broadcast %cst_16 : f32 to vector<8x1xf32>
    %22 = arith.divf %20, %21 : vector<8x1xf32>
    %cst_17 = arith.constant dense<0.000000e+00> : vector<1xf32>
    %23 = vector.multi_reduction <add>, %22, %cst_17 [0] : vector<8x1xf32> to vector<1xf32>
    %24 = vector.shape_cast %23 : vector<1xf32> to vector<1x1xf32>
    %cst_18 = arith.constant 8.000000e+00 : f32
    %25 = vector.broadcast %cst_18 : f32 to vector<1x1xf32>
    %26 = arith.divf %24, %25 : vector<1x1xf32>
    %27 = vector.broadcast %26 : vector<1x1xf32> to vector<8x32xf32>
    %28 = arith.subf %18, %27 : vector<8x32xf32>
    %29 = arith.mulf %28, %28 : vector<8x32xf32>
    %cst_19 = arith.constant dense<0.000000e+00> : vector<8xf32>
    %30 = vector.multi_reduction <add>, %29, %cst_19 [1] : vector<8x32xf32> to vector<8xf32>
    %31 = vector.shape_cast %30 : vector<8xf32> to vector<8x1xf32>
    %cst_20 = arith.constant 3.200000e+01 : f32
    %32 = vector.broadcast %cst_20 : f32 to vector<8x1xf32>
    %33 = arith.divf %31, %32 : vector<8x1xf32>
    %cst_21 = arith.constant dense<0.000000e+00> : vector<1xf32>
    %34 = vector.multi_reduction <add>, %33, %cst_21 [0] : vector<8x1xf32> to vector<1xf32>
    %35 = vector.shape_cast %34 : vector<1xf32> to vector<1x1xf32>
    %cst_22 = arith.constant 8.000000e+00 : f32
    %36 = vector.broadcast %cst_22 : f32 to vector<1x1xf32>
    %37 = arith.divf %35, %36 : vector<1x1xf32>
    %c0_23 = arith.constant 0 : index
    %c0_24 = arith.constant 0 : index
    %c0_25 = arith.constant 0 : index
    %38 = vector.load %arg6[%c0_23, %c0_24, %c0_25] : memref<3x1x32xf32, #tpu.memory_space<vmem>>, vector<1x1x32xf32>
    %39 = vector.shape_cast %38 : vector<1x1x32xf32> to vector<1x32xf32>
    %40 = vector.broadcast %26 : vector<1x1xf32> to vector<8x32xf32>
    %41 = arith.subf %18, %40 : vector<8x32xf32>
    %42 = vector.broadcast %39 : vector<1x32xf32> to vector<8x32xf32>
    %43 = arith.mulf %42, %41 : vector<8x32xf32>
    %cst_26 = arith.constant 9.99999974E-6 : f32
    %44 = vector.broadcast %cst_26 : f32 to vector<1x1xf32>
    %45 = arith.addf %37, %44 : vector<1x1xf32>
    %46 = math.rsqrt %45 : vector<1x1xf32>
    %47 = vector.broadcast %46 : vector<1x1xf32> to vector<8x32xf32>
    %48 = arith.mulf %43, %47 : vector<8x32xf32>
    %c0_27 = arith.constant 0 : index
    %c0_28 = arith.constant 0 : index
    %c0_29 = arith.constant 0 : index
    %49 = vector.load %arg7[%c0_27, %c0_28, %c0_29] : memref<3x1x32xf32, #tpu.memory_space<vmem>>, vector<1x1x32xf32>
    %50 = vector.shape_cast %49 : vector<1x1x32xf32> to vector<1x32xf32>
    %51 = vector.broadcast %50 : vector<1x32xf32> to vector<8x32xf32>
    %52 = arith.addf %48, %51 : vector<8x32xf32>
    %c0_30 = arith.constant 0 : index
    %c0_31 = arith.constant 0 : index
    %c0_32 = arith.constant 0 : index
    %53 = vector.load %arg8[%c0_30, %c0_31, %c0_32] : memref<3x3x32xf32, #tpu.memory_space<vmem>>, vector<1x3x32xf32>
    %54 = vector.shape_cast %53 : vector<1x3x32xf32> to vector<3x32xf32>
    %c0_33 = arith.constant 0 : index
    %c0_34 = arith.constant 0 : index
    %c0_35 = arith.constant 0 : index
    %55 = vector.load %arg9[%c0_33, %c0_34, %c0_35] : memref<3x1x32xf32, #tpu.memory_space<vmem>>, vector<1x1x32xf32>
    %56 = vector.shape_cast %55 : vector<1x1x32xf32> to vector<1x32xf32>
    %57 = vector.extract_strided_slice %54 {offsets = [0, 0], sizes = [1, 32], strides = [1, 1]} : vector<3x32xf32> to vector<1x32xf32>
    %c1_i32 = arith.constant 1 : i32
    %58 = tpu.dynamic_rotate %52 by %c1_i32 dim 0 : vector<8x32xf32>, i32 -> vector<8x32xf32>
    %c1_i32_36 = arith.constant 1 : i32
    %59 = vector.broadcast %c1_i32_36 : i32 to vector<8x1xi32>
    %60 = arith.cmpi sge, %4, %59 : vector<8x1xi32>
    %cst_37 = arith.constant 0.000000e+00 : f32
    %61 = vector.shape_cast %60 : vector<8x1xi1> to vector<8x1xi1>
    %62 = vector.broadcast %61 : vector<8x1xi1> to vector<8x32xi1>
    %63 = vector.broadcast %cst_37 : f32 to vector<8x32xf32>
    %64 = arith.select %62, %58, %63 : vector<8x32xi1>, vector<8x32xf32>
    %65 = vector.broadcast %57 : vector<1x32xf32> to vector<8x32xf32>
    %66 = arith.mulf %65, %64 : vector<8x32xf32>
    %67 = vector.broadcast %56 : vector<1x32xf32> to vector<8x32xf32>
    %68 = arith.addf %67, %66 : vector<8x32xf32>
    %69 = vector.extract_strided_slice %54 {offsets = [1, 0], sizes = [1, 32], strides = [1, 1]} : vector<3x32xf32> to vector<1x32xf32>
    %70 = vector.broadcast %69 : vector<1x32xf32> to vector<8x32xf32>
    %71 = arith.mulf %70, %52 : vector<8x32xf32>
    %72 = arith.addf %68, %71 : vector<8x32xf32>
    %73 = vector.extract_strided_slice %54 {offsets = [2, 0], sizes = [1, 32], strides = [1, 1]} : vector<3x32xf32> to vector<1x32xf32>
    %c7_i32 = arith.constant 7 : i32
    %74 = tpu.dynamic_rotate %52 by %c7_i32 dim 0 : vector<8x32xf32>, i32 -> vector<8x32xf32>
    %c7_i32_38 = arith.constant 7 : i32
    %75 = vector.broadcast %c7_i32_38 : i32 to vector<8x1xi32>
    %76 = arith.cmpi slt, %4, %75 : vector<8x1xi32>
    %cst_39 = arith.constant 0.000000e+00 : f32
    %77 = vector.shape_cast %76 : vector<8x1xi1> to vector<8x1xi1>
    %78 = vector.broadcast %77 : vector<8x1xi1> to vector<8x32xi1>
    %79 = vector.broadcast %cst_39 : f32 to vector<8x32xf32>
    %80 = arith.select %78, %74, %79 : vector<8x32xi1>, vector<8x32xf32>
    %81 = vector.broadcast %73 : vector<1x32xf32> to vector<8x32xf32>
    %82 = arith.mulf %81, %80 : vector<8x32xf32>
    %83 = arith.addf %72, %82 : vector<8x32xf32>
    %cst_40 = arith.constant 0.000000e+00 : f32
    %84 = vector.broadcast %cst_40 : f32 to vector<8x32xf32>
    %85 = arith.cmpf oge, %83, %84 : vector<8x32xf32>
    %c0_41 = arith.constant 0 : index
    %c0_42 = arith.constant 0 : index
    %c0_43 = arith.constant 0 : index
    %86 = vector.load %arg10[%c0_41, %c0_42, %c0_43] : memref<3x1x32xf32, #tpu.memory_space<vmem>>, vector<1x1x32xf32>
    %87 = vector.shape_cast %86 : vector<1x1x32xf32> to vector<1x32xf32>
    %88 = vector.broadcast %87 : vector<1x32xf32> to vector<8x32xf32>
    %89 = arith.mulf %88, %83 : vector<8x32xf32>
    %90 = arith.select %85, %83, %89 : vector<8x32xi1>, vector<8x32xf32>
    %cst_44 = arith.constant dense<0.000000e+00> : vector<8xf32>
    %91 = vector.multi_reduction <add>, %90, %cst_44 [1] : vector<8x32xf32> to vector<8xf32>
    %92 = vector.shape_cast %91 : vector<8xf32> to vector<8x1xf32>
    %cst_45 = arith.constant 3.200000e+01 : f32
    %93 = vector.broadcast %cst_45 : f32 to vector<8x1xf32>
    %94 = arith.divf %92, %93 : vector<8x1xf32>
    %cst_46 = arith.constant dense<0.000000e+00> : vector<1xf32>
    %95 = vector.multi_reduction <add>, %94, %cst_46 [0] : vector<8x1xf32> to vector<1xf32>
    %96 = vector.shape_cast %95 : vector<1xf32> to vector<1x1xf32>
    %cst_47 = arith.constant 8.000000e+00 : f32
    %97 = vector.broadcast %cst_47 : f32 to vector<1x1xf32>
    %98 = arith.divf %96, %97 : vector<1x1xf32>
    %99 = vector.broadcast %98 : vector<1x1xf32> to vector<8x32xf32>
    %100 = arith.subf %90, %99 : vector<8x32xf32>
    %101 = arith.mulf %100, %100 : vector<8x32xf32>
    %cst_48 = arith.constant dense<0.000000e+00> : vector<8xf32>
    %102 = vector.multi_reduction <add>, %101, %cst_48 [1] : vector<8x32xf32> to vector<8xf32>
    %103 = vector.shape_cast %102 : vector<8xf32> to vector<8x1xf32>
    %cst_49 = arith.constant 3.200000e+01 : f32
    %104 = vector.broadcast %cst_49 : f32 to vector<8x1xf32>
    %105 = arith.divf %103, %104 : vector<8x1xf32>
    %cst_50 = arith.constant dense<0.000000e+00> : vector<1xf32>
    %106 = vector.multi_reduction <add>, %105, %cst_50 [0] : vector<8x1xf32> to vector<1xf32>
    %107 = vector.shape_cast %106 : vector<1xf32> to vector<1x1xf32>
    %cst_51 = arith.constant 8.000000e+00 : f32
    %108 = vector.broadcast %cst_51 : f32 to vector<1x1xf32>
    %109 = arith.divf %107, %108 : vector<1x1xf32>
    %c0_52 = arith.constant 0 : index
    %c0_53 = arith.constant 0 : index
    %c0_54 = arith.constant 0 : index
    %110 = vector.load %arg11[%c0_52, %c0_53, %c0_54] : memref<3x1x32xf32, #tpu.memory_space<vmem>>, vector<1x1x32xf32>
    %111 = vector.shape_cast %110 : vector<1x1x32xf32> to vector<1x32xf32>
    %112 = vector.broadcast %98 : vector<1x1xf32> to vector<8x32xf32>
    %113 = arith.subf %90, %112 : vector<8x32xf32>
    %114 = vector.broadcast %111 : vector<1x32xf32> to vector<8x32xf32>
    %115 = arith.mulf %114, %113 : vector<8x32xf32>
    %cst_55 = arith.constant 9.99999974E-6 : f32
    %116 = vector.broadcast %cst_55 : f32 to vector<1x1xf32>
    %117 = arith.addf %109, %116 : vector<1x1xf32>
    %118 = math.rsqrt %117 : vector<1x1xf32>
    %119 = vector.broadcast %118 : vector<1x1xf32> to vector<8x32xf32>
    %120 = arith.mulf %115, %119 : vector<8x32xf32>
    %c0_56 = arith.constant 0 : index
    %c0_57 = arith.constant 0 : index
    %c0_58 = arith.constant 0 : index
    %121 = vector.load %arg12[%c0_56, %c0_57, %c0_58] : memref<3x1x32xf32, #tpu.memory_space<vmem>>, vector<1x1x32xf32>
    %122 = vector.shape_cast %121 : vector<1x1x32xf32> to vector<1x32xf32>
    %123 = vector.broadcast %122 : vector<1x32xf32> to vector<8x32xf32>
    %124 = arith.addf %120, %123 : vector<8x32xf32>
    %c0_59 = arith.constant 0 : index
    %c0_60 = arith.constant 0 : index
    %c0_61 = arith.constant 0 : index
    %125 = vector.load %arg13[%c0_59, %c0_60, %c0_61] : memref<3x32x16xf32, #tpu.memory_space<vmem>>, vector<1x32x16xf32>
    %126 = vector.shape_cast %125 : vector<1x32x16xf32> to vector<32x16xf32>
    %cst_62 = arith.constant dense<0.000000e+00> : vector<8x16xf32>
    %127 = tpu.matmul %124, %126, %cst_62 {dimension_numbers = #tpu.dot_dimension_numbers<[1], [0], [0], [1], [0, 0, 1, 1], [], []>} : vector<8x32xf32>, vector<32x16xf32>, vector<8x16xf32> -> vector<8x16xf32>
    %128 = arith.addf %1, %127 : vector<8x16xf32>
    %c0_63 = arith.constant 0 : index
    %c0_64 = arith.constant 0 : index
    %c0_65 = arith.constant 0 : index
    %129 = vector.load %arg14[%c0_63, %c0_64, %c0_65] : memref<3x1x16xf32, #tpu.memory_space<vmem>>, vector<1x1x16xf32>
    %130 = vector.shape_cast %129 : vector<1x1x16xf32> to vector<1x16xf32>
    %131 = vector.broadcast %130 : vector<1x16xf32> to vector<8x16xf32>
    %132 = arith.addf %128, %131 : vector<8x16xf32>
    %c0_66 = arith.constant 0 : index
    %c0_67 = arith.constant 0 : index
    %c0_68 = arith.constant 0 : index
    %133 = vector.load %arg15[%c0_66, %c0_67, %c0_68] : memref<3x32x16xf32, #tpu.memory_space<vmem>>, vector<1x32x16xf32>
    %134 = vector.shape_cast %133 : vector<1x32x16xf32> to vector<32x16xf32>
    %cst_69 = arith.constant dense<0.000000e+00> : vector<8x16xf32>
    %135 = tpu.matmul %124, %134, %cst_69 {dimension_numbers = #tpu.dot_dimension_numbers<[1], [0], [0], [1], [0, 0, 1, 1], [], []>} : vector<8x32xf32>, vector<32x16xf32>, vector<8x16xf32> -> vector<8x16xf32>
    %136 = arith.addf %3, %135 : vector<8x16xf32>
    %c0_70 = arith.constant 0 : index
    %c0_71 = arith.constant 0 : index
    %c0_72 = arith.constant 0 : index
    %137 = vector.load %arg16[%c0_70, %c0_71, %c0_72] : memref<3x1x16xf32, #tpu.memory_space<vmem>>, vector<1x1x16xf32>
    %138 = vector.shape_cast %137 : vector<1x1x16xf32> to vector<1x16xf32>
    %139 = vector.broadcast %138 : vector<1x16xf32> to vector<8x16xf32>
    %140 = arith.addf %136, %139 : vector<8x16xf32>
    %c1 = arith.constant 1 : index
    %c0_73 = arith.constant 0 : index
    %c0_74 = arith.constant 0 : index
    %141 = vector.load %arg3[%c1, %c0_73, %c0_74] : memref<3x16x32xf32, #tpu.memory_space<vmem>>, vector<1x16x32xf32>
    %142 = vector.shape_cast %141 : vector<1x16x32xf32> to vector<16x32xf32>
    %cst_75 = arith.constant dense<0.000000e+00> : vector<8x32xf32>
    %143 = tpu.matmul %132, %142, %cst_75 {dimension_numbers = #tpu.dot_dimension_numbers<[1], [0], [0], [1], [0, 0, 1, 1], [], []>} : vector<8x16xf32>, vector<16x32xf32>, vector<8x32xf32> -> vector<8x32xf32>
    %c1_76 = arith.constant 1 : index
    %c0_77 = arith.constant 0 : index
    %c0_78 = arith.constant 0 : index
    %144 = vector.load %arg4[%c1_76, %c0_77, %c0_78] : memref<3x1x32xf32, #tpu.memory_space<vmem>>, vector<1x1x32xf32>
    %145 = vector.shape_cast %144 : vector<1x1x32xf32> to vector<1x32xf32>
    %146 = vector.broadcast %145 : vector<1x32xf32> to vector<8x32xf32>
    %147 = arith.addf %143, %146 : vector<8x32xf32>
    %cst_79 = arith.constant 0.000000e+00 : f32
    %148 = vector.broadcast %cst_79 : f32 to vector<8x32xf32>
    %149 = arith.cmpf oge, %147, %148 : vector<8x32xf32>
    %c1_80 = arith.constant 1 : index
    %c0_81 = arith.constant 0 : index
    %c0_82 = arith.constant 0 : index
    %150 = vector.load %arg5[%c1_80, %c0_81, %c0_82] : memref<3x1x32xf32, #tpu.memory_space<vmem>>, vector<1x1x32xf32>
    %151 = vector.shape_cast %150 : vector<1x1x32xf32> to vector<1x32xf32>
    %152 = vector.broadcast %151 : vector<1x32xf32> to vector<8x32xf32>
    %153 = arith.mulf %152, %147 : vector<8x32xf32>
    %154 = arith.select %149, %147, %153 : vector<8x32xi1>, vector<8x32xf32>
    %cst_83 = arith.constant dense<0.000000e+00> : vector<8xf32>
    %155 = vector.multi_reduction <add>, %154, %cst_83 [1] : vector<8x32xf32> to vector<8xf32>
    %156 = vector.shape_cast %155 : vector<8xf32> to vector<8x1xf32>
    %cst_84 = arith.constant 3.200000e+01 : f32
    %157 = vector.broadcast %cst_84 : f32 to vector<8x1xf32>
    %158 = arith.divf %156, %157 : vector<8x1xf32>
    %cst_85 = arith.constant dense<0.000000e+00> : vector<1xf32>
    %159 = vector.multi_reduction <add>, %158, %cst_85 [0] : vector<8x1xf32> to vector<1xf32>
    %160 = vector.shape_cast %159 : vector<1xf32> to vector<1x1xf32>
    %cst_86 = arith.constant 8.000000e+00 : f32
    %161 = vector.broadcast %cst_86 : f32 to vector<1x1xf32>
    %162 = arith.divf %160, %161 : vector<1x1xf32>
    %163 = vector.broadcast %162 : vector<1x1xf32> to vector<8x32xf32>
    %164 = arith.subf %154, %163 : vector<8x32xf32>
    %165 = arith.mulf %164, %164 : vector<8x32xf32>
    %cst_87 = arith.constant dense<0.000000e+00> : vector<8xf32>
    %166 = vector.multi_reduction <add>, %165, %cst_87 [1] : vector<8x32xf32> to vector<8xf32>
    %167 = vector.shape_cast %166 : vector<8xf32> to vector<8x1xf32>
    %cst_88 = arith.constant 3.200000e+01 : f32
    %168 = vector.broadcast %cst_88 : f32 to vector<8x1xf32>
    %169 = arith.divf %167, %168 : vector<8x1xf32>
    %cst_89 = arith.constant dense<0.000000e+00> : vector<1xf32>
    %170 = vector.multi_reduction <add>, %169, %cst_89 [0] : vector<8x1xf32> to vector<1xf32>
    %171 = vector.shape_cast %170 : vector<1xf32> to vector<1x1xf32>
    %cst_90 = arith.constant 8.000000e+00 : f32
    %172 = vector.broadcast %cst_90 : f32 to vector<1x1xf32>
    %173 = arith.divf %171, %172 : vector<1x1xf32>
    %c1_91 = arith.constant 1 : index
    %c0_92 = arith.constant 0 : index
    %c0_93 = arith.constant 0 : index
    %174 = vector.load %arg6[%c1_91, %c0_92, %c0_93] : memref<3x1x32xf32, #tpu.memory_space<vmem>>, vector<1x1x32xf32>
    %175 = vector.shape_cast %174 : vector<1x1x32xf32> to vector<1x32xf32>
    %176 = vector.broadcast %162 : vector<1x1xf32> to vector<8x32xf32>
    %177 = arith.subf %154, %176 : vector<8x32xf32>
    %178 = vector.broadcast %175 : vector<1x32xf32> to vector<8x32xf32>
    %179 = arith.mulf %178, %177 : vector<8x32xf32>
    %cst_94 = arith.constant 9.99999974E-6 : f32
    %180 = vector.broadcast %cst_94 : f32 to vector<1x1xf32>
    %181 = arith.addf %173, %180 : vector<1x1xf32>
    %182 = math.rsqrt %181 : vector<1x1xf32>
    %183 = vector.broadcast %182 : vector<1x1xf32> to vector<8x32xf32>
    %184 = arith.mulf %179, %183 : vector<8x32xf32>
    %c1_95 = arith.constant 1 : index
    %c0_96 = arith.constant 0 : index
    %c0_97 = arith.constant 0 : index
    %185 = vector.load %arg7[%c1_95, %c0_96, %c0_97] : memref<3x1x32xf32, #tpu.memory_space<vmem>>, vector<1x1x32xf32>
    %186 = vector.shape_cast %185 : vector<1x1x32xf32> to vector<1x32xf32>
    %187 = vector.broadcast %186 : vector<1x32xf32> to vector<8x32xf32>
    %188 = arith.addf %184, %187 : vector<8x32xf32>
    %c1_98 = arith.constant 1 : index
    %c0_99 = arith.constant 0 : index
    %c0_100 = arith.constant 0 : index
    %189 = vector.load %arg8[%c1_98, %c0_99, %c0_100] : memref<3x3x32xf32, #tpu.memory_space<vmem>>, vector<1x3x32xf32>
    %190 = vector.shape_cast %189 : vector<1x3x32xf32> to vector<3x32xf32>
    %c1_101 = arith.constant 1 : index
    %c0_102 = arith.constant 0 : index
    %c0_103 = arith.constant 0 : index
    %191 = vector.load %arg9[%c1_101, %c0_102, %c0_103] : memref<3x1x32xf32, #tpu.memory_space<vmem>>, vector<1x1x32xf32>
    %192 = vector.shape_cast %191 : vector<1x1x32xf32> to vector<1x32xf32>
    %193 = vector.extract_strided_slice %190 {offsets = [0, 0], sizes = [1, 32], strides = [1, 1]} : vector<3x32xf32> to vector<1x32xf32>
    %c2_i32 = arith.constant 2 : i32
    %194 = tpu.dynamic_rotate %188 by %c2_i32 dim 0 : vector<8x32xf32>, i32 -> vector<8x32xf32>
    %c2_i32_104 = arith.constant 2 : i32
    %195 = vector.broadcast %c2_i32_104 : i32 to vector<8x1xi32>
    %196 = arith.cmpi sge, %4, %195 : vector<8x1xi32>
    %cst_105 = arith.constant 0.000000e+00 : f32
    %197 = vector.shape_cast %196 : vector<8x1xi1> to vector<8x1xi1>
    %198 = vector.broadcast %197 : vector<8x1xi1> to vector<8x32xi1>
    %199 = vector.broadcast %cst_105 : f32 to vector<8x32xf32>
    %200 = arith.select %198, %194, %199 : vector<8x32xi1>, vector<8x32xf32>
    %201 = vector.broadcast %193 : vector<1x32xf32> to vector<8x32xf32>
    %202 = arith.mulf %201, %200 : vector<8x32xf32>
    %203 = vector.broadcast %192 : vector<1x32xf32> to vector<8x32xf32>
    %204 = arith.addf %203, %202 : vector<8x32xf32>
    %205 = vector.extract_strided_slice %190 {offsets = [1, 0], sizes = [1, 32], strides = [1, 1]} : vector<3x32xf32> to vector<1x32xf32>
    %206 = vector.broadcast %205 : vector<1x32xf32> to vector<8x32xf32>
    %207 = arith.mulf %206, %188 : vector<8x32xf32>
    %208 = arith.addf %204, %207 : vector<8x32xf32>
    %209 = vector.extract_strided_slice %190 {offsets = [2, 0], sizes = [1, 32], strides = [1, 1]} : vector<3x32xf32> to vector<1x32xf32>
    %c6_i32 = arith.constant 6 : i32
    %210 = tpu.dynamic_rotate %188 by %c6_i32 dim 0 : vector<8x32xf32>, i32 -> vector<8x32xf32>
    %c6_i32_106 = arith.constant 6 : i32
    %211 = vector.broadcast %c6_i32_106 : i32 to vector<8x1xi32>
    %212 = arith.cmpi slt, %4, %211 : vector<8x1xi32>
    %cst_107 = arith.constant 0.000000e+00 : f32
    %213 = vector.shape_cast %212 : vector<8x1xi1> to vector<8x1xi1>
    %214 = vector.broadcast %213 : vector<8x1xi1> to vector<8x32xi1>
    %215 = vector.broadcast %cst_107 : f32 to vector<8x32xf32>
    %216 = arith.select %214, %210, %215 : vector<8x32xi1>, vector<8x32xf32>
    %217 = vector.broadcast %209 : vector<1x32xf32> to vector<8x32xf32>
    %218 = arith.mulf %217, %216 : vector<8x32xf32>
    %219 = arith.addf %208, %218 : vector<8x32xf32>
    %cst_108 = arith.constant 0.000000e+00 : f32
    %220 = vector.broadcast %cst_108 : f32 to vector<8x32xf32>
    %221 = arith.cmpf oge, %219, %220 : vector<8x32xf32>
    %c1_109 = arith.constant 1 : index
    %c0_110 = arith.constant 0 : index
    %c0_111 = arith.constant 0 : index
    %222 = vector.load %arg10[%c1_109, %c0_110, %c0_111] : memref<3x1x32xf32, #tpu.memory_space<vmem>>, vector<1x1x32xf32>
    %223 = vector.shape_cast %222 : vector<1x1x32xf32> to vector<1x32xf32>
    %224 = vector.broadcast %223 : vector<1x32xf32> to vector<8x32xf32>
    %225 = arith.mulf %224, %219 : vector<8x32xf32>
    %226 = arith.select %221, %219, %225 : vector<8x32xi1>, vector<8x32xf32>
    %cst_112 = arith.constant dense<0.000000e+00> : vector<8xf32>
    %227 = vector.multi_reduction <add>, %226, %cst_112 [1] : vector<8x32xf32> to vector<8xf32>
    %228 = vector.shape_cast %227 : vector<8xf32> to vector<8x1xf32>
    %cst_113 = arith.constant 3.200000e+01 : f32
    %229 = vector.broadcast %cst_113 : f32 to vector<8x1xf32>
    %230 = arith.divf %228, %229 : vector<8x1xf32>
    %cst_114 = arith.constant dense<0.000000e+00> : vector<1xf32>
    %231 = vector.multi_reduction <add>, %230, %cst_114 [0] : vector<8x1xf32> to vector<1xf32>
    %232 = vector.shape_cast %231 : vector<1xf32> to vector<1x1xf32>
    %cst_115 = arith.constant 8.000000e+00 : f32
    %233 = vector.broadcast %cst_115 : f32 to vector<1x1xf32>
    %234 = arith.divf %232, %233 : vector<1x1xf32>
    %235 = vector.broadcast %234 : vector<1x1xf32> to vector<8x32xf32>
    %236 = arith.subf %226, %235 : vector<8x32xf32>
    %237 = arith.mulf %236, %236 : vector<8x32xf32>
    %cst_116 = arith.constant dense<0.000000e+00> : vector<8xf32>
    %238 = vector.multi_reduction <add>, %237, %cst_116 [1] : vector<8x32xf32> to vector<8xf32>
    %239 = vector.shape_cast %238 : vector<8xf32> to vector<8x1xf32>
    %cst_117 = arith.constant 3.200000e+01 : f32
    %240 = vector.broadcast %cst_117 : f32 to vector<8x1xf32>
    %241 = arith.divf %239, %240 : vector<8x1xf32>
    %cst_118 = arith.constant dense<0.000000e+00> : vector<1xf32>
    %242 = vector.multi_reduction <add>, %241, %cst_118 [0] : vector<8x1xf32> to vector<1xf32>
    %243 = vector.shape_cast %242 : vector<1xf32> to vector<1x1xf32>
    %cst_119 = arith.constant 8.000000e+00 : f32
    %244 = vector.broadcast %cst_119 : f32 to vector<1x1xf32>
    %245 = arith.divf %243, %244 : vector<1x1xf32>
    %c1_120 = arith.constant 1 : index
    %c0_121 = arith.constant 0 : index
    %c0_122 = arith.constant 0 : index
    %246 = vector.load %arg11[%c1_120, %c0_121, %c0_122] : memref<3x1x32xf32, #tpu.memory_space<vmem>>, vector<1x1x32xf32>
    %247 = vector.shape_cast %246 : vector<1x1x32xf32> to vector<1x32xf32>
    %248 = vector.broadcast %234 : vector<1x1xf32> to vector<8x32xf32>
    %249 = arith.subf %226, %248 : vector<8x32xf32>
    %250 = vector.broadcast %247 : vector<1x32xf32> to vector<8x32xf32>
    %251 = arith.mulf %250, %249 : vector<8x32xf32>
    %cst_123 = arith.constant 9.99999974E-6 : f32
    %252 = vector.broadcast %cst_123 : f32 to vector<1x1xf32>
    %253 = arith.addf %245, %252 : vector<1x1xf32>
    %254 = math.rsqrt %253 : vector<1x1xf32>
    %255 = vector.broadcast %254 : vector<1x1xf32> to vector<8x32xf32>
    %256 = arith.mulf %251, %255 : vector<8x32xf32>
    %c1_124 = arith.constant 1 : index
    %c0_125 = arith.constant 0 : index
    %c0_126 = arith.constant 0 : index
    %257 = vector.load %arg12[%c1_124, %c0_125, %c0_126] : memref<3x1x32xf32, #tpu.memory_space<vmem>>, vector<1x1x32xf32>
    %258 = vector.shape_cast %257 : vector<1x1x32xf32> to vector<1x32xf32>
    %259 = vector.broadcast %258 : vector<1x32xf32> to vector<8x32xf32>
    %260 = arith.addf %256, %259 : vector<8x32xf32>
    %c1_127 = arith.constant 1 : index
    %c0_128 = arith.constant 0 : index
    %c0_129 = arith.constant 0 : index
    %261 = vector.load %arg13[%c1_127, %c0_128, %c0_129] : memref<3x32x16xf32, #tpu.memory_space<vmem>>, vector<1x32x16xf32>
    %262 = vector.shape_cast %261 : vector<1x32x16xf32> to vector<32x16xf32>
    %cst_130 = arith.constant dense<0.000000e+00> : vector<8x16xf32>
    %263 = tpu.matmul %260, %262, %cst_130 {dimension_numbers = #tpu.dot_dimension_numbers<[1], [0], [0], [1], [0, 0, 1, 1], [], []>} : vector<8x32xf32>, vector<32x16xf32>, vector<8x16xf32> -> vector<8x16xf32>
    %264 = arith.addf %132, %263 : vector<8x16xf32>
    %c1_131 = arith.constant 1 : index
    %c0_132 = arith.constant 0 : index
    %c0_133 = arith.constant 0 : index
    %265 = vector.load %arg14[%c1_131, %c0_132, %c0_133] : memref<3x1x16xf32, #tpu.memory_space<vmem>>, vector<1x1x16xf32>
    %266 = vector.shape_cast %265 : vector<1x1x16xf32> to vector<1x16xf32>
    %267 = vector.broadcast %266 : vector<1x16xf32> to vector<8x16xf32>
    %268 = arith.addf %264, %267 : vector<8x16xf32>
    %c1_134 = arith.constant 1 : index
    %c0_135 = arith.constant 0 : index
    %c0_136 = arith.constant 0 : index
    %269 = vector.load %arg15[%c1_134, %c0_135, %c0_136] : memref<3x32x16xf32, #tpu.memory_space<vmem>>, vector<1x32x16xf32>
    %270 = vector.shape_cast %269 : vector<1x32x16xf32> to vector<32x16xf32>
    %cst_137 = arith.constant dense<0.000000e+00> : vector<8x16xf32>
    %271 = tpu.matmul %260, %270, %cst_137 {dimension_numbers = #tpu.dot_dimension_numbers<[1], [0], [0], [1], [0, 0, 1, 1], [], []>} : vector<8x32xf32>, vector<32x16xf32>, vector<8x16xf32> -> vector<8x16xf32>
    %272 = arith.addf %140, %271 : vector<8x16xf32>
    %c1_138 = arith.constant 1 : index
    %c0_139 = arith.constant 0 : index
    %c0_140 = arith.constant 0 : index
    %273 = vector.load %arg16[%c1_138, %c0_139, %c0_140] : memref<3x1x16xf32, #tpu.memory_space<vmem>>, vector<1x1x16xf32>
    %274 = vector.shape_cast %273 : vector<1x1x16xf32> to vector<1x16xf32>
    %275 = vector.broadcast %274 : vector<1x16xf32> to vector<8x16xf32>
    %276 = arith.addf %272, %275 : vector<8x16xf32>
    %c2 = arith.constant 2 : index
    %c0_141 = arith.constant 0 : index
    %c0_142 = arith.constant 0 : index
    %277 = vector.load %arg3[%c2, %c0_141, %c0_142] : memref<3x16x32xf32, #tpu.memory_space<vmem>>, vector<1x16x32xf32>
    %278 = vector.shape_cast %277 : vector<1x16x32xf32> to vector<16x32xf32>
    %cst_143 = arith.constant dense<0.000000e+00> : vector<8x32xf32>
    %279 = tpu.matmul %268, %278, %cst_143 {dimension_numbers = #tpu.dot_dimension_numbers<[1], [0], [0], [1], [0, 0, 1, 1], [], []>} : vector<8x16xf32>, vector<16x32xf32>, vector<8x32xf32> -> vector<8x32xf32>
    %c2_144 = arith.constant 2 : index
    %c0_145 = arith.constant 0 : index
    %c0_146 = arith.constant 0 : index
    %280 = vector.load %arg4[%c2_144, %c0_145, %c0_146] : memref<3x1x32xf32, #tpu.memory_space<vmem>>, vector<1x1x32xf32>
    %281 = vector.shape_cast %280 : vector<1x1x32xf32> to vector<1x32xf32>
    %282 = vector.broadcast %281 : vector<1x32xf32> to vector<8x32xf32>
    %283 = arith.addf %279, %282 : vector<8x32xf32>
    %cst_147 = arith.constant 0.000000e+00 : f32
    %284 = vector.broadcast %cst_147 : f32 to vector<8x32xf32>
    %285 = arith.cmpf oge, %283, %284 : vector<8x32xf32>
    %c2_148 = arith.constant 2 : index
    %c0_149 = arith.constant 0 : index
    %c0_150 = arith.constant 0 : index
    %286 = vector.load %arg5[%c2_148, %c0_149, %c0_150] : memref<3x1x32xf32, #tpu.memory_space<vmem>>, vector<1x1x32xf32>
    %287 = vector.shape_cast %286 : vector<1x1x32xf32> to vector<1x32xf32>
    %288 = vector.broadcast %287 : vector<1x32xf32> to vector<8x32xf32>
    %289 = arith.mulf %288, %283 : vector<8x32xf32>
    %290 = arith.select %285, %283, %289 : vector<8x32xi1>, vector<8x32xf32>
    %cst_151 = arith.constant dense<0.000000e+00> : vector<8xf32>
    %291 = vector.multi_reduction <add>, %290, %cst_151 [1] : vector<8x32xf32> to vector<8xf32>
    %292 = vector.shape_cast %291 : vector<8xf32> to vector<8x1xf32>
    %cst_152 = arith.constant 3.200000e+01 : f32
    %293 = vector.broadcast %cst_152 : f32 to vector<8x1xf32>
    %294 = arith.divf %292, %293 : vector<8x1xf32>
    %cst_153 = arith.constant dense<0.000000e+00> : vector<1xf32>
    %295 = vector.multi_reduction <add>, %294, %cst_153 [0] : vector<8x1xf32> to vector<1xf32>
    %296 = vector.shape_cast %295 : vector<1xf32> to vector<1x1xf32>
    %cst_154 = arith.constant 8.000000e+00 : f32
    %297 = vector.broadcast %cst_154 : f32 to vector<1x1xf32>
    %298 = arith.divf %296, %297 : vector<1x1xf32>
    %299 = vector.broadcast %298 : vector<1x1xf32> to vector<8x32xf32>
    %300 = arith.subf %290, %299 : vector<8x32xf32>
    %301 = arith.mulf %300, %300 : vector<8x32xf32>
    %cst_155 = arith.constant dense<0.000000e+00> : vector<8xf32>
    %302 = vector.multi_reduction <add>, %301, %cst_155 [1] : vector<8x32xf32> to vector<8xf32>
    %303 = vector.shape_cast %302 : vector<8xf32> to vector<8x1xf32>
    %cst_156 = arith.constant 3.200000e+01 : f32
    %304 = vector.broadcast %cst_156 : f32 to vector<8x1xf32>
    %305 = arith.divf %303, %304 : vector<8x1xf32>
    %cst_157 = arith.constant dense<0.000000e+00> : vector<1xf32>
    %306 = vector.multi_reduction <add>, %305, %cst_157 [0] : vector<8x1xf32> to vector<1xf32>
    %307 = vector.shape_cast %306 : vector<1xf32> to vector<1x1xf32>
    %cst_158 = arith.constant 8.000000e+00 : f32
    %308 = vector.broadcast %cst_158 : f32 to vector<1x1xf32>
    %309 = arith.divf %307, %308 : vector<1x1xf32>
    %c2_159 = arith.constant 2 : index
    %c0_160 = arith.constant 0 : index
    %c0_161 = arith.constant 0 : index
    %310 = vector.load %arg6[%c2_159, %c0_160, %c0_161] : memref<3x1x32xf32, #tpu.memory_space<vmem>>, vector<1x1x32xf32>
    %311 = vector.shape_cast %310 : vector<1x1x32xf32> to vector<1x32xf32>
    %312 = vector.broadcast %298 : vector<1x1xf32> to vector<8x32xf32>
    %313 = arith.subf %290, %312 : vector<8x32xf32>
    %314 = vector.broadcast %311 : vector<1x32xf32> to vector<8x32xf32>
    %315 = arith.mulf %314, %313 : vector<8x32xf32>
    %cst_162 = arith.constant 9.99999974E-6 : f32
    %316 = vector.broadcast %cst_162 : f32 to vector<1x1xf32>
    %317 = arith.addf %309, %316 : vector<1x1xf32>
    %318 = math.rsqrt %317 : vector<1x1xf32>
    %319 = vector.broadcast %318 : vector<1x1xf32> to vector<8x32xf32>
    %320 = arith.mulf %315, %319 : vector<8x32xf32>
    %c2_163 = arith.constant 2 : index
    %c0_164 = arith.constant 0 : index
    %c0_165 = arith.constant 0 : index
    %321 = vector.load %arg7[%c2_163, %c0_164, %c0_165] : memref<3x1x32xf32, #tpu.memory_space<vmem>>, vector<1x1x32xf32>
    %322 = vector.shape_cast %321 : vector<1x1x32xf32> to vector<1x32xf32>
    %323 = vector.broadcast %322 : vector<1x32xf32> to vector<8x32xf32>
    %324 = arith.addf %320, %323 : vector<8x32xf32>
    %c2_166 = arith.constant 2 : index
    %c0_167 = arith.constant 0 : index
    %c0_168 = arith.constant 0 : index
    %325 = vector.load %arg8[%c2_166, %c0_167, %c0_168] : memref<3x3x32xf32, #tpu.memory_space<vmem>>, vector<1x3x32xf32>
    %326 = vector.shape_cast %325 : vector<1x3x32xf32> to vector<3x32xf32>
    %c2_169 = arith.constant 2 : index
    %c0_170 = arith.constant 0 : index
    %c0_171 = arith.constant 0 : index
    %327 = vector.load %arg9[%c2_169, %c0_170, %c0_171] : memref<3x1x32xf32, #tpu.memory_space<vmem>>, vector<1x1x32xf32>
    %328 = vector.shape_cast %327 : vector<1x1x32xf32> to vector<1x32xf32>
    %329 = vector.extract_strided_slice %326 {offsets = [0, 0], sizes = [1, 32], strides = [1, 1]} : vector<3x32xf32> to vector<1x32xf32>
    %c4_i32 = arith.constant 4 : i32
    %330 = tpu.dynamic_rotate %324 by %c4_i32 dim 0 : vector<8x32xf32>, i32 -> vector<8x32xf32>
    %c4_i32_172 = arith.constant 4 : i32
    %331 = vector.broadcast %c4_i32_172 : i32 to vector<8x1xi32>
    %332 = arith.cmpi sge, %4, %331 : vector<8x1xi32>
    %cst_173 = arith.constant 0.000000e+00 : f32
    %333 = vector.shape_cast %332 : vector<8x1xi1> to vector<8x1xi1>
    %334 = vector.broadcast %333 : vector<8x1xi1> to vector<8x32xi1>
    %335 = vector.broadcast %cst_173 : f32 to vector<8x32xf32>
    %336 = arith.select %334, %330, %335 : vector<8x32xi1>, vector<8x32xf32>
    %337 = vector.broadcast %329 : vector<1x32xf32> to vector<8x32xf32>
    %338 = arith.mulf %337, %336 : vector<8x32xf32>
    %339 = vector.broadcast %328 : vector<1x32xf32> to vector<8x32xf32>
    %340 = arith.addf %339, %338 : vector<8x32xf32>
    %341 = vector.extract_strided_slice %326 {offsets = [1, 0], sizes = [1, 32], strides = [1, 1]} : vector<3x32xf32> to vector<1x32xf32>
    %342 = vector.broadcast %341 : vector<1x32xf32> to vector<8x32xf32>
    %343 = arith.mulf %342, %324 : vector<8x32xf32>
    %344 = arith.addf %340, %343 : vector<8x32xf32>
    %345 = vector.extract_strided_slice %326 {offsets = [2, 0], sizes = [1, 32], strides = [1, 1]} : vector<3x32xf32> to vector<1x32xf32>
    %c4_i32_174 = arith.constant 4 : i32
    %346 = tpu.dynamic_rotate %324 by %c4_i32_174 dim 0 : vector<8x32xf32>, i32 -> vector<8x32xf32>
    %c4_i32_175 = arith.constant 4 : i32
    %347 = vector.broadcast %c4_i32_175 : i32 to vector<8x1xi32>
    %348 = arith.cmpi slt, %4, %347 : vector<8x1xi32>
    %cst_176 = arith.constant 0.000000e+00 : f32
    %349 = vector.shape_cast %348 : vector<8x1xi1> to vector<8x1xi1>
    %350 = vector.broadcast %349 : vector<8x1xi1> to vector<8x32xi1>
    %351 = vector.broadcast %cst_176 : f32 to vector<8x32xf32>
    %352 = arith.select %350, %346, %351 : vector<8x32xi1>, vector<8x32xf32>
    %353 = vector.broadcast %345 : vector<1x32xf32> to vector<8x32xf32>
    %354 = arith.mulf %353, %352 : vector<8x32xf32>
    %355 = arith.addf %344, %354 : vector<8x32xf32>
    %cst_177 = arith.constant 0.000000e+00 : f32
    %356 = vector.broadcast %cst_177 : f32 to vector<8x32xf32>
    %357 = arith.cmpf oge, %355, %356 : vector<8x32xf32>
    %c2_178 = arith.constant 2 : index
    %c0_179 = arith.constant 0 : index
    %c0_180 = arith.constant 0 : index
    %358 = vector.load %arg10[%c2_178, %c0_179, %c0_180] : memref<3x1x32xf32, #tpu.memory_space<vmem>>, vector<1x1x32xf32>
    %359 = vector.shape_cast %358 : vector<1x1x32xf32> to vector<1x32xf32>
    %360 = vector.broadcast %359 : vector<1x32xf32> to vector<8x32xf32>
    %361 = arith.mulf %360, %355 : vector<8x32xf32>
    %362 = arith.select %357, %355, %361 : vector<8x32xi1>, vector<8x32xf32>
    %cst_181 = arith.constant dense<0.000000e+00> : vector<8xf32>
    %363 = vector.multi_reduction <add>, %362, %cst_181 [1] : vector<8x32xf32> to vector<8xf32>
    %364 = vector.shape_cast %363 : vector<8xf32> to vector<8x1xf32>
    %cst_182 = arith.constant 3.200000e+01 : f32
    %365 = vector.broadcast %cst_182 : f32 to vector<8x1xf32>
    %366 = arith.divf %364, %365 : vector<8x1xf32>
    %cst_183 = arith.constant dense<0.000000e+00> : vector<1xf32>
    %367 = vector.multi_reduction <add>, %366, %cst_183 [0] : vector<8x1xf32> to vector<1xf32>
    %368 = vector.shape_cast %367 : vector<1xf32> to vector<1x1xf32>
    %cst_184 = arith.constant 8.000000e+00 : f32
    %369 = vector.broadcast %cst_184 : f32 to vector<1x1xf32>
    %370 = arith.divf %368, %369 : vector<1x1xf32>
    %371 = vector.broadcast %370 : vector<1x1xf32> to vector<8x32xf32>
    %372 = arith.subf %362, %371 : vector<8x32xf32>
    %373 = arith.mulf %372, %372 : vector<8x32xf32>
    %cst_185 = arith.constant dense<0.000000e+00> : vector<8xf32>
    %374 = vector.multi_reduction <add>, %373, %cst_185 [1] : vector<8x32xf32> to vector<8xf32>
    %375 = vector.shape_cast %374 : vector<8xf32> to vector<8x1xf32>
    %cst_186 = arith.constant 3.200000e+01 : f32
    %376 = vector.broadcast %cst_186 : f32 to vector<8x1xf32>
    %377 = arith.divf %375, %376 : vector<8x1xf32>
    %cst_187 = arith.constant dense<0.000000e+00> : vector<1xf32>
    %378 = vector.multi_reduction <add>, %377, %cst_187 [0] : vector<8x1xf32> to vector<1xf32>
    %379 = vector.shape_cast %378 : vector<1xf32> to vector<1x1xf32>
    %cst_188 = arith.constant 8.000000e+00 : f32
    %380 = vector.broadcast %cst_188 : f32 to vector<1x1xf32>
    %381 = arith.divf %379, %380 : vector<1x1xf32>
    %c2_189 = arith.constant 2 : index
    %c0_190 = arith.constant 0 : index
    %c0_191 = arith.constant 0 : index
    %382 = vector.load %arg11[%c2_189, %c0_190, %c0_191] : memref<3x1x32xf32, #tpu.memory_space<vmem>>, vector<1x1x32xf32>
    %383 = vector.shape_cast %382 : vector<1x1x32xf32> to vector<1x32xf32>
    %384 = vector.broadcast %370 : vector<1x1xf32> to vector<8x32xf32>
    %385 = arith.subf %362, %384 : vector<8x32xf32>
    %386 = vector.broadcast %383 : vector<1x32xf32> to vector<8x32xf32>
    %387 = arith.mulf %386, %385 : vector<8x32xf32>
    %cst_192 = arith.constant 9.99999974E-6 : f32
    %388 = vector.broadcast %cst_192 : f32 to vector<1x1xf32>
    %389 = arith.addf %381, %388 : vector<1x1xf32>
    %390 = math.rsqrt %389 : vector<1x1xf32>
    %391 = vector.broadcast %390 : vector<1x1xf32> to vector<8x32xf32>
    %392 = arith.mulf %387, %391 : vector<8x32xf32>
    %c2_193 = arith.constant 2 : index
    %c0_194 = arith.constant 0 : index
    %c0_195 = arith.constant 0 : index
    %393 = vector.load %arg12[%c2_193, %c0_194, %c0_195] : memref<3x1x32xf32, #tpu.memory_space<vmem>>, vector<1x1x32xf32>
    %394 = vector.shape_cast %393 : vector<1x1x32xf32> to vector<1x32xf32>
    %395 = vector.broadcast %394 : vector<1x32xf32> to vector<8x32xf32>
    %396 = arith.addf %392, %395 : vector<8x32xf32>
    %c2_196 = arith.constant 2 : index
    %c0_197 = arith.constant 0 : index
    %c0_198 = arith.constant 0 : index
    %397 = vector.load %arg13[%c2_196, %c0_197, %c0_198] : memref<3x32x16xf32, #tpu.memory_space<vmem>>, vector<1x32x16xf32>
    %398 = vector.shape_cast %397 : vector<1x32x16xf32> to vector<32x16xf32>
    %cst_199 = arith.constant dense<0.000000e+00> : vector<8x16xf32>
    %399 = tpu.matmul %396, %398, %cst_199 {dimension_numbers = #tpu.dot_dimension_numbers<[1], [0], [0], [1], [0, 0, 1, 1], [], []>} : vector<8x32xf32>, vector<32x16xf32>, vector<8x16xf32> -> vector<8x16xf32>
    %400 = arith.addf %268, %399 : vector<8x16xf32>
    %c2_200 = arith.constant 2 : index
    %c0_201 = arith.constant 0 : index
    %c0_202 = arith.constant 0 : index
    %401 = vector.load %arg14[%c2_200, %c0_201, %c0_202] : memref<3x1x16xf32, #tpu.memory_space<vmem>>, vector<1x1x16xf32>
    %402 = vector.shape_cast %401 : vector<1x1x16xf32> to vector<1x16xf32>
    %403 = vector.broadcast %402 : vector<1x16xf32> to vector<8x16xf32>
    %404 = arith.addf %400, %403 : vector<8x16xf32>
    %c2_203 = arith.constant 2 : index
    %c0_204 = arith.constant 0 : index
    %c0_205 = arith.constant 0 : index
    %405 = vector.load %arg15[%c2_203, %c0_204, %c0_205] : memref<3x32x16xf32, #tpu.memory_space<vmem>>, vector<1x32x16xf32>
    %406 = vector.shape_cast %405 : vector<1x32x16xf32> to vector<32x16xf32>
    %cst_206 = arith.constant dense<0.000000e+00> : vector<8x16xf32>
    %407 = tpu.matmul %396, %406, %cst_206 {dimension_numbers = #tpu.dot_dimension_numbers<[1], [0], [0], [1], [0, 0, 1, 1], [], []>} : vector<8x32xf32>, vector<32x16xf32>, vector<8x16xf32> -> vector<8x16xf32>
    %408 = arith.addf %276, %407 : vector<8x16xf32>
    %c2_207 = arith.constant 2 : index
    %c0_208 = arith.constant 0 : index
    %c0_209 = arith.constant 0 : index
    %409 = vector.load %arg16[%c2_207, %c0_208, %c0_209] : memref<3x1x16xf32, #tpu.memory_space<vmem>>, vector<1x1x16xf32>
    %410 = vector.shape_cast %409 : vector<1x1x16xf32> to vector<1x16xf32>
    %411 = vector.broadcast %410 : vector<1x16xf32> to vector<8x16xf32>
    %412 = arith.addf %408, %411 : vector<8x16xf32>
    %c0_210 = arith.constant 0 : index
    %c0_211 = arith.constant 0 : index
    %c0_212 = arith.constant 0 : index
    %413 = vector.load %arg17[%c0_210, %c0_211, %c0_212] : memref<1x8x16xf32, #tpu.memory_space<vmem>>, vector<1x8x16xf32>
    %414 = vector.shape_cast %413 : vector<1x8x16xf32> to vector<8x16xf32>
    %415 = vector.shape_cast %404 : vector<8x16xf32> to vector<1x8x16xf32>
    tpu.vector_store %arg17[%c0_210, %c0_211, %c0_212], %415 {strides = array<i32>} : memref<1x8x16xf32, #tpu.memory_space<vmem>>, vector<1x8x16xf32>,
    %c0_213 = arith.constant 0 : index
    %c0_214 = arith.constant 0 : index
    %c0_215 = arith.constant 0 : index
    %416 = vector.load %arg18[%c0_213, %c0_214, %c0_215] : memref<1x8x16xf32, #tpu.memory_space<vmem>>, vector<1x8x16xf32>
    %417 = vector.shape_cast %416 : vector<1x8x16xf32> to vector<8x16xf32>
    %418 = vector.shape_cast %412 : vector<8x16xf32> to vector<1x8x16xf32>
    tpu.vector_store %arg18[%c0_213, %c0_214, %c0_215], %418 {strides = array<i32>} : memref<1x8x16xf32, #tpu.memory_space<vmem>>, vector<1x8x16xf32>,
    return
  }
  func.func @transform_0(%arg0: i32) -> (i32, i32, i32) {
    %c0_i32 = arith.constant 0 : i32
    %c0_i32_0 = arith.constant 0 : i32
    %c0_i32_1 = arith.constant 0 : i32
    return %arg0, %c0_i32, %c0_i32_0 : i32, i32, i32
  }
  func.func @transform_1(%arg0: i32) -> (i32, i32, i32) {
    %c0_i32 = arith.constant 0 : i32
    %c0_i32_0 = arith.constant 0 : i32
    %c0_i32_1 = arith.constant 0 : i32
    return %arg0, %c0_i32, %c0_i32_0 : i32, i32, i32
  }
  func.func @transform_2(%arg0: i32) -> (i32, i32, i32) {
    %c0_i32 = arith.constant 0 : i32
    %c0_i32_0 = arith.constant 0 : i32
    %c0_i32_1 = arith.constant 0 : i32
    %c0_i32_2 = arith.constant 0 : i32
    return %c0_i32, %c0_i32_0, %c0_i32_1 : i32, i32, i32
  }
  func.func @transform_3(%arg0: i32) -> (i32, i32, i32) {
    %c0_i32 = arith.constant 0 : i32
    %c0_i32_0 = arith.constant 0 : i32
    %c0_i32_1 = arith.constant 0 : i32
    %c0_i32_2 = arith.constant 0 : i32
    return %c0_i32, %c0_i32_0, %c0_i32_1 : i32, i32, i32
  }
  func.func @transform_4(%arg0: i32) -> (i32, i32, i32) {
    %c0_i32 = arith.constant 0 : i32
    %c0_i32_0 = arith.constant 0 : i32
    %c0_i32_1 = arith.constant 0 : i32
    %c0_i32_2 = arith.constant 0 : i32
    return %c0_i32, %c0_i32_0, %c0_i32_1 : i32, i32, i32
  }
  func.func @transform_5(%arg0: i32) -> (i32, i32, i32) {
    %c0_i32 = arith.constant 0 : i32
    %c0_i32_0 = arith.constant 0 : i32
    %c0_i32_1 = arith.constant 0 : i32
    %c0_i32_2 = arith.constant 0 : i32
    return %c0_i32, %c0_i32_0, %c0_i32_1 : i32, i32, i32
  }
  func.func @transform_6(%arg0: i32) -> (i32, i32, i32) {
    %c0_i32 = arith.constant 0 : i32
    %c0_i32_0 = arith.constant 0 : i32
    %c0_i32_1 = arith.constant 0 : i32
    %c0_i32_2 = arith.constant 0 : i32
    return %c0_i32, %c0_i32_0, %c0_i32_1 : i32, i32, i32
  }
  func.func @transform_7(%arg0: i32) -> (i32, i32, i32) {
    %c0_i32 = arith.constant 0 : i32
    %c0_i32_0 = arith.constant 0 : i32
    %c0_i32_1 = arith.constant 0 : i32
    %c0_i32_2 = arith.constant 0 : i32
    return %c0_i32, %c0_i32_0, %c0_i32_1 : i32, i32, i32
  }
  func.func @transform_8(%arg0: i32) -> (i32, i32, i32) {
    %c0_i32 = arith.constant 0 : i32
    %c0_i32_0 = arith.constant 0 : i32
    %c0_i32_1 = arith.constant 0 : i32
    %c0_i32_2 = arith.constant 0 : i32
    return %c0_i32, %c0_i32_0, %c0_i32_1 : i32, i32, i32
  }
  func.func @transform_9(%arg0: i32) -> (i32, i32, i32) {
    %c0_i32 = arith.constant 0 : i32
    %c0_i32_0 = arith.constant 0 : i32
    %c0_i32_1 = arith.constant 0 : i32
    %c0_i32_2 = arith.constant 0 : i32
    return %c0_i32, %c0_i32_0, %c0_i32_1 : i32, i32, i32
  }
  func.func @transform_10(%arg0: i32) -> (i32, i32, i32) {
    %c0_i32 = arith.constant 0 : i32
    %c0_i32_0 = arith.constant 0 : i32
    %c0_i32_1 = arith.constant 0 : i32
    %c0_i32_2 = arith.constant 0 : i32
    return %c0_i32, %c0_i32_0, %c0_i32_1 : i32, i32, i32
  }
  func.func @transform_11(%arg0: i32) -> (i32, i32, i32) {
    %c0_i32 = arith.constant 0 : i32
    %c0_i32_0 = arith.constant 0 : i32
    %c0_i32_1 = arith.constant 0 : i32
    %c0_i32_2 = arith.constant 0 : i32
    return %c0_i32, %c0_i32_0, %c0_i32_1 : i32, i32, i32
  }
  func.func @transform_12(%arg0: i32) -> (i32, i32, i32) {
    %c0_i32 = arith.constant 0 : i32
    %c0_i32_0 = arith.constant 0 : i32
    %c0_i32_1 = arith.constant 0 : i32
    %c0_i32_2 = arith.constant 0 : i32
    return %c0_i32, %c0_i32_0, %c0_i32_1 : i32, i32, i32
  }
  func.func @transform_13(%arg0: i32) -> (i32, i32, i32) {
    %c0_i32 = arith.constant 0 : i32
    %c0_i32_0 = arith.constant 0 : i32
    %c0_i32_1 = arith.constant 0 : i32
    %c0_i32_2 = arith.constant 0 : i32
    return %c0_i32, %c0_i32_0, %c0_i32_1 : i32, i32, i32
  }
  func.func @transform_14(%arg0: i32) -> (i32, i32, i32) {
    %c0_i32 = arith.constant 0 : i32
    %c0_i32_0 = arith.constant 0 : i32
    %c0_i32_1 = arith.constant 0 : i32
    %c0_i32_2 = arith.constant 0 : i32
    return %c0_i32, %c0_i32_0, %c0_i32_1 : i32, i32, i32
  }
  func.func @transform_15(%arg0: i32) -> (i32, i32, i32) {
    %c0_i32 = arith.constant 0 : i32
    %c0_i32_0 = arith.constant 0 : i32
    %c0_i32_1 = arith.constant 0 : i32
    %c0_i32_2 = arith.constant 0 : i32
    return %c0_i32, %c0_i32_0, %c0_i32_1 : i32, i32, i32
  }
  func.func @transform_16(%arg0: i32) -> (i32, i32, i32) {
    %c0_i32 = arith.constant 0 : i32
    %c0_i32_0 = arith.constant 0 : i32
    %c0_i32_1 = arith.constant 0 : i32
    return %arg0, %c0_i32, %c0_i32_0 : i32, i32, i32
  }
  func.func @transform_17(%arg0: i32) -> (i32, i32, i32) {
    %c0_i32 = arith.constant 0 : i32
    %c0_i32_0 = arith.constant 0 : i32
    %c0_i32_1 = arith.constant 0 : i32
    return %arg0, %c0_i32, %c0_i32_0 : i32, i32, i32
  }
}

</mosaic_0001>

<llo_original>
// kernel: squeeze.6
$region0: #{squeeze.6}
  %s0 = inlined_call_operand.vmem [shape: f32[1,2,9,8], index: 0, kind: input, shape index: {}]
  %s1 = inlined_call_operand.hbm [shape: f32[2,72], index: 1, kind: output, shape index: {}]
  $region1: #{squeeze.6} parent=0
    #allocation0 [shape = 'u8[1024]{0}', space=vmem, size = 0x400, scoped, tag = 'operand span for operand 1']
    #allocation1 [shape = 's32[1]{0}', space=sflag, size = 0x4, scoped, tag = 'scoped memory for squeeze.6']
    #allocation2 [shape = 'u8[4096]{0}', space=vmem, size = 0x1000, scoped, tag = 'scoped mem for output reshape']
    %2 = vsyncpa [#allocation1], 0
    %s3 = smov 3
    %v4 = vld [vmem:[%s0] ss:$16 sm:%s3]
    %vm5 = vcmask 64512
    %6 = vst.msk [vmem:[#allocation2] sm:$0x3] %vm5, %v4
    %s7 = scalar_lea.vmem %s0, 8
    %s8 = smov 3
    %v9 = vld [vmem:[%s7] ss:$16 sm:%s8]
    %10 = vrot.lane.b32.xlu0 %v9, 64
    %v11 = vpop.permute.xlu0 %10
    %vm12 = vcmask 589312
    %13 = vst.msk [vmem:[#allocation2] sm:$0x3] %vm12, %v11
    %s14 = scalar_lea.vmem %s0, 7
    %s15 = smov 3
    %v16 = vld [vmem:[%s14] ss:$16 sm:%s15]
    %17 = vrot.lane.b32.xlu0 %v16, 56
    %v18 = vpop.permute.xlu0 %17
    %vm19 = vcmask 523712
    %20 = vst.msk [vmem:[#allocation2] sm:$0x3] %vm19, %v18
    %s21 = scalar_lea.vmem %s0, 6
    %s22 = smov 3
    %v23 = vld [vmem:[%s21] ss:$16 sm:%s22]
    %24 = vrot.lane.b32.xlu0 %v23, 48
    %v25 = vpop.permute.xlu0 %24
    %vm26 = vcmask 458112
    %27 = vst.msk [vmem:[#allocation2] sm:$0x3] %vm26, %v25
    %s28 = scalar_lea.vmem %s0, 5
    %s29 = smov 3
    %v30 = vld [vmem:[%s28] ss:$16 sm:%s29]
    %31 = vrot.lane.b32.xlu0 %v30, 40
    %v32 = vpop.permute.xlu0 %31
    %vm33 = vcmask 392512
    %34 = vst.msk [vmem:[#allocation2] sm:$0x3] %vm33, %v32
    %s35 = scalar_lea.vmem %s0, 4
    %s36 = smov 3
    %v37 = vld [vmem:[%s35] ss:$16 sm:%s36]
    %38 = vrot.lane.b32.xlu0 %v37, 32
    %v39 = vpop.permute.xlu0 %38
    %vm40 = vcmask 326912
    %41 = vst.msk [vmem:[#allocation2] sm:$0x3] %vm40, %v39
    %s42 = scalar_lea.vmem %s0, 3
    %s43 = smov 3
    %v44 = vld [vmem:[%s42] ss:$16 sm:%s43]
    %45 = vrot.lane.b32.xlu0 %v44, 24
    %v46 = vpop.permute.xlu0 %45
    %vm47 = vcmask 261312
    %48 = vst.msk [vmem:[#allocation2] sm:$0x3] %vm47, %v46
    %s49 = scalar_lea.vmem %s0, 2
    %s50 = smov 3
    %v51 = vld [vmem:[%s49] ss:$16 sm:%s50]
    %52 = vrot.lane.b32.xlu0 %v51, 16
    %v53 = vpop.permute.xlu0 %52
    %vm54 = vcmask 195712
    %55 = vst.msk [vmem:[#allocation2] sm:$0x3] %vm54, %v53
    %s56 = scalar_lea.vmem %s0, 1
    %s57 = smov 3
    %v58 = vld [vmem:[%s56] ss:$16 sm:%s57]
    %59 = vrot.lane.b32.xlu0 %v58, 8
    %v60 = vpop.permute.xlu0 %59
    %vm61 = vcmask 130112
    %62 = vst.msk [vmem:[#allocation2] sm:$0x3] %vm61, %v60
    %s64 = sshll.u32 1, 2
    %s65 = ssub.s32 %s64, 1
    %v67 = vld [vmem:[#allocation2] sm:%s65]
    %s68 = sshll.u32 1, 2
    %s69 = ssub.s32 %s68, 1
    %70 = vst [vmem:[#allocation0] sm:%s69] %v67
    %s72 = ssub.s32 32, 32
    %73 = vsyncadd [#allocation1], %s72
    %s75 = sshll.u32 [#allocation0], 4
    %s76 = int_to_ptr.vmem [resolvable:$true] %s75
    %78 = dma.vmem_to_hbm [thread:$0]  %s76, 32, %s1, [#allocation1]
    %79 = dma.done [#allocation1], 32
    %80 = vsyncpa [#allocation1], 1

// kernel: mb_convtasnet_forward.5
$region0: #{mb_convtasnet_forward.5}
  #allocation0 [shape = 'u32[]', space=smem, size = 0x4, offset = 0x4, fixed_abs, tag = 'smem constant byte address 0x4 - core index']
  #allocation1 [shape = 'u32[144,128]{1,0:T(1,128)}', space=vmem, size = 0x12000, scoped, tag = 'internal scratch']
  %s0 = inlined_call_operand.vmem [shape: f32[2,8,16], index: 0, kind: input, shape index: {}]
  %s1 = inlined_call_operand.vmem [shape: f32[2,8,32], index: 1, kind: input, shape index: {}]
  %s2 = inlined_call_operand.vmem [shape: f32[1,16], index: 2, kind: input, shape index: {}]
  %s3 = inlined_call_operand.vmem [shape: f32[16,64], index: 3, kind: input, shape index: {}]
  %s4 = inlined_call_operand.vmem [shape: f32[1,64], index: 4, kind: input, shape index: {}]
  %s5 = inlined_call_operand.vmem [shape: f32[32,16], index: 5, kind: input, shape index: {}]
  %s6 = inlined_call_operand.vmem [shape: f32[2,2,9,8], index: 6, kind: output, shape index: {}]
  %s7 = sld [smem:[#allocation0]]
  $region91: #{mb_convtasnet_forward.5} parent=0
    _
  %s9 = ssub.s32 1, %s7
  %s10 = scalar_select 0, %s9, %s7
  $region1: #{mb_convtasnet_forward.5} parent=0
    #allocation2 [shape = 'u8[32768]{0}', space=vmem, size = 0x8000, scoped, tag = 'output window, operand 0']
    loop: start=0, step=1, limit=4
    $region2: #{mb_convtasnet_forward.5} parent=1 // loop_pre_header
      _
    $region3: #{mb_convtasnet_forward.5} parent=1 // loop_header
      %s12 = sphi 0, %s16
      %p13 = scmp.ge.s32.totalorder %s12, 4
      %s22 = sphi 0, %s24
      %s25 = sphi 0, %s22
      %s26 = sphi 0, %s25
      %s42 = sphi 0, %s26
      %s48 = sphi 0, %s50
      %s51 = sphi 0, %s48
      %s52 = sphi 0, %s51
      %s68 = sphi 0, %s52
      %s72 = sphi 0, %s72
      %s74 = sphi 0, %s72
      %s75 = sphi 0, %s74
      %s89 = sphi 0, %s75
      %s93 = sphi 0, %s93
      %s95 = sphi 0, %s93
      %s96 = sphi 0, %s95
      %s110 = sphi 0, %s96
      %s114 = sphi 0, %s114
      %s116 = sphi 0, %s114
      %s117 = sphi 0, %s116
      %s131 = sphi 0, %s117
      %s135 = sphi 0, %s135
      %s137 = sphi 0, %s135
      %s138 = sphi 0, %s137
      %s152 = sphi 0, %s138
      %s158 = sphi 0, %s160
      %s161 = sphi 0, %s158
      %s162 = sphi 0, %s161
      %s178 = sphi 0, %s162
    $region4: #{mb_convtasnet_forward.5} parent=1 // loop_header_branch
      %15 = sbr.rel (%p13) target = $region8
    $region5: #{mb_convtasnet_forward.5} parent=1 // loop_body
      %s17 = ssub.s32 %s12, 1
      %s18 = ssub.s32 %s12, 2
      %s19 = sadd.s32 %s12, 1
      %s20 = ssub.s32 %s12, %s19
      %p21 = scmp.eq.s32.totalorder %s20, 0
      %s23 = sadd.s32 %s22, 1
      %s24 = scalar_select %p21, %s22, %s23
      %p27 = pneg %p21
      %p28 = scmp.eq.s32.totalorder %s12, 1
      %p29 = por %p27, %p28
      %p30 = scmp.ne.s32.totalorder %s22, %s25
      %p31 = scmp.eq.s32.totalorder %s12, 0
      %p32 = por %p30, %p31
      %p33 = scmp.ne.s32.totalorder %s22, %s25
      %p34 = scmp.eq.s32.totalorder %s17, 1
      %p35 = por %p33, %p34
      %p36 = scmp.ne.s32.totalorder %s25, %s26
      %p37 = scmp.eq.s32.totalorder %s17, 0
      %p38 = por %p36, %p37
      %p39 = scmp.ne.s32.totalorder %s25, %s26
      %p40 = scmp.eq.s32.totalorder %s18, 1
      %p41 = por %p39, %p40
      %p43 = scmp.ne.s32.totalorder %s26, %s42
      %p44 = scmp.eq.s32.totalorder %s18, 0
      %p45 = por %p43, %p44
      %s46 = ssub.s32 %s12, %s19
      %p47 = scmp.eq.s32.totalorder %s46, 0
      %s49 = sadd.s32 %s48, 1
      %s50 = scalar_select %p47, %s48, %s49
      %p53 = pneg %p47
      %p54 = scmp.eq.s32.totalorder %s12, 1
      %p55 = por %p53, %p54
      %p56 = scmp.ne.s32.totalorder %s48, %s51
      %p57 = scmp.eq.s32.totalorder %s12, 0
      %p58 = por %p56, %p57
      %p59 = scmp.ne.s32.totalorder %s48, %s51
      %p60 = scmp.eq.s32.totalorder %s17, 1
      %p61 = por %p59, %p60
      %p62 = scmp.ne.s32.totalorder %s51, %s52
      %p63 = scmp.eq.s32.totalorder %s17, 0
      %p64 = por %p62, %p63
      %p65 = scmp.ne.s32.totalorder %s51, %s52
      %p66 = scmp.eq.s32.totalorder %s18, 1
      %p67 = por %p65, %p66
      %p69 = scmp.ne.s32.totalorder %s52, %s68
      %p70 = scmp.eq.s32.totalorder %s18, 0
      %p71 = por %p69, %p70
      %s73 = sadd.s32 %s72, 1
      %p76 = scmp.eq.s32.totalorder %s12, 1
      %p77 = scmp.ne.s32.totalorder %s72, %s74
      %p78 = scmp.eq.s32.totalorder %s12, 0
      %p79 = por %p77, %p78
      %p80 = scmp.ne.s32.totalorder %s72, %s74
      %p81 = scmp.eq.s32.totalorder %s17, 1
      %p82 = por %p80, %p81
      %p83 = scmp.ne.s32.totalorder %s74, %s75
      %p84 = scmp.eq.s32.totalorder %s17, 0
      %p85 = por %p83, %p84
      %p86 = scmp.ne.s32.totalorder %s74, %s75
      %p87 = scmp.eq.s32.totalorder %s18, 1
      %p88 = por %p86, %p87
      %p90 = scmp.ne.s32.totalorder %s75, %s89
      %p91 = scmp.eq.s32.totalorder %s18, 0
      %p92 = por %p90, %p91
      %s94 = sadd.s32 %s93, 1
      %p97 = scmp.eq.s32.totalorder %s12, 1
      %p98 = scmp.ne.s32.totalorder %s93, %s95
      %p99 = scmp.eq.s32.totalorder %s12, 0
      %p100 = por %p98, %p99
      %p101 = scmp.ne.s32.totalorder %s93, %s95
      %p102 = scmp.eq.s32.totalorder %s17, 1
      %p103 = por %p101, %p102
      %p104 = scmp.ne.s32.totalorder %s95, %s96
      %p105 = scmp.eq.s32.totalorder %s17, 0
      %p106 = por %p104, %p105
      %p107 = scmp.ne.s32.totalorder %s95, %s96
      %p108 = scmp.eq.s32.totalorder %s18, 1
      %p109 = por %p107, %p108
      %p111 = scmp.ne.s32.totalorder %s96, %s110
      %p112 = scmp.eq.s32.totalorder %s18, 0
      %p113 = por %p111, %p112
      %s115 = sadd.s32 %s114, 1
      %p118 = scmp.eq.s32.totalorder %s12, 1
      %p119 = scmp.ne.s32.totalorder %s114, %s116
      %p120 = scmp.eq.s32.totalorder %s12, 0
      %p121 = por %p119, %p120
      %p122 = scmp.ne.s32.totalorder %s114, %s116
      %p123 = scmp.eq.s32.totalorder %s17, 1
      %p124 = por %p122, %p123
      %p125 = scmp.ne.s32.totalorder %s116, %s117
      %p126 = scmp.eq.s32.totalorder %s17, 0
      %p127 = por %p125, %p126
      %p128 = scmp.ne.s32.totalorder %s116, %s117
      %p129 = scmp.eq.s32.totalorder %s18, 1
      %p130 = por %p128, %p129
      %p132 = scmp.ne.s32.totalorder %s117, %s131
      %p133 = scmp.eq.s32.totalorder %s18, 0
      %p134 = por %p132, %p133
      %s136 = sadd.s32 %s135, 1
      %p139 = scmp.eq.s32.totalorder %s12, 1
      %p140 = scmp.ne.s32.totalorder %s135, %s137
      %p141 = scmp.eq.s32.totalorder %s12, 0
      %p142 = por %p140, %p141
      %p143 = scmp.ne.s32.totalorder %s135, %s137
      %p144 = scmp.eq.s32.totalorder %s17, 1
      %p145 = por %p143, %p144
      %p146 = scmp.ne.s32.totalorder %s137, %s138
      %p147 = scmp.eq.s32.totalorder %s17, 0
      %p148 = por %p146, %p147
      %p149 = scmp.ne.s32.totalorder %s137, %s138
      %p150 = scmp.eq.s32.totalorder %s18, 1
      %p151 = por %p149, %p150
      %p153 = scmp.ne.s32.totalorder %s138, %s152
      %p154 = scmp.eq.s32.totalorder %s18, 0
      %p155 = por %p153, %p154
      %s156 = ssub.s32 %s12, %s19
      %p157 = scmp.eq.s32.totalorder %s156, 0
      %s159 = sadd.s32 %s158, 1
      %s160 = scalar_select %p157, %s158, %s159
      %p163 = pneg %p157
      %p164 = scmp.eq.s32.totalorder %s12, 1
      %p165 = por %p163, %p164
      %p166 = scmp.ne.s32.totalorder %s158, %s161
      %p167 = scmp.eq.s32.totalorder %s12, 0
      %p168 = por %p166, %p167
      %p169 = scmp.ne.s32.totalorder %s158, %s161
      %p170 = scmp.eq.s32.totalorder %s17, 1
      %p171 = por %p169, %p170
      %p172 = scmp.ne.s32.totalorder %s161, %s162
      %p173 = scmp.eq.s32.totalorder %s17, 0
      %p174 = por %p172, %p173
      %p175 = scmp.ne.s32.totalorder %s161, %s162
      %p176 = scmp.eq.s32.totalorder %s18, 1
      %p177 = por %p175, %p176
      %p179 = scmp.ne.s32.totalorder %s162, %s178
      %p180 = scmp.eq.s32.totalorder %s18, 0
      %p181 = por %p179, %p180
      %p182 = scmp.le.s32.totalorder 1, %s12
      %p183 = scmp.lt.s32.totalorder %s12, 3
      %p184 = pnand %p182, %p183
      %p185 = pneg %p184
      // Predicated region
      $region9: #{mb_convtasnet_forward.5} parent=5 // pred_check
        _
      $region10: #{mb_convtasnet_forward.5} parent=5 // pred_check_branch
        %187 = sbr.rel (%p184) target = $region12
      $region11: #{mb_convtasnet_forward.5} parent=5 // pred_region
        %s188 = ssub.s32 %s12, 1
        // Predicated region
        $region13: #{mb_convtasnet_forward.5} parent=11 // pred_check
          %p189 = pneg %p85
        $region14: #{mb_convtasnet_forward.5} parent=11 // pred_check_branch
          %191 = sbr.rel (%p189) target = $region16
        $region15: #{mb_convtasnet_forward.5} parent=11 // pred_region
          _
        $region16: #{mb_convtasnet_forward.5} parent=11 // pred_fallthru
          _
        // Predicated region
        $region17: #{mb_convtasnet_forward.5} parent=11 // pred_check
          %p192 = pneg %p106
        $region18: #{mb_convtasnet_forward.5} parent=11 // pred_check_branch
          %194 = sbr.rel (%p192) target = $region20
        $region19: #{mb_convtasnet_forward.5} parent=11 // pred_region
          _
        $region20: #{mb_convtasnet_forward.5} parent=11 // pred_fallthru
          _
        // Predicated region
        $region21: #{mb_convtasnet_forward.5} parent=11 // pred_check
          %p195 = pneg %p127
        $region22: #{mb_convtasnet_forward.5} parent=11 // pred_check_branch
          %197 = sbr.rel (%p195) target = $region24
        $region23: #{mb_convtasnet_forward.5} parent=11 // pred_region
          _
        $region24: #{mb_convtasnet_forward.5} parent=11 // pred_fallthru
          _
        // Predicated region
        $region25: #{mb_convtasnet_forward.5} parent=11 // pred_check
          %p198 = pneg %p148
        $region26: #{mb_convtasnet_forward.5} parent=11 // pred_check_branch
          %200 = sbr.rel (%p198) target = $region28
        $region27: #{mb_convtasnet_forward.5} parent=11 // pred_region
          _
        $region28: #{mb_convtasnet_forward.5} parent=11 // pred_fallthru
          _
      $region12: #{mb_convtasnet_forward.5} parent=5 // pred_fallthru
        _
      %p201 = scmp.lt.s32.totalorder %s12, 2
      // Predicated region
      $region29: #{mb_convtasnet_forward.5} parent=5 // pred_check
        %p202 = pneg %p201
      $region30: #{mb_convtasnet_forward.5} parent=5 // pred_check_branch
        %204 = sbr.rel (%p202) target = $region32
      $region31: #{mb_convtasnet_forward.5} parent=5 // pred_region
        // Predicated region
        $region33: #{mb_convtasnet_forward.5} parent=31 // pred_check
          %p205 = pneg %p32
        $region34: #{mb_convtasnet_forward.5} parent=31 // pred_check_branch
          %207 = sbr.rel (%p205) target = $region36
        $region35: #{mb_convtasnet_forward.5} parent=31 // pred_region
          %p208 = scmp.lt.s32.totalorder %s12, 1
          %s209 = scalar_select %p208, %s12, 1
          %s210 = smul.addr %s209, 8
          %s211 = scalar_lea.vmem %s0, %s210
        $region36: #{mb_convtasnet_forward.5} parent=31 // pred_fallthru
          _
        // Predicated region
        $region37: #{mb_convtasnet_forward.5} parent=31 // pred_check
          %p212 = pneg %p58
        $region38: #{mb_convtasnet_forward.5} parent=31 // pred_check_branch
          %214 = sbr.rel (%p212) target = $region40
        $region39: #{mb_convtasnet_forward.5} parent=31 // pred_region
          %p215 = scmp.lt.s32.totalorder %s12, 1
          %s216 = scalar_select %p215, %s12, 1
          %s217 = smul.addr %s216, 8
          %s218 = scalar_lea.vmem %s1, %s217
        $region40: #{mb_convtasnet_forward.5} parent=31 // pred_fallthru
          _
      $region32: #{mb_convtasnet_forward.5} parent=5 // pred_fallthru
        _
      %p219 = scmp.le.s32.totalorder 1, %s12
      %p220 = scmp.lt.s32.totalorder %s12, 3
      %p221 = pnand %p219, %p220
      %p222 = pneg %p221
      // Predicated region
      $region41: #{mb_convtasnet_forward.5} parent=5 // pred_check
        _
      $region42: #{mb_convtasnet_forward.5} parent=5 // pred_check_branch
        %224 = sbr.rel (%p221) target = $region44
      $region43: #{mb_convtasnet_forward.5} parent=5 // pred_region
        %s225 = ssub.s32 %s12, 1
        %p226 = scmp.lt.s32.totalorder %s17, 1
        %s227 = scalar_select %p226, %s17, 1
        %s228 = smul.addr %s227, 8
        %s229 = scalar_lea.vmem %s0, %s228
        %p230 = pneg %p38
        %p231 = pneg %p35
        %p232 = scmp.lt.s32.totalorder %s17, 1
        %s233 = scalar_select %p232, %s17, 1
        %s234 = smul.addr %s233, 8
        %s235 = scalar_lea.vmem %s1, %s234
        %p236 = pneg %p64
        %p237 = pneg %p61
        %p238 = pneg %p85
        %p239 = pneg %p82
        %p240 = pneg %p106
        %p241 = pneg %p103
        %p242 = pneg %p127
        %p243 = pneg %p124
        %p244 = pneg %p148
        %p245 = pneg %p145
        %p246 = pneg %p174
        %p247 = pneg %p171
        %s248 = sand.u32 %s161, 1
        %s249 = sand.u32 %s161, 1
        %s250 = smul.addr %s249, 32
        %s251 = scalar_lea.vmem [#allocation2], %s250
        %p252 = scmp.lt.s32.totalorder %s17, 1
        %s253 = scalar_select %p252, %s17, 1
        %s254 = smul.addr %s253, 8
        %s255 = scalar_lea.vmem %s0, %s254
        %p256 = scmp.lt.s32.totalorder %s17, 1
        %s257 = scalar_select %p256, %s17, 1
        %s258 = smul.addr %s257, 8
        %s259 = scalar_lea.vmem %s1, %s258
        %v260 = vld [vmem:[%s255] sm:$0xff]
        %v261 = vld [vmem:[%s259] sm:$0xff]
        %vm262 = vcmp.ge.f32.partialorder %v260, 0.0
        %v263 = vld [vmem:[%s2] sm:$0x1]
        %v265 = vlaneseq
        %v266 = vshrl.u32 %v265, 7
        %v267 = vsub.s32 0, %v266
        %v268 = vrot.slane %v263, %v267
        %v270 = vmul.f32 %v268, %v260
        %v271 = vsel %vm262, %v260, %v270
        %v272 = vld [vmem:[%s3] sm:$0xff]
        %v273 = vld [vmem:[%s3 + $0x8] sm:$0xff]
        %v274 = vld [vmem:[%s4] sm:$0x1]
        %v276 = vlaneseq
        %v277 = vshrl.u32 %v276, 7
        %v278 = vsub.s32 0, %v277
        %v279 = vrot.slane %v274, %v278
        %vm281 = vcmask 130048
        %v283 = vsel %vm281, %v271, 0
        %285 = vmatprep.subr.mxu0 0.0
        %286 = vmatpush1.msra.mxu0 0.0
        %287 = vmatprep.subr.mxu0 0.0
        %288 = vmatpush1.msra.mxu0 0.0
        %289 = vmatprep.subr.mxu0 0.0
        %290 = vmatpush1.msra.mxu0 0.0
        %291 = vmatprep.subr.mxu0 0.0
        %292 = vmatpush1.msra.mxu0 0.0
        %293 = vmatprep.subr.mxu0 0.0
        %294 = vmatpush1.msra.mxu0 0.0
        %295 = vmatprep.subr.mxu0 0.0
        %296 = vmatpush1.msra.mxu0 0.0
        %297 = vmatprep.subr.mxu0 0.0
        %298 = vmatpush1.msra.mxu0 0.0
        %299 = vmatprep.subr.mxu0 0.0
        %300 = vmatpush1.msra.mxu0 0.0
        %301 = vmatprep.subr.mxu0 0.0
        %302 = vmatpush1.msra.mxu0 0.0
        %303 = vmatprep.subr.mxu0 0.0
        %304 = vmatpush1.msra.mxu0 0.0
        %305 = vmatprep.subr.mxu0 0.0
        %306 = vmatpush1.msra.mxu0 0.0
        %307 = vmatprep.subr.mxu0 0.0
        %308 = vmatpush1.msra.mxu0 0.0
        %309 = vmatprep.subr.mxu0 0.0
        %310 = vmatpush1.msra.mxu0 0.0
        %311 = vmatprep.subr.mxu0 0.0
        %312 = vmatpush1.msra.mxu0 0.0
        %313 = vmatprep.subr.mxu0 0.0
        %314 = vmatpush1.msra.mxu0 %v273
        %315 = vmatprep.subr.mxu0 0.0
        %316 = vmatpush1.msra.mxu0 %v272
        %317 = vmatprep.subr.mxu0 0.0
        %318 = vmatpush2.msra.mxu0 0.0
        %319 = vmatprep.subr.mxu0 0.0
        %320 = vmatpush2.msra.mxu0 0.0
        %321 = vmatprep.subr.mxu0 0.0
        %322 = vmatpush2.msra.mxu0 0.0
        %323 = vmatprep.subr.mxu0 0.0
        %324 = vmatpush2.msra.mxu0 0.0
        %325 = vmatprep.subr.mxu0 0.0
        %326 = vmatpush2.msra.mxu0 0.0
        %327 = vmatprep.subr.mxu0 0.0
        %328 = vmatpush2.msra.mxu0 0.0
        %329 = vmatprep.subr.mxu0 0.0
        %330 = vmatpush2.msra.mxu0 0.0
        %331 = vmatprep.subr.mxu0 0.0
        %332 = vmatpush2.msra.mxu0 0.0
        %333 = vmatprep.subr.mxu0 0.0
        %334 = vmatpush2.msra.mxu0 0.0
        %335 = vmatprep.subr.mxu0 0.0
        %336 = vmatpush2.msra.mxu0 0.0
        %337 = vmatprep.subr.mxu0 0.0
        %338 = vmatpush2.msra.mxu0 0.0
        %339 = vmatprep.subr.mxu0 0.0
        %340 = vmatpush2.msra.mxu0 0.0
        %341 = vmatprep.subr.mxu0 0.0
        %342 = vmatpush2.msra.mxu0 0.0
        %343 = vmatprep.subr.mxu0 0.0
        %344 = vmatpush2.msra.mxu0 0.0
        %345 = vmatprep.subr.mxu0 0.0
        %346 = vmatpush2.msra.mxu0 0.0
        %347 = vmatprep.subr.mxu0 0.0
        %348 = vmatpush2.msra.mxu0 0.0
        %349 = vmatprep.mubr.f32.mxu0 0.0
        %350 = vmatmul.mubr.f32.gmra.mxu0 %v283
        %v351 = vpop.f32.mrf.mxu0
        %v352 = vadd.f32 %v279, %v351
        %v353 = vpop.f32.mrf.mxu0
        %354 = vdwg.mxu0
        %v355 = vxor.u32 %v352, 2147483648
        %v356 = vmul.f32 %v355, 1.442695
        %v357 = vpow.pop %v356
        %v358 = vadd.f32 %v357, 1.0
        %v359 = vrcp.pop %v358
        %v360 = vmul.f32 1.0, %v359
        %v361 = vlaneseq
        %v362 = vshrl.u32 %v361, 7
        %v363 = vmul.f32 %v261, %v360
        %v364 = vld [vmem:[%s5] sm:$0xff]
        %v365 = vld [vmem:[%s5 + $0x8] sm:$0xff]
        %v366 = vld [vmem:[%s5 + $0x10] sm:$0xff]
        %v367 = vld [vmem:[%s5 + $0x18] sm:$0xff]
        %vm368 = vcmask 261120
        %v370 = vsel %vm368, %v363, 0
        %372 = vmatprep.subr.mxu0 0.0
        %373 = vmatpush1.msra.mxu0 0.0
        %374 = vmatprep.subr.mxu0 0.0
        %375 = vmatpush1.msra.mxu0 0.0
        %376 = vmatprep.subr.mxu0 0.0
        %377 = vmatpush1.msra.mxu0 0.0
        %378 = vmatprep.subr.mxu0 0.0
        %379 = vmatpush1.msra.mxu0 0.0
        %380 = vmatprep.subr.mxu0 0.0
        %381 = vmatpush1.msra.mxu0 0.0
        %382 = vmatprep.subr.mxu0 0.0
        %383 = vmatpush1.msra.mxu0 0.0
        %384 = vmatprep.subr.mxu0 0.0
        %385 = vmatpush1.msra.mxu0 0.0
        %386 = vmatprep.subr.mxu0 0.0
        %387 = vmatpush1.msra.mxu0 0.0
        %388 = vmatprep.subr.mxu0 0.0
        %389 = vmatpush1.msra.mxu0 0.0
        %390 = vmatprep.subr.mxu0 0.0
        %391 = vmatpush1.msra.mxu0 0.0
        %392 = vmatprep.subr.mxu0 0.0
        %393 = vmatpush1.msra.mxu0 0.0
        %394 = vmatprep.subr.mxu0 0.0
        %395 = vmatpush1.msra.mxu0 0.0
        %396 = vmatprep.subr.mxu0 0.0
        %397 = vmatpush1.msra.mxu0 %v367
        %398 = vmatprep.subr.mxu0 0.0
        %399 = vmatpush1.msra.mxu0 %v366
        %400 = vmatprep.subr.mxu0 0.0
        %401 = vmatpush1.msra.mxu0 %v365
        %402 = vmatprep.subr.mxu0 0.0
        %403 = vmatpush1.msra.mxu0 %v364
        %404 = vmatprep.subr.mxu0 0.0
        %405 = vmatpush2.msra.mxu0 0.0
        %406 = vmatprep.subr.mxu0 0.0
        %407 = vmatpush2.msra.mxu0 0.0
        %408 = vmatprep.subr.mxu0 0.0
        %409 = vmatpush2.msra.mxu0 0.0
        %410 = vmatprep.subr.mxu0 0.0
        %411 = vmatpush2.msra.mxu0 0.0
        %412 = vmatprep.subr.mxu0 0.0
        %413 = vmatpush2.msra.mxu0 0.0
        %414 = vmatprep.subr.mxu0 0.0
        %415 = vmatpush2.msra.mxu0 0.0
        %416 = vmatprep.subr.mxu0 0.0
        %417 = vmatpush2.msra.mxu0 0.0
        %418 = vmatprep.subr.mxu0 0.0
        %419 = vmatpush2.msra.mxu0 0.0
        %420 = vmatprep.subr.mxu0 0.0
        %421 = vmatpush2.msra.mxu0 0.0
        %422 = vmatprep.subr.mxu0 0.0
        %423 = vmatpush2.msra.mxu0 0.0
        %424 = vmatprep.subr.mxu0 0.0
        %425 = vmatpush2.msra.mxu0 0.0
        %426 = vmatprep.subr.mxu0 0.0
        %427 = vmatpush2.msra.mxu0 0.0
        %428 = vmatprep.subr.mxu0 0.0
        %429 = vmatpush2.msra.mxu0 0.0
        %430 = vmatprep.subr.mxu0 0.0
        %431 = vmatpush2.msra.mxu0 0.0
        %432 = vmatprep.subr.mxu0 0.0
        %433 = vmatpush2.msra.mxu0 0.0
        %434 = vmatprep.subr.mxu0 0.0
        %435 = vmatpush2.msra.mxu0 0.0
        %436 = vmatprep.mubr.f32.mxu0 0.0
        %437 = vmatmul.mubr.f32.gmra.mxu0 %v370
        %v438 = vpop.f32.mrf.mxu0
        %v439 = vadd.f32 0.0, %v438
        %v440 = vpop.f32.mrf.mxu0
        %441 = vdwg.mxu0
        %443 = vrot.lane.b32.xlu0 %v439, 120
        %v444 = vpop.permute.xlu0 %443
        %v446 = vrot.slane %v444, 7
        %vm447 = vcmp.ge.s32.totalorder %v362, 1
        %v448 = vsel %vm447, 1, 0
        %vm449 = vcmp.eq.s32.totalorder %v448, 1
        %v450 = vsel %vm449, %v446, 0.0
        %v451 = vadd.f32 %v439, %v450
        %v452 = vrot.slane %v439, 7
        %453 = vrot.lane.b32.xlu0 %v452, 120
        %v454 = vpop.permute.xlu0 %453
        %vm456 = vcmask 64512
        %457 = vst.msk [vmem:[%s251] sm:$0xff] %vm456, %v451
        %vm458 = vcmask 57344
        %459 = vst.msk [vmem:[%s251 + $0x8] sm:$0x1] %vm458, %v454
        %461 = vrot.lane.b32.xlu0 %v360, 96
        %v462 = vpop.permute.xlu0 %461
        %v464 = vmul.f32 %v261, %v462
        %v465 = vld [vmem:[%s5] sm:$0xff]
        %v466 = vld [vmem:[%s5 + $0x8] sm:$0xff]
        %v467 = vld [vmem:[%s5 + $0x10] sm:$0xff]
        %v468 = vld [vmem:[%s5 + $0x18] sm:$0xff]
        %v470 = vsel %vm368, %v464, 0
        %472 = vmatprep.subr.mxu0 0.0
        %473 = vmatpush1.msra.mxu0 0.0
        %474 = vmatprep.subr.mxu0 0.0
        %475 = vmatpush1.msra.mxu0 0.0
        %476 = vmatprep.subr.mxu0 0.0
        %477 = vmatpush1.msra.mxu0 0.0
        %478 = vmatprep.subr.mxu0 0.0
        %479 = vmatpush1.msra.mxu0 0.0
        %480 = vmatprep.subr.mxu0 0.0
        %481 = vmatpush1.msra.mxu0 0.0
        %482 = vmatprep.subr.mxu0 0.0
        %483 = vmatpush1.msra.mxu0 0.0
        %484 = vmatprep.subr.mxu0 0.0
        %485 = vmatpush1.msra.mxu0 0.0
        %486 = vmatprep.subr.mxu0 0.0
        %487 = vmatpush1.msra.mxu0 0.0
        %488 = vmatprep.subr.mxu0 0.0
        %489 = vmatpush1.msra.mxu0 0.0
        %490 = vmatprep.subr.mxu0 0.0
        %491 = vmatpush1.msra.mxu0 0.0
        %492 = vmatprep.subr.mxu0 0.0
        %493 = vmatpush1.msra.mxu0 0.0
        %494 = vmatprep.subr.mxu0 0.0
        %495 = vmatpush1.msra.mxu0 0.0
        %496 = vmatprep.subr.mxu0 0.0
        %497 = vmatpush1.msra.mxu0 %v468
        %498 = vmatprep.subr.mxu0 0.0
        %499 = vmatpush1.msra.mxu0 %v467
        %500 = vmatprep.subr.mxu0 0.0
        %501 = vmatpush1.msra.mxu0 %v466
        %502 = vmatprep.subr.mxu0 0.0
        %503 = vmatpush1.msra.mxu0 %v465
        %504 = vmatprep.subr.mxu0 0.0
        %505 = vmatpush2.msra.mxu0 0.0
        %506 = vmatprep.subr.mxu0 0.0
        %507 = vmatpush2.msra.mxu0 0.0
        %508 = vmatprep.subr.mxu0 0.0
        %509 = vmatpush2.msra.mxu0 0.0
        %510 = vmatprep.subr.mxu0 0.0
        %511 = vmatpush2.msra.mxu0 0.0
        %512 = vmatprep.subr.mxu0 0.0
        %513 = vmatpush2.msra.mxu0 0.0
        %514 = vmatprep.subr.mxu0 0.0
        %515 = vmatpush2.msra.mxu0 0.0
        %516 = vmatprep.subr.mxu0 0.0
        %517 = vmatpush2.msra.mxu0 0.0
        %518 = vmatprep.subr.mxu0 0.0
        %519 = vmatpush2.msra.mxu0 0.0
        %520 = vmatprep.subr.mxu0 0.0
        %521 = vmatpush2.msra.mxu0 0.0
        %522 = vmatprep.subr.mxu0 0.0
        %523 = vmatpush2.msra.mxu0 0.0
        %524 = vmatprep.subr.mxu0 0.0
        %525 = vmatpush2.msra.mxu0 0.0
        %526 = vmatprep.subr.mxu0 0.0
        %527 = vmatpush2.msra.mxu0 0.0
        %528 = vmatprep.subr.mxu0 0.0
        %529 = vmatpush2.msra.mxu0 0.0
        %530 = vmatprep.subr.mxu0 0.0
        %531 = vmatpush2.msra.mxu0 0.0
        %532 = vmatprep.subr.mxu0 0.0
        %533 = vmatpush2.msra.mxu0 0.0
        %534 = vmatprep.subr.mxu0 0.0
        %535 = vmatpush2.msra.mxu0 0.0
        %536 = vmatprep.mubr.f32.mxu0 0.0
        %537 = vmatmul.mubr.f32.gmra.mxu0 %v470
        %v538 = vpop.f32.mrf.mxu0
        %v539 = vadd.f32 0.0, %v538
        %v540 = vpop.f32.mrf.mxu0
        %541 = vdwg.mxu0
        %543 = vrot.lane.b32.xlu0 %v539, 120
        %v544 = vpop.permute.xlu0 %543
        %v546 = vrot.slane %v544, 7
        %v547 = vsel %vm449, %v546, 0.0
        %v548 = vadd.f32 %v539, %v547
        %v549 = vrot.slane %v539, 7
        %550 = vrot.lane.b32.xlu0 %v549, 120
        %v551 = vpop.permute.xlu0 %550
        %s553 = scalar_lea.vmem %s251, 16 [#allocation2]
        %554 = vst.msk [vmem:[%s553] sm:$0xff] %vm456, %v548
        %555 = vst.msk [vmem:[%s553 + $0x8] sm:$0x1] %vm458, %v551
        %s556 = sand.u32 %s161, 1
        %s557 = sand.u32 %s161, 1
        %s558 = smul.addr %s557, 32
        %s559 = scalar_lea.vmem [#allocation2], %s558
        // Predicated region
        $region45: #{mb_convtasnet_forward.5} parent=43 // pred_check
          %p560 = pneg %p171
        $region46: #{mb_convtasnet_forward.5} parent=43 // pred_check_branch
          %562 = sbr.rel (%p560) target = $region48
        $region47: #{mb_convtasnet_forward.5} parent=43 // pred_region
          %s563 = smul.addr %s17, 2
          %s564 = smul.addr %s563, 8
          %s565 = scalar_lea.vmem %s6, %s564
          // Predicated region
          $region49: #{mb_convtasnet_forward.5} parent=47 // pred_check
            _
          $region50: #{mb_convtasnet_forward.5} parent=47 // pred_check_branch
            %567 = sbr.rel (0) target = $region52
          $region51: #{mb_convtasnet_forward.5} parent=47 // pred_region
            // Predicated region
            $region53: #{mb_convtasnet_forward.5} parent=51 // pred_check
              _
            $region54: #{mb_convtasnet_forward.5} parent=51 // pred_check_branch
              %569 = sbr.rel (0) target = $region56
            $region55: #{mb_convtasnet_forward.5} parent=51 // pred_region
              // Predicated region
              $region68: #{mb_convtasnet_forward.5} parent=55 // pred_check
                _
              $region69: #{mb_convtasnet_forward.5} parent=55 // pred_check_branch
                %591 = sbr.rel (0) target = $region71
              $region70: #{mb_convtasnet_forward.5} parent=55 // pred_region
                loop: start=0, step=1, limit=1
                $region72: #{mb_convtasnet_forward.5} parent=70 // loop_pre_header
                  _
                $region73: #{mb_convtasnet_forward.5} parent=70 // loop_header
                  %s593 = sphi 0, %s597
                  %p594 = scmp.ge.s32.totalorder %s593, 1
                  %s598 = sphi %s559, %s559
                  %s599 = sphi %s565, %s565
                $region74: #{mb_convtasnet_forward.5} parent=70 // loop_header_branch
                  %596 = sbr.rel (%p594) target = $region78
                $region75: #{mb_convtasnet_forward.5} parent=70 // loop_body
                  %v600 = vld [vmem:[%s598] sm:$0xff]
                  %601 = vst [vmem:[%s599] sm:$0xff] %v600
                  %v602 = vld [vmem:[%s598 + $0x8] sm:$0xff]
                  %603 = vst [vmem:[%s599 + $0x8] sm:$0xff] %v602
                  %v604 = vld [vmem:[%s598 + $0x10] sm:$0xff]
                  %605 = vst [vmem:[%s599 + $0x20] sm:$0xff] %v604
                  %v606 = vld [vmem:[%s598 + $0x18] sm:$0xff]
                  %607 = vst [vmem:[%s599 + $0x28] sm:$0xff] %v606
                $region76: #{mb_convtasnet_forward.5} parent=70 // loop_footer
                  %s597 = sadd.s32 1, %s593
                $region77: #{mb_convtasnet_forward.5} parent=70 // loop_footer_branch
                  %592 = sbr.rel target = $region73
                $region78: #{mb_convtasnet_forward.5} parent=70 // loop_exit
                  _
              $region71: #{mb_convtasnet_forward.5} parent=55 // pred_fallthru
                _
              // Predicated region
              $region79: #{mb_convtasnet_forward.5} parent=55 // pred_check
                _
              $region80: #{mb_convtasnet_forward.5} parent=55 // pred_check_branch
                %609 = sbr.rel target = $region82
              $region81: #{mb_convtasnet_forward.5} parent=55 // pred_region
                _
              $region82: #{mb_convtasnet_forward.5} parent=55 // pred_fallthru
                _
            $region56: #{mb_convtasnet_forward.5} parent=51 // pred_fallthru
              _
            // Predicated region
            $region57: #{mb_convtasnet_forward.5} parent=51 // pred_check
              _
            $region58: #{mb_convtasnet_forward.5} parent=51 // pred_check_branch
              %571 = sbr.rel target = $region60
            $region59: #{mb_convtasnet_forward.5} parent=51 // pred_region
              %s573 = ssub.s32 256, 1
              loop: start=0, step=1, limit=1
              $region61: #{mb_convtasnet_forward.5} parent=59 // loop_pre_header
                _
              $region62: #{mb_convtasnet_forward.5} parent=59 // loop_header
                %s575 = sphi 0, %s579
                %p576 = scmp.ge.s32.totalorder %s575, 1
                %s580 = sphi %s559, %s559
                %s581 = sphi %s565, %s565
              $region63: #{mb_convtasnet_forward.5} parent=59 // loop_header_branch
                %578 = sbr.rel (%p576) target = $region67
              $region64: #{mb_convtasnet_forward.5} parent=59 // loop_body
                %v582 = vld [vmem:[%s580] sm:%s573]
                %583 = vst [vmem:[%s581] sm:%s573] %v582
                %v584 = vld [vmem:[%s580 + $0x8] sm:%s573]
                %585 = vst [vmem:[%s581 + $0x8] sm:%s573] %v584
                %v586 = vld [vmem:[%s580 + $0x10] sm:%s573]
                %587 = vst [vmem:[%s581 + $0x20] sm:%s573] %v586
                %v588 = vld [vmem:[%s580 + $0x18] sm:%s573]
                %589 = vst [vmem:[%s581 + $0x28] sm:%s573] %v588
              $region65: #{mb_convtasnet_forward.5} parent=59 // loop_footer
                %s579 = sadd.s32 1, %s575
              $region66: #{mb_convtasnet_forward.5} parent=59 // loop_footer_branch
                %574 = sbr.rel target = $region62
              $region67: #{mb_convtasnet_forward.5} parent=59 // loop_exit
                _
            $region60: #{mb_convtasnet_forward.5} parent=51 // pred_fallthru
              _
          $region52: #{mb_convtasnet_forward.5} parent=47 // pred_fallthru
            _
          %610 = vnop
        $region48: #{mb_convtasnet_forward.5} parent=43 // pred_fallthru
          _
      $region44: #{mb_convtasnet_forward.5} parent=5 // pred_fallthru
        _
      %p611 = scmp.le.s32.totalorder 2, %s12
      // Predicated region
      $region83: #{mb_convtasnet_forward.5} parent=5 // pred_check
        %p612 = pneg %p611
      $region84: #{mb_convtasnet_forward.5} parent=5 // pred_check_branch
        %614 = sbr.rel (%p612) target = $region86
      $region85: #{mb_convtasnet_forward.5} parent=5 // pred_region
        %s615 = ssub.s32 %s12, 2
        // Predicated region
        $region87: #{mb_convtasnet_forward.5} parent=85 // pred_check
          %p616 = pneg %p177
        $region88: #{mb_convtasnet_forward.5} parent=85 // pred_check_branch
          %618 = sbr.rel (%p616) target = $region90
        $region89: #{mb_convtasnet_forward.5} parent=85 // pred_region
          %s619 = sand.u32 %s162, 1
          %s620 = sand.u32 %s162, 1
          %s621 = smul.addr %s620, 32
          %s622 = scalar_lea.vmem [#allocation2], %s621
        $region90: #{mb_convtasnet_forward.5} parent=85 // pred_fallthru
          _
      $region86: #{mb_convtasnet_forward.5} parent=5 // pred_fallthru
        _
    $region6: #{mb_convtasnet_forward.5} parent=1 // loop_footer
      %s16 = sadd.s32 1, %s12
    $region7: #{mb_convtasnet_forward.5} parent=1 // loop_footer_branch
      %11 = sbr.rel target = $region3
    $region8: #{mb_convtasnet_forward.5} parent=1 // loop_exit
      _

// kernel: mb_convtasnet_forward.3
$region0: #{mb_convtasnet_forward.3}
  #allocation0 [shape = 'u32[]', space=smem, size = 0x4, offset = 0x4, fixed_abs, tag = 'smem constant byte address 0x4 - core index']
  #allocation1 [shape = 'u32[144,128]{1,0:T(1,128)}', space=vmem, size = 0x12000, scoped, tag = 'internal scratch']
  %s0 = inlined_call_operand.vmem [shape: f32[2,8,8], index: 0, kind: input, shape index: {}]
  %s1 = inlined_call_operand.vmem [shape: f32[2,8,8], index: 1, kind: input, shape index: {}]
  %s2 = inlined_call_operand.vmem [shape: f32[8,32], index: 2, kind: input, shape index: {}]
  %s3 = inlined_call_operand.vmem [shape: f32[8,32], index: 3, kind: input, shape index: {}]
  %s4 = inlined_call_operand.vmem [shape: f32[1,32], index: 4, kind: input, shape index: {}]
  %s5 = inlined_call_operand.vmem [shape: f32[1,32], index: 5, kind: input, shape index: {}]
  %s6 = inlined_call_operand.vmem [shape: f32[1,32], index: 6, kind: input, shape index: {}]
  %s7 = inlined_call_operand.vmem [shape: f32[32,16], index: 7, kind: input, shape index: {}]
  %s8 = inlined_call_operand.vmem [shape: f32[1,16], index: 8, kind: input, shape index: {}]
  %s9 = inlined_call_operand.vmem [shape: f32[2,8,32], index: 9, kind: output, shape index: {0}]
  %s10 = inlined_call_operand.vmem [shape: f32[2,8,16], index: 10, kind: output, shape index: {1}]
  %11 = xla_tuple %s9, %s10
  %s12 = sld [smem:[#allocation0]]
  $region77: #{mb_convtasnet_forward.3} parent=0
    _
  %s14 = ssub.s32 1, %s12
  %s15 = scalar_select 0, %s14, %s12
  loop: start=0, step=1, limit=4
  $region2: #{mb_convtasnet_forward.3} parent=0 // loop_pre_header
    _
  $region3: #{mb_convtasnet_forward.3} parent=0 // loop_header
    %s17 = sphi 0, %s21
    %p18 = scmp.ge.s32.totalorder %s17, 4
    %s27 = sphi 0, %s29
    %s30 = sphi 0, %s27
    %s31 = sphi 0, %s30
    %s47 = sphi 0, %s31
    %s53 = sphi 0, %s55
    %s56 = sphi 0, %s53
    %s57 = sphi 0, %s56
    %s73 = sphi 0, %s57
    %s77 = sphi 0, %s77
    %s79 = sphi 0, %s77
    %s80 = sphi 0, %s79
    %s94 = sphi 0, %s80
    %s98 = sphi 0, %s98
    %s100 = sphi 0, %s98
    %s101 = sphi 0, %s100
    %s115 = sphi 0, %s101
    %s119 = sphi 0, %s119
    %s121 = sphi 0, %s119
    %s122 = sphi 0, %s121
    %s136 = sphi 0, %s122
    %s140 = sphi 0, %s140
    %s142 = sphi 0, %s140
    %s143 = sphi 0, %s142
    %s157 = sphi 0, %s143
    %s161 = sphi 0, %s161
    %s163 = sphi 0, %s161
    %s164 = sphi 0, %s163
    %s178 = sphi 0, %s164
    %s182 = sphi 0, %s182
    %s184 = sphi 0, %s182
    %s185 = sphi 0, %s184
    %s199 = sphi 0, %s185
    %s203 = sphi 0, %s203
    %s205 = sphi 0, %s203
    %s206 = sphi 0, %s205
    %s220 = sphi 0, %s206
    %s226 = sphi 0, %s228
    %s229 = sphi 0, %s226
    %s230 = sphi 0, %s229
    %s246 = sphi 0, %s230
    %s252 = sphi 0, %s254
    %s255 = sphi 0, %s252
    %s256 = sphi 0, %s255
    %s272 = sphi 0, %s256
  $region4: #{mb_convtasnet_forward.3} parent=0 // loop_header_branch
    %20 = sbr.rel (%p18) target = $region8
  $region5: #{mb_convtasnet_forward.3} parent=0 // loop_body
    %s22 = ssub.s32 %s17, 1
    %s23 = ssub.s32 %s17, 2
    %s24 = sadd.s32 %s17, 1
    %s25 = ssub.s32 %s17, %s24
    %p26 = scmp.eq.s32.totalorder %s25, 0
    %s28 = sadd.s32 %s27, 1
    %s29 = scalar_select %p26, %s27, %s28
    %p32 = pneg %p26
    %p33 = scmp.eq.s32.totalorder %s17, 1
    %p34 = por %p32, %p33
    %p35 = scmp.ne.s32.totalorder %s27, %s30
    %p36 = scmp.eq.s32.totalorder %s17, 0
    %p37 = por %p35, %p36
    %p38 = scmp.ne.s32.totalorder %s27, %s30
    %p39 = scmp.eq.s32.totalorder %s22, 1
    %p40 = por %p38, %p39
    %p41 = scmp.ne.s32.totalorder %s30, %s31
    %p42 = scmp.eq.s32.totalorder %s22, 0
    %p43 = por %p41, %p42
    %p44 = scmp.ne.s32.totalorder %s30, %s31
    %p45 = scmp.eq.s32.totalorder %s23, 1
    %p46 = por %p44, %p45
    %p48 = scmp.ne.s32.totalorder %s31, %s47
    %p49 = scmp.eq.s32.totalorder %s23, 0
    %p50 = por %p48, %p49
    %s51 = ssub.s32 %s17, %s24
    %p52 = scmp.eq.s32.totalorder %s51, 0
    %s54 = sadd.s32 %s53, 1
    %s55 = scalar_select %p52, %s53, %s54
    %p58 = pneg %p52
    %p59 = scmp.eq.s32.totalorder %s17, 1
    %p60 = por %p58, %p59
    %p61 = scmp.ne.s32.totalorder %s53, %s56
    %p62 = scmp.eq.s32.totalorder %s17, 0
    %p63 = por %p61, %p62
    %p64 = scmp.ne.s32.totalorder %s53, %s56
    %p65 = scmp.eq.s32.totalorder %s22, 1
    %p66 = por %p64, %p65
    %p67 = scmp.ne.s32.totalorder %s56, %s57
    %p68 = scmp.eq.s32.totalorder %s22, 0
    %p69 = por %p67, %p68
    %p70 = scmp.ne.s32.totalorder %s56, %s57
    %p71 = scmp.eq.s32.totalorder %s23, 1
    %p72 = por %p70, %p71
    %p74 = scmp.ne.s32.totalorder %s57, %s73
    %p75 = scmp.eq.s32.totalorder %s23, 0
    %p76 = por %p74, %p75
    %s78 = sadd.s32 %s77, 1
    %p81 = scmp.eq.s32.totalorder %s17, 1
    %p82 = scmp.ne.s32.totalorder %s77, %s79
    %p83 = scmp.eq.s32.totalorder %s17, 0
    %p84 = por %p82, %p83
    %p85 = scmp.ne.s32.totalorder %s77, %s79
    %p86 = scmp.eq.s32.totalorder %s22, 1
    %p87 = por %p85, %p86
    %p88 = scmp.ne.s32.totalorder %s79, %s80
    %p89 = scmp.eq.s32.totalorder %s22, 0
    %p90 = por %p88, %p89
    %p91 = scmp.ne.s32.totalorder %s79, %s80
    %p92 = scmp.eq.s32.totalorder %s23, 1
    %p93 = por %p91, %p92
    %p95 = scmp.ne.s32.totalorder %s80, %s94
    %p96 = scmp.eq.s32.totalorder %s23, 0
    %p97 = por %p95, %p96
    %s99 = sadd.s32 %s98, 1
    %p102 = scmp.eq.s32.totalorder %s17, 1
    %p103 = scmp.ne.s32.totalorder %s98, %s100
    %p104 = scmp.eq.s32.totalorder %s17, 0
    %p105 = por %p103, %p104
    %p106 = scmp.ne.s32.totalorder %s98, %s100
    %p107 = scmp.eq.s32.totalorder %s22, 1
    %p108 = por %p106, %p107
    %p109 = scmp.ne.s32.totalorder %s100, %s101
    %p110 = scmp.eq.s32.totalorder %s22, 0
    %p111 = por %p109, %p110
    %p112 = scmp.ne.s32.totalorder %s100, %s101
    %p113 = scmp.eq.s32.totalorder %s23, 1
    %p114 = por %p112, %p113
    %p116 = scmp.ne.s32.totalorder %s101, %s115
    %p117 = scmp.eq.s32.totalorder %s23, 0
    %p118 = por %p116, %p117
    %s120 = sadd.s32 %s119, 1
    %p123 = scmp.eq.s32.totalorder %s17, 1
    %p124 = scmp.ne.s32.totalorder %s119, %s121
    %p125 = scmp.eq.s32.totalorder %s17, 0
    %p126 = por %p124, %p125
    %p127 = scmp.ne.s32.totalorder %s119, %s121
    %p128 = scmp.eq.s32.totalorder %s22, 1
    %p129 = por %p127, %p128
    %p130 = scmp.ne.s32.totalorder %s121, %s122
    %p131 = scmp.eq.s32.totalorder %s22, 0
    %p132 = por %p130, %p131
    %p133 = scmp.ne.s32.totalorder %s121, %s122
    %p134 = scmp.eq.s32.totalorder %s23, 1
    %p135 = por %p133, %p134
    %p137 = scmp.ne.s32.totalorder %s122, %s136
    %p138 = scmp.eq.s32.totalorder %s23, 0
    %p139 = por %p137, %p138
    %s141 = sadd.s32 %s140, 1
    %p144 = scmp.eq.s32.totalorder %s17, 1
    %p145 = scmp.ne.s32.totalorder %s140, %s142
    %p146 = scmp.eq.s32.totalorder %s17, 0
    %p147 = por %p145, %p146
    %p148 = scmp.ne.s32.totalorder %s140, %s142
    %p149 = scmp.eq.s32.totalorder %s22, 1
    %p150 = por %p148, %p149
    %p151 = scmp.ne.s32.totalorder %s142, %s143
    %p152 = scmp.eq.s32.totalorder %s22, 0
    %p153 = por %p151, %p152
    %p154 = scmp.ne.s32.totalorder %s142, %s143
    %p155 = scmp.eq.s32.totalorder %s23, 1
    %p156 = por %p154, %p155
    %p158 = scmp.ne.s32.totalorder %s143, %s157
    %p159 = scmp.eq.s32.totalorder %s23, 0
    %p160 = por %p158, %p159
    %s162 = sadd.s32 %s161, 1
    %p165 = scmp.eq.s32.totalorder %s17, 1
    %p166 = scmp.ne.s32.totalorder %s161, %s163
    %p167 = scmp.eq.s32.totalorder %s17, 0
    %p168 = por %p166, %p167
    %p169 = scmp.ne.s32.totalorder %s161, %s163
    %p170 = scmp.eq.s32.totalorder %s22, 1
    %p171 = por %p169, %p170
    %p172 = scmp.ne.s32.totalorder %s163, %s164
    %p173 = scmp.eq.s32.totalorder %s22, 0
    %p174 = por %p172, %p173
    %p175 = scmp.ne.s32.totalorder %s163, %s164
    %p176 = scmp.eq.s32.totalorder %s23, 1
    %p177 = por %p175, %p176
    %p179 = scmp.ne.s32.totalorder %s164, %s178
    %p180 = scmp.eq.s32.totalorder %s23, 0
    %p181 = por %p179, %p180
    %s183 = sadd.s32 %s182, 1
    %p186 = scmp.eq.s32.totalorder %s17, 1
    %p187 = scmp.ne.s32.totalorder %s182, %s184
    %p188 = scmp.eq.s32.totalorder %s17, 0
    %p189 = por %p187, %p188
    %p190 = scmp.ne.s32.totalorder %s182, %s184
    %p191 = scmp.eq.s32.totalorder %s22, 1
    %p192 = por %p190, %p191
    %p193 = scmp.ne.s32.totalorder %s184, %s185
    %p194 = scmp.eq.s32.totalorder %s22, 0
    %p195 = por %p193, %p194
    %p196 = scmp.ne.s32.totalorder %s184, %s185
    %p197 = scmp.eq.s32.totalorder %s23, 1
    %p198 = por %p196, %p197
    %p200 = scmp.ne.s32.totalorder %s185, %s199
    %p201 = scmp.eq.s32.totalorder %s23, 0
    %p202 = por %p200, %p201
    %s204 = sadd.s32 %s203, 1
    %p207 = scmp.eq.s32.totalorder %s17, 1
    %p208 = scmp.ne.s32.totalorder %s203, %s205
    %p209 = scmp.eq.s32.totalorder %s17, 0
    %p210 = por %p208, %p209
    %p211 = scmp.ne.s32.totalorder %s203, %s205
    %p212 = scmp.eq.s32.totalorder %s22, 1
    %p213 = por %p211, %p212
    %p214 = scmp.ne.s32.totalorder %s205, %s206
    %p215 = scmp.eq.s32.totalorder %s22, 0
    %p216 = por %p214, %p215
    %p217 = scmp.ne.s32.totalorder %s205, %s206
    %p218 = scmp.eq.s32.totalorder %s23, 1
    %p219 = por %p217, %p218
    %p221 = scmp.ne.s32.totalorder %s206, %s220
    %p222 = scmp.eq.s32.totalorder %s23, 0
    %p223 = por %p221, %p222
    %s224 = ssub.s32 %s17, %s24
    %p225 = scmp.eq.s32.totalorder %s224, 0
    %s227 = sadd.s32 %s226, 1
    %s228 = scalar_select %p225, %s226, %s227
    %p231 = pneg %p225
    %p232 = scmp.eq.s32.totalorder %s17, 1
    %p233 = por %p231, %p232
    %p234 = scmp.ne.s32.totalorder %s226, %s229
    %p235 = scmp.eq.s32.totalorder %s17, 0
    %p236 = por %p234, %p235
    %p237 = scmp.ne.s32.totalorder %s226, %s229
    %p238 = scmp.eq.s32.totalorder %s22, 1
    %p239 = por %p237, %p238
    %p240 = scmp.ne.s32.totalorder %s229, %s230
    %p241 = scmp.eq.s32.totalorder %s22, 0
    %p242 = por %p240, %p241
    %p243 = scmp.ne.s32.totalorder %s229, %s230
    %p244 = scmp.eq.s32.totalorder %s23, 1
    %p245 = por %p243, %p244
    %p247 = scmp.ne.s32.totalorder %s230, %s246
    %p248 = scmp.eq.s32.totalorder %s23, 0
    %p249 = por %p247, %p248
    %s250 = ssub.s32 %s17, %s24
    %p251 = scmp.eq.s32.totalorder %s250, 0
    %s253 = sadd.s32 %s252, 1
    %s254 = scalar_select %p251, %s252, %s253
    %p257 = pneg %p251
    %p258 = scmp.eq.s32.totalorder %s17, 1
    %p259 = por %p257, %p258
    %p260 = scmp.ne.s32.totalorder %s252, %s255
    %p261 = scmp.eq.s32.totalorder %s17, 0
    %p262 = por %p260, %p261
    %p263 = scmp.ne.s32.totalorder %s252, %s255
    %p264 = scmp.eq.s32.totalorder %s22, 1
    %p265 = por %p263, %p264
    %p266 = scmp.ne.s32.totalorder %s255, %s256
    %p267 = scmp.eq.s32.totalorder %s22, 0
    %p268 = por %p266, %p267
    %p269 = scmp.ne.s32.totalorder %s255, %s256
    %p270 = scmp.eq.s32.totalorder %s23, 1
    %p271 = por %p269, %p270
    %p273 = scmp.ne.s32.totalorder %s256, %s272
    %p274 = scmp.eq.s32.totalorder %s23, 0
    %p275 = por %p273, %p274
    %p276 = scmp.le.s32.totalorder 1, %s17
    %p277 = scmp.lt.s32.totalorder %s17, 3
    %p278 = pnand %p276, %p277
    %p279 = pneg %p278
    // Predicated region
    $region9: #{mb_convtasnet_forward.3} parent=5 // pred_check
      _
    $region10: #{mb_convtasnet_forward.3} parent=5 // pred_check_branch
      %281 = sbr.rel (%p278) target = $region12
    $region11: #{mb_convtasnet_forward.3} parent=5 // pred_region
      %s282 = ssub.s32 %s17, 1
      // Predicated region
      $region13: #{mb_convtasnet_forward.3} parent=11 // pred_check
        %p283 = pneg %p90
      $region14: #{mb_convtasnet_forward.3} parent=11 // pred_check_branch
        %285 = sbr.rel (%p283) target = $region16
      $region15: #{mb_convtasnet_forward.3} parent=11 // pred_region
        _
      $region16: #{mb_convtasnet_forward.3} parent=11 // pred_fallthru
        _
      // Predicated region
      $region17: #{mb_convtasnet_forward.3} parent=11 // pred_check
        %p286 = pneg %p111
      $region18: #{mb_convtasnet_forward.3} parent=11 // pred_check_branch
        %288 = sbr.rel (%p286) target = $region20
      $region19: #{mb_convtasnet_forward.3} parent=11 // pred_region
        _
      $region20: #{mb_convtasnet_forward.3} parent=11 // pred_fallthru
        _
      // Predicated region
      $region21: #{mb_convtasnet_forward.3} parent=11 // pred_check
        %p289 = pneg %p132
      $region22: #{mb_convtasnet_forward.3} parent=11 // pred_check_branch
        %291 = sbr.rel (%p289) target = $region24
      $region23: #{mb_convtasnet_forward.3} parent=11 // pred_region
        _
      $region24: #{mb_convtasnet_forward.3} parent=11 // pred_fallthru
        _
      // Predicated region
      $region25: #{mb_convtasnet_forward.3} parent=11 // pred_check
        %p292 = pneg %p153
      $region26: #{mb_convtasnet_forward.3} parent=11 // pred_check_branch
        %294 = sbr.rel (%p292) target = $region28
      $region27: #{mb_convtasnet_forward.3} parent=11 // pred_region
        _
      $region28: #{mb_convtasnet_forward.3} parent=11 // pred_fallthru
        _
      // Predicated region
      $region29: #{mb_convtasnet_forward.3} parent=11 // pred_check
        %p295 = pneg %p174
      $region30: #{mb_convtasnet_forward.3} parent=11 // pred_check_branch
        %297 = sbr.rel (%p295) target = $region32
      $region31: #{mb_convtasnet_forward.3} parent=11 // pred_region
        _
      $region32: #{mb_convtasnet_forward.3} parent=11 // pred_fallthru
        _
      // Predicated region
      $region33: #{mb_convtasnet_forward.3} parent=11 // pred_check
        %p298 = pneg %p195
      $region34: #{mb_convtasnet_forward.3} parent=11 // pred_check_branch
        %300 = sbr.rel (%p298) target = $region36
      $region35: #{mb_convtasnet_forward.3} parent=11 // pred_region
        _
      $region36: #{mb_convtasnet_forward.3} parent=11 // pred_fallthru
        _
      // Predicated region
      $region37: #{mb_convtasnet_forward.3} parent=11 // pred_check
        %p301 = pneg %p216
      $region38: #{mb_convtasnet_forward.3} parent=11 // pred_check_branch
        %303 = sbr.rel (%p301) target = $region40
      $region39: #{mb_convtasnet_forward.3} parent=11 // pred_region
        _
      $region40: #{mb_convtasnet_forward.3} parent=11 // pred_fallthru
        _
    $region12: #{mb_convtasnet_forward.3} parent=5 // pred_fallthru
      _
    %p304 = scmp.lt.s32.totalorder %s17, 2
    // Predicated region
    $region41: #{mb_convtasnet_forward.3} parent=5 // pred_check
      %p305 = pneg %p304
    $region42: #{mb_convtasnet_forward.3} parent=5 // pred_check_branch
      %307 = sbr.rel (%p305) target = $region44
    $region43: #{mb_convtasnet_forward.3} parent=5 // pred_region
      // Predicated region
      $region45: #{mb_convtasnet_forward.3} parent=43 // pred_check
        %p308 = pneg %p37
      $region46: #{mb_convtasnet_forward.3} parent=43 // pred_check_branch
        %310 = sbr.rel (%p308) target = $region48
      $region47: #{mb_convtasnet_forward.3} parent=43 // pred_region
        %p311 = scmp.lt.s32.totalorder %s17, 1
        %s312 = scalar_select %p311, %s17, 1
        %s313 = smul.addr %s312, 8
        %s314 = scalar_lea.vmem %s0, %s313
      $region48: #{mb_convtasnet_forward.3} parent=43 // pred_fallthru
        _
      // Predicated region
      $region49: #{mb_convtasnet_forward.3} parent=43 // pred_check
        %p315 = pneg %p63
      $region50: #{mb_convtasnet_forward.3} parent=43 // pred_check_branch
        %317 = sbr.rel (%p315) target = $region52
      $region51: #{mb_convtasnet_forward.3} parent=43 // pred_region
        %p318 = scmp.lt.s32.totalorder %s17, 1
        %s319 = scalar_select %p318, %s17, 1
        %s320 = smul.addr %s319, 8
        %s321 = scalar_lea.vmem %s1, %s320
      $region52: #{mb_convtasnet_forward.3} parent=43 // pred_fallthru
        _
    $region44: #{mb_convtasnet_forward.3} parent=5 // pred_fallthru
      _
    %p322 = scmp.le.s32.totalorder 1, %s17
    %p323 = scmp.lt.s32.totalorder %s17, 3
    %p324 = pnand %p322, %p323
    %p325 = pneg %p324
    // Predicated region
    $region53: #{mb_convtasnet_forward.3} parent=5 // pred_check
      _
    $region54: #{mb_convtasnet_forward.3} parent=5 // pred_check_branch
      %327 = sbr.rel (%p324) target = $region56
    $region55: #{mb_convtasnet_forward.3} parent=5 // pred_region
      %s328 = ssub.s32 %s17, 1
      %p329 = scmp.lt.s32.totalorder %s22, 1
      %s330 = scalar_select %p329, %s22, 1
      %s331 = smul.addr %s330, 8
      %s332 = scalar_lea.vmem %s0, %s331
      %p333 = pneg %p43
      %p334 = pneg %p40
      %p335 = scmp.lt.s32.totalorder %s22, 1
      %s336 = scalar_select %p335, %s22, 1
      %s337 = smul.addr %s336, 8
      %s338 = scalar_lea.vmem %s1, %s337
      %p339 = pneg %p69
      %p340 = pneg %p66
      %p341 = pneg %p90
      %p342 = pneg %p87
      %p343 = pneg %p111
      %p344 = pneg %p108
      %p345 = pneg %p132
      %p346 = pneg %p129
      %p347 = pneg %p153
      %p348 = pneg %p150
      %p349 = pneg %p174
      %p350 = pneg %p171
      %p351 = pneg %p195
      %p352 = pneg %p192
      %p353 = pneg %p216
      %p354 = pneg %p213
      %p355 = pneg %p242
      %p356 = pneg %p239
      %p357 = scmp.lt.s32.totalorder %s22, 1
      %s358 = scalar_select %p357, %s22, 1
      %s359 = smul.addr %s358, 8
      %s360 = scalar_lea.vmem %s9, %s359
      %p361 = pneg %p268
      %p362 = pneg %p265
      %p363 = scmp.lt.s32.totalorder %s22, 1
      %s364 = scalar_select %p363, %s22, 1
      %s365 = smul.addr %s364, 8
      %s366 = scalar_lea.vmem %s10, %s365
      %p367 = scmp.lt.s32.totalorder %s22, 1
      %s368 = scalar_select %p367, %s22, 1
      %s369 = smul.addr %s368, 8
      %s370 = scalar_lea.vmem %s0, %s369
      %p371 = scmp.lt.s32.totalorder %s22, 1
      %s372 = scalar_select %p371, %s22, 1
      %s373 = smul.addr %s372, 8
      %s374 = scalar_lea.vmem %s1, %s373
      %p375 = scmp.lt.s32.totalorder %s22, 1
      %s376 = scalar_select %p375, %s22, 1
      %s377 = smul.addr %s376, 8
      %s378 = scalar_lea.vmem %s9, %s377
      %p379 = scmp.lt.s32.totalorder %s22, 1
      %s380 = scalar_select %p379, %s22, 1
      %s381 = smul.addr %s380, 8
      %s382 = scalar_lea.vmem %s10, %s381
      %v383 = vld [vmem:[%s370] sm:$0xff]
      %v384 = vld [vmem:[%s374] sm:$0xff]
      %v385 = vld [vmem:[%s2] sm:$0xff]
      %v386 = vld [vmem:[%s3] sm:$0xff]
      %vm387 = vcmask 64512
      %v389 = vsel %vm387, %v384, 0
      %391 = vmatprep.subr.mxu0 0.0
      %392 = vmatpush1.msra.mxu0 0.0
      %393 = vmatprep.subr.mxu0 0.0
      %394 = vmatpush1.msra.mxu0 0.0
      %395 = vmatprep.subr.mxu0 0.0
      %396 = vmatpush1.msra.mxu0 0.0
      %397 = vmatprep.subr.mxu0 0.0
      %398 = vmatpush1.msra.mxu0 0.0
      %399 = vmatprep.subr.mxu0 0.0
      %400 = vmatpush1.msra.mxu0 0.0
      %401 = vmatprep.subr.mxu0 0.0
      %402 = vmatpush1.msra.mxu0 0.0
      %403 = vmatprep.subr.mxu0 0.0
      %404 = vmatpush1.msra.mxu0 0.0
      %405 = vmatprep.subr.mxu0 0.0
      %406 = vmatpush1.msra.mxu0 0.0
      %407 = vmatprep.subr.mxu0 0.0
      %408 = vmatpush1.msra.mxu0 0.0
      %409 = vmatprep.subr.mxu0 0.0
      %410 = vmatpush1.msra.mxu0 0.0
      %411 = vmatprep.subr.mxu0 0.0
      %412 = vmatpush1.msra.mxu0 0.0
      %413 = vmatprep.subr.mxu0 0.0
      %414 = vmatpush1.msra.mxu0 0.0
      %415 = vmatprep.subr.mxu0 0.0
      %416 = vmatpush1.msra.mxu0 0.0
      %417 = vmatprep.subr.mxu0 0.0
      %418 = vmatpush1.msra.mxu0 0.0
      %419 = vmatprep.subr.mxu0 0.0
      %420 = vmatpush1.msra.mxu0 0.0
      %421 = vmatprep.subr.mxu0 0.0
      %422 = vmatpush1.msra.mxu0 %v386
      %423 = vmatprep.subr.mxu0 0.0
      %424 = vmatpush2.msra.mxu0 0.0
      %425 = vmatprep.subr.mxu0 0.0
      %426 = vmatpush2.msra.mxu0 0.0
      %427 = vmatprep.subr.mxu0 0.0
      %428 = vmatpush2.msra.mxu0 0.0
      %429 = vmatprep.subr.mxu0 0.0
      %430 = vmatpush2.msra.mxu0 0.0
      %431 = vmatprep.subr.mxu0 0.0
      %432 = vmatpush2.msra.mxu0 0.0
      %433 = vmatprep.subr.mxu0 0.0
      %434 = vmatpush2.msra.mxu0 0.0
      %435 = vmatprep.subr.mxu0 0.0
      %436 = vmatpush2.msra.mxu0 0.0
      %437 = vmatprep.subr.mxu0 0.0
      %438 = vmatpush2.msra.mxu0 0.0
      %439 = vmatprep.subr.mxu0 0.0
      %440 = vmatpush2.msra.mxu0 0.0
      %441 = vmatprep.subr.mxu0 0.0
      %442 = vmatpush2.msra.mxu0 0.0
      %443 = vmatprep.subr.mxu0 0.0
      %444 = vmatpush2.msra.mxu0 0.0
      %445 = vmatprep.subr.mxu0 0.0
      %446 = vmatpush2.msra.mxu0 0.0
      %447 = vmatprep.subr.mxu0 0.0
      %448 = vmatpush2.msra.mxu0 0.0
      %449 = vmatprep.subr.mxu0 0.0
      %450 = vmatpush2.msra.mxu0 0.0
      %451 = vmatprep.subr.mxu0 0.0
      %452 = vmatpush2.msra.mxu0 0.0
      %453 = vmatprep.subr.mxu0 0.0
      %454 = vmatpush2.msra.mxu0 0.0
      %455 = vmatprep.mubr.f32.mxu0 0.0
      %456 = vmatmul.mubr.f32.gmra.mxu0 %v389
      %v457 = vpop.f32.mrf.mxu0
      %v458 = vadd.f32 0.0, %v457
      %v459 = vpop.f32.mrf.mxu0
      %460 = vdwg.mxu0
      %v462 = vsel %vm387, %v383, 0
      %464 = vmatprep.subr.mxu0 0.0
      %465 = vmatpush1.msra.mxu0 0.0
      %466 = vmatprep.subr.mxu0 0.0
      %467 = vmatpush1.msra.mxu0 0.0
      %468 = vmatprep.subr.mxu0 0.0
      %469 = vmatpush1.msra.mxu0 0.0
      %470 = vmatprep.subr.mxu0 0.0
      %471 = vmatpush1.msra.mxu0 0.0
      %472 = vmatprep.subr.mxu0 0.0
      %473 = vmatpush1.msra.mxu0 0.0
      %474 = vmatprep.subr.mxu0 0.0
      %475 = vmatpush1.msra.mxu0 0.0
      %476 = vmatprep.subr.mxu0 0.0
      %477 = vmatpush1.msra.mxu0 0.0
      %478 = vmatprep.subr.mxu0 0.0
      %479 = vmatpush1.msra.mxu0 0.0
      %480 = vmatprep.subr.mxu0 0.0
      %481 = vmatpush1.msra.mxu0 0.0
      %482 = vmatprep.subr.mxu0 0.0
      %483 = vmatpush1.msra.mxu0 0.0
      %484 = vmatprep.subr.mxu0 0.0
      %485 = vmatpush1.msra.mxu0 0.0
      %486 = vmatprep.subr.mxu0 0.0
      %487 = vmatpush1.msra.mxu0 0.0
      %488 = vmatprep.subr.mxu0 0.0
      %489 = vmatpush1.msra.mxu0 0.0
      %490 = vmatprep.subr.mxu0 0.0
      %491 = vmatpush1.msra.mxu0 0.0
      %492 = vmatprep.subr.mxu0 0.0
      %493 = vmatpush1.msra.mxu0 0.0
      %494 = vmatprep.subr.mxu0 0.0
      %495 = vmatpush1.msra.mxu0 %v385
      %496 = vmatprep.subr.mxu0 0.0
      %497 = vmatpush2.msra.mxu0 0.0
      %498 = vmatprep.subr.mxu0 0.0
      %499 = vmatpush2.msra.mxu0 0.0
      %500 = vmatprep.subr.mxu0 0.0
      %501 = vmatpush2.msra.mxu0 0.0
      %502 = vmatprep.subr.mxu0 0.0
      %503 = vmatpush2.msra.mxu0 0.0
      %504 = vmatprep.subr.mxu0 0.0
      %505 = vmatpush2.msra.mxu0 0.0
      %506 = vmatprep.subr.mxu0 0.0
      %507 = vmatpush2.msra.mxu0 0.0
      %508 = vmatprep.subr.mxu0 0.0
      %509 = vmatpush2.msra.mxu0 0.0
      %510 = vmatprep.subr.mxu0 0.0
      %511 = vmatpush2.msra.mxu0 0.0
      %512 = vmatprep.subr.mxu0 0.0
      %513 = vmatpush2.msra.mxu0 0.0
      %514 = vmatprep.subr.mxu0 0.0
      %515 = vmatpush2.msra.mxu0 0.0
      %516 = vmatprep.subr.mxu0 0.0
      %517 = vmatpush2.msra.mxu0 0.0
      %518 = vmatprep.subr.mxu0 0.0
      %519 = vmatpush2.msra.mxu0 0.0
      %520 = vmatprep.subr.mxu0 0.0
      %521 = vmatpush2.msra.mxu0 0.0
      %522 = vmatprep.subr.mxu0 0.0
      %523 = vmatpush2.msra.mxu0 0.0
      %524 = vmatprep.subr.mxu0 0.0
      %525 = vmatpush2.msra.mxu0 0.0
      %526 = vmatprep.subr.mxu0 0.0
      %527 = vmatpush2.msra.mxu0 0.0
      %528 = vmatprep.mubr.f32.mxu0 0.0
      %529 = vmatmul.mubr.f32.gmra.mxu0 %v462
      %v530 = vpop.f32.mrf.mxu0
      %v531 = vadd.f32 %v458, %v530
      %v532 = vpop.f32.mrf.mxu0
      %533 = vdwg.mxu0
      %v534 = vld [vmem:[%s4] sm:$0x1]
      %v536 = vlaneseq
      %v537 = vshrl.u32 %v536, 7
      %v538 = vsub.s32 0, %v537
      %v539 = vrot.slane %v534, %v538
      %v541 = vadd.f32 %v531, %v539
      %v542 = vmax.f32 %v541, 0.0
      %vm543 = vcmask 261120
      %v544 = vsel %vm543, %v542, 0.0
      %545 = vadd.xlane.f32.xlu0 %v544
      %v546 = vpop.xlane.xlu0 %545
      %v547 = vrcp.pop 32.0
      %v548 = vmul.f32 %v546, %v547
      %v549 = vsub.f32 %v542, %v548
      %v550 = vmul.f32 %v549, %v549
      %v551 = vsel %vm543, %v550, 0.0
      %552 = vadd.xlane.f32.xlu0 %v551
      %v553 = vpop.xlane.xlu0 %552
      %v554 = vmul.f32 %v553, %v547
      %v555 = vadd.f32 %v554, 1e-05
      %v556 = vrsqrt.pop %v555
      %v557 = vmul.f32 %v549, %v556
      %v558 = vld [vmem:[%s5] sm:$0x1]
      %v560 = vlaneseq
      %v561 = vshrl.u32 %v560, 7
      %v562 = vsub.s32 0, %v561
      %v563 = vrot.slane %v558, %v562
      %v565 = vmul.f32 %v557, %v563
      %v566 = vld [vmem:[%s6] sm:$0x1]
      %v568 = vlaneseq
      %v569 = vshrl.u32 %v568, 7
      %v570 = vsub.s32 0, %v569
      %v571 = vrot.slane %v566, %v570
      %v573 = vadd.f32 %v565, %v571
      %v574 = vld [vmem:[%s7] sm:$0xff]
      %v575 = vld [vmem:[%s7 + $0x8] sm:$0xff]
      %v576 = vld [vmem:[%s7 + $0x10] sm:$0xff]
      %v577 = vld [vmem:[%s7 + $0x18] sm:$0xff]
      %v578 = vld [vmem:[%s8] sm:$0x1]
      %v580 = vlaneseq
      %v581 = vshrl.u32 %v580, 7
      %v582 = vsub.s32 0, %v581
      %v583 = vrot.slane %v578, %v582
      %v586 = vsel %vm543, %v573, 0
      %588 = vmatprep.subr.mxu0 0.0
      %589 = vmatpush1.msra.mxu0 0.0
      %590 = vmatprep.subr.mxu0 0.0
      %591 = vmatpush1.msra.mxu0 0.0
      %592 = vmatprep.subr.mxu0 0.0
      %593 = vmatpush1.msra.mxu0 0.0
      %594 = vmatprep.subr.mxu0 0.0
      %595 = vmatpush1.msra.mxu0 0.0
      %596 = vmatprep.subr.mxu0 0.0
      %597 = vmatpush1.msra.mxu0 0.0
      %598 = vmatprep.subr.mxu0 0.0
      %599 = vmatpush1.msra.mxu0 0.0
      %600 = vmatprep.subr.mxu0 0.0
      %601 = vmatpush1.msra.mxu0 0.0
      %602 = vmatprep.subr.mxu0 0.0
      %603 = vmatpush1.msra.mxu0 0.0
      %604 = vmatprep.subr.mxu0 0.0
      %605 = vmatpush1.msra.mxu0 0.0
      %606 = vmatprep.subr.mxu0 0.0
      %607 = vmatpush1.msra.mxu0 0.0
      %608 = vmatprep.subr.mxu0 0.0
      %609 = vmatpush1.msra.mxu0 0.0
      %610 = vmatprep.subr.mxu0 0.0
      %611 = vmatpush1.msra.mxu0 0.0
      %612 = vmatprep.subr.mxu0 0.0
      %613 = vmatpush1.msra.mxu0 %v577
      %614 = vmatprep.subr.mxu0 0.0
      %615 = vmatpush1.msra.mxu0 %v576
      %616 = vmatprep.subr.mxu0 0.0
      %617 = vmatpush1.msra.mxu0 %v575
      %618 = vmatprep.subr.mxu0 0.0
      %619 = vmatpush1.msra.mxu0 %v574
      %620 = vmatprep.subr.mxu0 0.0
      %621 = vmatpush2.msra.mxu0 0.0
      %622 = vmatprep.subr.mxu0 0.0
      %623 = vmatpush2.msra.mxu0 0.0
      %624 = vmatprep.subr.mxu0 0.0
      %625 = vmatpush2.msra.mxu0 0.0
      %626 = vmatprep.subr.mxu0 0.0
      %627 = vmatpush2.msra.mxu0 0.0
      %628 = vmatprep.subr.mxu0 0.0
      %629 = vmatpush2.msra.mxu0 0.0
      %630 = vmatprep.subr.mxu0 0.0
      %631 = vmatpush2.msra.mxu0 0.0
      %632 = vmatprep.subr.mxu0 0.0
      %633 = vmatpush2.msra.mxu0 0.0
      %634 = vmatprep.subr.mxu0 0.0
      %635 = vmatpush2.msra.mxu0 0.0
      %636 = vmatprep.subr.mxu0 0.0
      %637 = vmatpush2.msra.mxu0 0.0
      %638 = vmatprep.subr.mxu0 0.0
      %639 = vmatpush2.msra.mxu0 0.0
      %640 = vmatprep.subr.mxu0 0.0
      %641 = vmatpush2.msra.mxu0 0.0
      %642 = vmatprep.subr.mxu0 0.0
      %643 = vmatpush2.msra.mxu0 0.0
      %644 = vmatprep.subr.mxu0 0.0
      %645 = vmatpush2.msra.mxu0 0.0
      %646 = vmatprep.subr.mxu0 0.0
      %647 = vmatpush2.msra.mxu0 0.0
      %648 = vmatprep.subr.mxu0 0.0
      %649 = vmatpush2.msra.mxu0 0.0
      %650 = vmatprep.subr.mxu0 0.0
      %651 = vmatpush2.msra.mxu0 0.0
      %652 = vmatprep.mubr.f32.mxu0 0.0
      %653 = vmatmul.mubr.f32.gmra.mxu0 %v586
      %v654 = vpop.f32.mrf.mxu0
      %v655 = vadd.f32 %v583, %v654
      %v656 = vpop.f32.mrf.mxu0
      %657 = vdwg.mxu0
      %vm658 = vcmask 130048
      %659 = vst.msk [vmem:[%s382] sm:$0xff] %vm658, %v655
      %660 = vst.msk [vmem:[%s378] sm:$0xff] %vm543, %v542
      %p661 = scmp.lt.s32.totalorder %s22, 1
      %s662 = scalar_select %p661, %s22, 1
      %s663 = smul.addr %s662, 8
      %s664 = scalar_lea.vmem %s9, %s663
      %p665 = scmp.lt.s32.totalorder %s22, 1
      %s666 = scalar_select %p665, %s22, 1
      %s667 = smul.addr %s666, 8
      %s668 = scalar_lea.vmem %s10, %s667
      // Predicated region
      $region57: #{mb_convtasnet_forward.3} parent=55 // pred_check
        %p669 = pneg %p239
      $region58: #{mb_convtasnet_forward.3} parent=55 // pred_check_branch
        %671 = sbr.rel (%p669) target = $region60
      $region59: #{mb_convtasnet_forward.3} parent=55 // pred_region
        _
      $region60: #{mb_convtasnet_forward.3} parent=55 // pred_fallthru
        _
      // Predicated region
      $region61: #{mb_convtasnet_forward.3} parent=55 // pred_check
        %p672 = pneg %p265
      $region62: #{mb_convtasnet_forward.3} parent=55 // pred_check_branch
        %674 = sbr.rel (%p672) target = $region64
      $region63: #{mb_convtasnet_forward.3} parent=55 // pred_region
        _
      $region64: #{mb_convtasnet_forward.3} parent=55 // pred_fallthru
        _
    $region56: #{mb_convtasnet_forward.3} parent=5 // pred_fallthru
      _
    %p675 = scmp.le.s32.totalorder 2, %s17
    // Predicated region
    $region65: #{mb_convtasnet_forward.3} parent=5 // pred_check
      %p676 = pneg %p675
    $region66: #{mb_convtasnet_forward.3} parent=5 // pred_check_branch
      %678 = sbr.rel (%p676) target = $region68
    $region67: #{mb_convtasnet_forward.3} parent=5 // pred_region
      %s679 = ssub.s32 %s17, 2
      // Predicated region
      $region69: #{mb_convtasnet_forward.3} parent=67 // pred_check
        %p680 = pneg %p245
      $region70: #{mb_convtasnet_forward.3} parent=67 // pred_check_branch
        %682 = sbr.rel (%p680) target = $region72
      $region71: #{mb_convtasnet_forward.3} parent=67 // pred_region
        %p683 = scmp.lt.s32.totalorder %s23, 1
        %s684 = scalar_select %p683, %s23, 1
        %s685 = smul.addr %s684, 8
        %s686 = scalar_lea.vmem %s9, %s685
      $region72: #{mb_convtasnet_forward.3} parent=67 // pred_fallthru
        _
      // Predicated region
      $region73: #{mb_convtasnet_forward.3} parent=67 // pred_check
        %p687 = pneg %p271
      $region74: #{mb_convtasnet_forward.3} parent=67 // pred_check_branch
        %689 = sbr.rel (%p687) target = $region76
      $region75: #{mb_convtasnet_forward.3} parent=67 // pred_region
        %p690 = scmp.lt.s32.totalorder %s23, 1
        %s691 = scalar_select %p690, %s23, 1
        %s692 = smul.addr %s691, 8
        %s693 = scalar_lea.vmem %s10, %s692
      $region76: #{mb_convtasnet_forward.3} parent=67 // pred_fallthru
        _
    $region68: #{mb_convtasnet_forward.3} parent=5 // pred_fallthru
      _
  $region6: #{mb_convtasnet_forward.3} parent=0 // loop_footer
    %s21 = sadd.s32 1, %s17
  $region7: #{mb_convtasnet_forward.3} parent=0 // loop_footer_branch
    %16 = sbr.rel target = $region3
  $region8: #{mb_convtasnet_forward.3} parent=0 // loop_exit
    _

// kernel: mb_convtasnet_forward.4
$region0: #{mb_convtasnet_forward.4}
  #allocation0 [shape = 'u32[]', space=smem, size = 0x4, offset = 0x4, fixed_abs, tag = 'smem constant byte address 0x4 - core index']
  #allocation1 [shape = 'u32[144,128]{1,0:T(1,128)}', space=vmem, size = 0x12000, scoped, tag = 'internal scratch']
  %s0 = inlined_call_operand.vmem [shape: f32[2,8,16], index: 0, kind: input, shape index: {}]
  %s1 = inlined_call_operand.vmem [shape: f32[2,8,16], index: 1, kind: input, shape index: {}]
  %s2 = inlined_call_operand.vmem [shape: f32[3,16,32], index: 2, kind: input, shape index: {}]
  %s3 = inlined_call_operand.vmem [shape: f32[3,1,32], index: 3, kind: input, shape index: {}]
  %s4 = inlined_call_operand.vmem [shape: f32[3,1,32], index: 4, kind: input, shape index: {}]
  %s5 = inlined_call_operand.vmem [shape: f32[3,1,32], index: 5, kind: input, shape index: {}]
  %s6 = inlined_call_operand.vmem [shape: f32[3,1,32], index: 6, kind: input, shape index: {}]
  %s7 = inlined_call_operand.vmem [shape: f32[3,3,32], index: 7, kind: input, shape index: {}]
  %s8 = inlined_call_operand.vmem [shape: f32[3,1,32], index: 8, kind: input, shape index: {}]
  %s9 = inlined_call_operand.vmem [shape: f32[3,1,32], index: 9, kind: input, shape index: {}]
  %s10 = inlined_call_operand.vmem [shape: f32[3,1,32], index: 10, kind: input, shape index: {}]
  %s11 = inlined_call_operand.vmem [shape: f32[3,1,32], index: 11, kind: input, shape index: {}]
  %s12 = inlined_call_operand.vmem [shape: f32[3,32,16], index: 12, kind: input, shape index: {}]
  %s13 = inlined_call_operand.vmem [shape: f32[3,1,16], index: 13, kind: input, shape index: {}]
  %s14 = inlined_call_operand.vmem [shape: f32[3,32,16], index: 14, kind: input, shape index: {}]
  %s15 = inlined_call_operand.vmem [shape: f32[3,1,16], index: 15, kind: input, shape index: {}]
  %s16 = inlined_call_operand.hbm [shape: f32[2,8,16], index: 16, kind: output, shape index: {0}]
  %s17 = inlined_call_operand.vmem [shape: f32[2,8,16], index: 17, kind: output, shape index: {1}]
  %18 = xla_tuple %s16, %s17
  %s19 = sld [smem:[#allocation0]]
  $region105: #{mb_convtasnet_forward.4} parent=0
    _
  %s21 = ssub.s32 1, %s19
  %s22 = scalar_select 0, %s21, %s19
  $region1: #{mb_convtasnet_forward.4} parent=0
    #allocation2 [shape = 'u8[8192]{0}', space=vmem, size = 0x2000, scoped, tag = 'output window, operand 0']
    #allocation3 [shape = 's32[2]{0}', space=sflag, size = 0x8, scoped, tag = 'scoped memory for mb_convtasnet_forward.4']
    %23 = vsyncpa [#allocation3], 0
    %s24 = scalar_lea.sflag [#allocation3], 1
    %25 = vsyncpa %s24, 0
    loop: start=0, step=1, limit=4
    $region2: #{mb_convtasnet_forward.4} parent=1 // loop_pre_header
      _
    $region3: #{mb_convtasnet_forward.4} parent=1 // loop_header
      %s27 = sphi 0, %s31
      %p28 = scmp.ge.s32.totalorder %s27, 4
      %s37 = sphi 0, %s39
      %s40 = sphi 0, %s37
      %s41 = sphi 0, %s40
      %s57 = sphi 0, %s41
      %s63 = sphi 0, %s65
      %s66 = sphi 0, %s63
      %s67 = sphi 0, %s66
      %s83 = sphi 0, %s67
      %s87 = sphi 0, %s87
      %s89 = sphi 0, %s87
      %s90 = sphi 0, %s89
      %s104 = sphi 0, %s90
      %s108 = sphi 0, %s108
      %s110 = sphi 0, %s108
      %s111 = sphi 0, %s110
      %s125 = sphi 0, %s111
      %s129 = sphi 0, %s129
      %s131 = sphi 0, %s129
      %s132 = sphi 0, %s131
      %s146 = sphi 0, %s132
      %s150 = sphi 0, %s150
      %s152 = sphi 0, %s150
      %s153 = sphi 0, %s152
      %s167 = sphi 0, %s153
      %s171 = sphi 0, %s171
      %s173 = sphi 0, %s171
      %s174 = sphi 0, %s173
      %s188 = sphi 0, %s174
      %s192 = sphi 0, %s192
      %s194 = sphi 0, %s192
      %s195 = sphi 0, %s194
      %s209 = sphi 0, %s195
      %s213 = sphi 0, %s213
      %s215 = sphi 0, %s213
      %s216 = sphi 0, %s215
      %s230 = sphi 0, %s216
      %s234 = sphi 0, %s234
      %s236 = sphi 0, %s234
      %s237 = sphi 0, %s236
      %s251 = sphi 0, %s237
      %s255 = sphi 0, %s255
      %s257 = sphi 0, %s255
      %s258 = sphi 0, %s257
      %s272 = sphi 0, %s258
      %s276 = sphi 0, %s276
      %s278 = sphi 0, %s276
      %s279 = sphi 0, %s278
      %s293 = sphi 0, %s279
      %s297 = sphi 0, %s297
      %s299 = sphi 0, %s297
      %s300 = sphi 0, %s299
      %s314 = sphi 0, %s300
      %s318 = sphi 0, %s318
      %s320 = sphi 0, %s318
      %s321 = sphi 0, %s320
      %s335 = sphi 0, %s321
      %s339 = sphi 0, %s339
      %s341 = sphi 0, %s339
      %s342 = sphi 0, %s341
      %s356 = sphi 0, %s342
      %s360 = sphi 0, %s360
      %s362 = sphi 0, %s360
      %s363 = sphi 0, %s362
      %s377 = sphi 0, %s363
      %s383 = sphi 0, %s385
      %s386 = sphi 0, %s383
      %s387 = sphi 0, %s386
      %s403 = sphi 0, %s387
      %s409 = sphi 0, %s411
      %s412 = sphi 0, %s409
      %s413 = sphi 0, %s412
      %s429 = sphi 0, %s413
    $region4: #{mb_convtasnet_forward.4} parent=1 // loop_header_branch
      %30 = sbr.rel (%p28) target = $region8
    $region5: #{mb_convtasnet_forward.4} parent=1 // loop_body
      %s32 = ssub.s32 %s27, 1
      %s33 = ssub.s32 %s27, 2
      %s34 = sadd.s32 %s27, 1
      %s35 = ssub.s32 %s27, %s34
      %p36 = scmp.eq.s32.totalorder %s35, 0
      %s38 = sadd.s32 %s37, 1
      %s39 = scalar_select %p36, %s37, %s38
      %p42 = pneg %p36
      %p43 = scmp.eq.s32.totalorder %s27, 1
      %p44 = por %p42, %p43
      %p45 = scmp.ne.s32.totalorder %s37, %s40
      %p46 = scmp.eq.s32.totalorder %s27, 0
      %p47 = por %p45, %p46
      %p48 = scmp.ne.s32.totalorder %s37, %s40
      %p49 = scmp.eq.s32.totalorder %s32, 1
      %p50 = por %p48, %p49
      %p51 = scmp.ne.s32.totalorder %s40, %s41
      %p52 = scmp.eq.s32.totalorder %s32, 0
      %p53 = por %p51, %p52
      %p54 = scmp.ne.s32.totalorder %s40, %s41
      %p55 = scmp.eq.s32.totalorder %s33, 1
      %p56 = por %p54, %p55
      %p58 = scmp.ne.s32.totalorder %s41, %s57
      %p59 = scmp.eq.s32.totalorder %s33, 0
      %p60 = por %p58, %p59
      %s61 = ssub.s32 %s27, %s34
      %p62 = scmp.eq.s32.totalorder %s61, 0
      %s64 = sadd.s32 %s63, 1
      %s65 = scalar_select %p62, %s63, %s64
      %p68 = pneg %p62
      %p69 = scmp.eq.s32.totalorder %s27, 1
      %p70 = por %p68, %p69
      %p71 = scmp.ne.s32.totalorder %s63, %s66
      %p72 = scmp.eq.s32.totalorder %s27, 0
      %p73 = por %p71, %p72
      %p74 = scmp.ne.s32.totalorder %s63, %s66
      %p75 = scmp.eq.s32.totalorder %s32, 1
      %p76 = por %p74, %p75
      %p77 = scmp.ne.s32.totalorder %s66, %s67
      %p78 = scmp.eq.s32.totalorder %s32, 0
      %p79 = por %p77, %p78
      %p80 = scmp.ne.s32.totalorder %s66, %s67
      %p81 = scmp.eq.s32.totalorder %s33, 1
      %p82 = por %p80, %p81
      %p84 = scmp.ne.s32.totalorder %s67, %s83
      %p85 = scmp.eq.s32.totalorder %s33, 0
      %p86 = por %p84, %p85
      %s88 = sadd.s32 %s87, 1
      %p91 = scmp.eq.s32.totalorder %s27, 1
      %p92 = scmp.ne.s32.totalorder %s87, %s89
      %p93 = scmp.eq.s32.totalorder %s27, 0
      %p94 = por %p92, %p93
      %p95 = scmp.ne.s32.totalorder %s87, %s89
      %p96 = scmp.eq.s32.totalorder %s32, 1
      %p97 = por %p95, %p96
      %p98 = scmp.ne.s32.totalorder %s89, %s90
      %p99 = scmp.eq.s32.totalorder %s32, 0
      %p100 = por %p98, %p99
      %p101 = scmp.ne.s32.totalorder %s89, %s90
      %p102 = scmp.eq.s32.totalorder %s33, 1
      %p103 = por %p101, %p102
      %p105 = scmp.ne.s32.totalorder %s90, %s104
      %p106 = scmp.eq.s32.totalorder %s33, 0
      %p107 = por %p105, %p106
      %s109 = sadd.s32 %s108, 1
      %p112 = scmp.eq.s32.totalorder %s27, 1
      %p113 = scmp.ne.s32.totalorder %s108, %s110
      %p114 = scmp.eq.s32.totalorder %s27, 0
      %p115 = por %p113, %p114
      %p116 = scmp.ne.s32.totalorder %s108, %s110
      %p117 = scmp.eq.s32.totalorder %s32, 1
      %p118 = por %p116, %p117
      %p119 = scmp.ne.s32.totalorder %s110, %s111
      %p120 = scmp.eq.s32.totalorder %s32, 0
      %p121 = por %p119, %p120
      %p122 = scmp.ne.s32.totalorder %s110, %s111
      %p123 = scmp.eq.s32.totalorder %s33, 1
      %p124 = por %p122, %p123
      %p126 = scmp.ne.s32.totalorder %s111, %s125
      %p127 = scmp.eq.s32.totalorder %s33, 0
      %p128 = por %p126, %p127
      %s130 = sadd.s32 %s129, 1
      %p133 = scmp.eq.s32.totalorder %s27, 1
      %p134 = scmp.ne.s32.totalorder %s129, %s131
      %p135 = scmp.eq.s32.totalorder %s27, 0
      %p136 = por %p134, %p135
      %p137 = scmp.ne.s32.totalorder %s129, %s131
      %p138 = scmp.eq.s32.totalorder %s32, 1
      %p139 = por %p137, %p138
      %p140 = scmp.ne.s32.totalorder %s131, %s132
      %p141 = scmp.eq.s32.totalorder %s32, 0
      %p142 = por %p140, %p141
      %p143 = scmp.ne.s32.totalorder %s131, %s132
      %p144 = scmp.eq.s32.totalorder %s33, 1
      %p145 = por %p143, %p144
      %p147 = scmp.ne.s32.totalorder %s132, %s146
      %p148 = scmp.eq.s32.totalorder %s33, 0
      %p149 = por %p147, %p148
      %s151 = sadd.s32 %s150, 1
      %p154 = scmp.eq.s32.totalorder %s27, 1
      %p155 = scmp.ne.s32.totalorder %s150, %s152
      %p156 = scmp.eq.s32.totalorder %s27, 0
      %p157 = por %p155, %p156
      %p158 = scmp.ne.s32.totalorder %s150, %s152
      %p159 = scmp.eq.s32.totalorder %s32, 1
      %p160 = por %p158, %p159
      %p161 = scmp.ne.s32.totalorder %s152, %s153
      %p162 = scmp.eq.s32.totalorder %s32, 0
      %p163 = por %p161, %p162
      %p164 = scmp.ne.s32.totalorder %s152, %s153
      %p165 = scmp.eq.s32.totalorder %s33, 1
      %p166 = por %p164, %p165
      %p168 = scmp.ne.s32.totalorder %s153, %s167
      %p169 = scmp.eq.s32.totalorder %s33, 0
      %p170 = por %p168, %p169
      %s172 = sadd.s32 %s171, 1
      %p175 = scmp.eq.s32.totalorder %s27, 1
      %p176 = scmp.ne.s32.totalorder %s171, %s173
      %p177 = scmp.eq.s32.totalorder %s27, 0
      %p178 = por %p176, %p177
      %p179 = scmp.ne.s32.totalorder %s171, %s173
      %p180 = scmp.eq.s32.totalorder %s32, 1
      %p181 = por %p179, %p180
      %p182 = scmp.ne.s32.totalorder %s173, %s174
      %p183 = scmp.eq.s32.totalorder %s32, 0
      %p184 = por %p182, %p183
      %p185 = scmp.ne.s32.totalorder %s173, %s174
      %p186 = scmp.eq.s32.totalorder %s33, 1
      %p187 = por %p185, %p186
      %p189 = scmp.ne.s32.totalorder %s174, %s188
      %p190 = scmp.eq.s32.totalorder %s33, 0
      %p191 = por %p189, %p190
      %s193 = sadd.s32 %s192, 1
      %p196 = scmp.eq.s32.totalorder %s27, 1
      %p197 = scmp.ne.s32.totalorder %s192, %s194
      %p198 = scmp.eq.s32.totalorder %s27, 0
      %p199 = por %p197, %p198
      %p200 = scmp.ne.s32.totalorder %s192, %s194
      %p201 = scmp.eq.s32.totalorder %s32, 1
      %p202 = por %p200, %p201
      %p203 = scmp.ne.s32.totalorder %s194, %s195
      %p204 = scmp.eq.s32.totalorder %s32, 0
      %p205 = por %p203, %p204
      %p206 = scmp.ne.s32.totalorder %s194, %s195
      %p207 = scmp.eq.s32.totalorder %s33, 1
      %p208 = por %p206, %p207
      %p210 = scmp.ne.s32.totalorder %s195, %s209
      %p211 = scmp.eq.s32.totalorder %s33, 0
      %p212 = por %p210, %p211
      %s214 = sadd.s32 %s213, 1
      %p217 = scmp.eq.s32.totalorder %s27, 1
      %p218 = scmp.ne.s32.totalorder %s213, %s215
      %p219 = scmp.eq.s32.totalorder %s27, 0
      %p220 = por %p218, %p219
      %p221 = scmp.ne.s32.totalorder %s213, %s215
      %p222 = scmp.eq.s32.totalorder %s32, 1
      %p223 = por %p221, %p222
      %p224 = scmp.ne.s32.totalorder %s215, %s216
      %p225 = scmp.eq.s32.totalorder %s32, 0
      %p226 = por %p224, %p225
      %p227 = scmp.ne.s32.totalorder %s215, %s216
      %p228 = scmp.eq.s32.totalorder %s33, 1
      %p229 = por %p227, %p228
      %p231 = scmp.ne.s32.totalorder %s216, %s230
      %p232 = scmp.eq.s32.totalorder %s33, 0
      %p233 = por %p231, %p232
      %s235 = sadd.s32 %s234, 1
      %p238 = scmp.eq.s32.totalorder %s27, 1
      %p239 = scmp.ne.s32.totalorder %s234, %s236
      %p240 = scmp.eq.s32.totalorder %s27, 0
      %p241 = por %p239, %p240
      %p242 = scmp.ne.s32.totalorder %s234, %s236
      %p243 = scmp.eq.s32.totalorder %s32, 1
      %p244 = por %p242, %p243
      %p245 = scmp.ne.s32.totalorder %s236, %s237
      %p246 = scmp.eq.s32.totalorder %s32, 0
      %p247 = por %p245, %p246
      %p248 = scmp.ne.s32.totalorder %s236, %s237
      %p249 = scmp.eq.s32.totalorder %s33, 1
      %p250 = por %p248, %p249
      %p252 = scmp.ne.s32.totalorder %s237, %s251
      %p253 = scmp.eq.s32.totalorder %s33, 0
      %p254 = por %p252, %p253
      %s256 = sadd.s32 %s255, 1
      %p259 = scmp.eq.s32.totalorder %s27, 1
      %p260 = scmp.ne.s32.totalorder %s255, %s257
      %p261 = scmp.eq.s32.totalorder %s27, 0
      %p262 = por %p260, %p261
      %p263 = scmp.ne.s32.totalorder %s255, %s257
      %p264 = scmp.eq.s32.totalorder %s32, 1
      %p265 = por %p263, %p264
      %p266 = scmp.ne.s32.totalorder %s257, %s258
      %p267 = scmp.eq.s32.totalorder %s32, 0
      %p268 = por %p266, %p267
      %p269 = scmp.ne.s32.totalorder %s257, %s258
      %p270 = scmp.eq.s32.totalorder %s33, 1
      %p271 = por %p269, %p270
      %p273 = scmp.ne.s32.totalorder %s258, %s272
      %p274 = scmp.eq.s32.totalorder %s33, 0
      %p275 = por %p273, %p274
      %s277 = sadd.s32 %s276, 1
      %p280 = scmp.eq.s32.totalorder %s27, 1
      %p281 = scmp.ne.s32.totalorder %s276, %s278
      %p282 = scmp.eq.s32.totalorder %s27, 0
      %p283 = por %p281, %p282
      %p284 = scmp.ne.s32.totalorder %s276, %s278
      %p285 = scmp.eq.s32.totalorder %s32, 1
      %p286 = por %p284, %p285
      %p287 = scmp.ne.s32.totalorder %s278, %s279
      %p288 = scmp.eq.s32.totalorder %s32, 0
      %p289 = por %p287, %p288
      %p290 = scmp.ne.s32.totalorder %s278, %s279
      %p291 = scmp.eq.s32.totalorder %s33, 1
      %p292 = por %p290, %p291
      %p294 = scmp.ne.s32.totalorder %s279, %s293
      %p295 = scmp.eq.s32.totalorder %s33, 0
      %p296 = por %p294, %p295
      %s298 = sadd.s32 %s297, 1
      %p301 = scmp.eq.s32.totalorder %s27, 1
      %p302 = scmp.ne.s32.totalorder %s297, %s299
      %p303 = scmp.eq.s32.totalorder %s27, 0
      %p304 = por %p302, %p303
      %p305 = scmp.ne.s32.totalorder %s297, %s299
      %p306 = scmp.eq.s32.totalorder %s32, 1
      %p307 = por %p305, %p306
      %p308 = scmp.ne.s32.totalorder %s299, %s300
      %p309 = scmp.eq.s32.totalorder %s32, 0
      %p310 = por %p308, %p309
      %p311 = scmp.ne.s32.totalorder %s299, %s300
      %p312 = scmp.eq.s32.totalorder %s33, 1
      %p313 = por %p311, %p312
      %p315 = scmp.ne.s32.totalorder %s300, %s314
      %p316 = scmp.eq.s32.totalorder %s33, 0
      %p317 = por %p315, %p316
      %s319 = sadd.s32 %s318, 1
      %p322 = scmp.eq.s32.totalorder %s27, 1
      %p323 = scmp.ne.s32.totalorder %s318, %s320
      %p324 = scmp.eq.s32.totalorder %s27, 0
      %p325 = por %p323, %p324
      %p326 = scmp.ne.s32.totalorder %s318, %s320
      %p327 = scmp.eq.s32.totalorder %s32, 1
      %p328 = por %p326, %p327
      %p329 = scmp.ne.s32.totalorder %s320, %s321
      %p330 = scmp.eq.s32.totalorder %s32, 0
      %p331 = por %p329, %p330
      %p332 = scmp.ne.s32.totalorder %s320, %s321
      %p333 = scmp.eq.s32.totalorder %s33, 1
      %p334 = por %p332, %p333
      %p336 = scmp.ne.s32.totalorder %s321, %s335
      %p337 = scmp.eq.s32.totalorder %s33, 0
      %p338 = por %p336, %p337
      %s340 = sadd.s32 %s339, 1
      %p343 = scmp.eq.s32.totalorder %s27, 1
      %p344 = scmp.ne.s32.totalorder %s339, %s341
      %p345 = scmp.eq.s32.totalorder %s27, 0
      %p346 = por %p344, %p345
      %p347 = scmp.ne.s32.totalorder %s339, %s341
      %p348 = scmp.eq.s32.totalorder %s32, 1
      %p349 = por %p347, %p348
      %p350 = scmp.ne.s32.totalorder %s341, %s342
      %p351 = scmp.eq.s32.totalorder %s32, 0
      %p352 = por %p350, %p351
      %p353 = scmp.ne.s32.totalorder %s341, %s342
      %p354 = scmp.eq.s32.totalorder %s33, 1
      %p355 = por %p353, %p354
      %p357 = scmp.ne.s32.totalorder %s342, %s356
      %p358 = scmp.eq.s32.totalorder %s33, 0
      %p359 = por %p357, %p358
      %s361 = sadd.s32 %s360, 1
      %p364 = scmp.eq.s32.totalorder %s27, 1
      %p365 = scmp.ne.s32.totalorder %s360, %s362
      %p366 = scmp.eq.s32.totalorder %s27, 0
      %p367 = por %p365, %p366
      %p368 = scmp.ne.s32.totalorder %s360, %s362
      %p369 = scmp.eq.s32.totalorder %s32, 1
      %p370 = por %p368, %p369
      %p371 = scmp.ne.s32.totalorder %s362, %s363
      %p372 = scmp.eq.s32.totalorder %s32, 0
      %p373 = por %p371, %p372
      %p374 = scmp.ne.s32.totalorder %s362, %s363
      %p375 = scmp.eq.s32.totalorder %s33, 1
      %p376 = por %p374, %p375
      %p378 = scmp.ne.s32.totalorder %s363, %s377
      %p379 = scmp.eq.s32.totalorder %s33, 0
      %p380 = por %p378, %p379
      %s381 = ssub.s32 %s27, %s34
      %p382 = scmp.eq.s32.totalorder %s381, 0
      %s384 = sadd.s32 %s383, 1
      %s385 = scalar_select %p382, %s383, %s384
      %p388 = pneg %p382
      %p389 = scmp.eq.s32.totalorder %s27, 1
      %p390 = por %p388, %p389
      %p391 = scmp.ne.s32.totalorder %s383, %s386
      %p392 = scmp.eq.s32.totalorder %s27, 0
      %p393 = por %p391, %p392
      %p394 = scmp.ne.s32.totalorder %s383, %s386
      %p395 = scmp.eq.s32.totalorder %s32, 1
      %p396 = por %p394, %p395
      %p397 = scmp.ne.s32.totalorder %s386, %s387
      %p398 = scmp.eq.s32.totalorder %s32, 0
      %p399 = por %p397, %p398
      %p400 = scmp.ne.s32.totalorder %s386, %s387
      %p401 = scmp.eq.s32.totalorder %s33, 1
      %p402 = por %p400, %p401
      %p404 = scmp.ne.s32.totalorder %s387, %s403
      %p405 = scmp.eq.s32.totalorder %s33, 0
      %p406 = por %p404, %p405
      %s407 = ssub.s32 %s27, %s34
      %p408 = scmp.eq.s32.totalorder %s407, 0
      %s410 = sadd.s32 %s409, 1
      %s411 = scalar_select %p408, %s409, %s410
      %p414 = pneg %p408
      %p415 = scmp.eq.s32.totalorder %s27, 1
      %p416 = por %p414, %p415
      %p417 = scmp.ne.s32.totalorder %s409, %s412
      %p418 = scmp.eq.s32.totalorder %s27, 0
      %p419 = por %p417, %p418
      %p420 = scmp.ne.s32.totalorder %s409, %s412
      %p421 = scmp.eq.s32.totalorder %s32, 1
      %p422 = por %p420, %p421
      %p423 = scmp.ne.s32.totalorder %s412, %s413
      %p424 = scmp.eq.s32.totalorder %s32, 0
      %p425 = por %p423, %p424
      %p426 = scmp.ne.s32.totalorder %s412, %s413
      %p427 = scmp.eq.s32.totalorder %s33, 1
      %p428 = por %p426, %p427
      %p430 = scmp.ne.s32.totalorder %s413, %s429
      %p431 = scmp.eq.s32.totalorder %s33, 0
      %p432 = por %p430, %p431
      %p433 = scmp.le.s32.totalorder 1, %s27
      %p434 = scmp.lt.s32.totalorder %s27, 3
      %p435 = pnand %p433, %p434
      %p436 = pneg %p435
      // Predicated region
      $region9: #{mb_convtasnet_forward.4} parent=5 // pred_check
        _
      $region10: #{mb_convtasnet_forward.4} parent=5 // pred_check_branch
        %438 = sbr.rel (%p435) target = $region12
      $region11: #{mb_convtasnet_forward.4} parent=5 // pred_region
        %s439 = ssub.s32 %s27, 1
        // Predicated region
        $region13: #{mb_convtasnet_forward.4} parent=11 // pred_check
          %p440 = pneg %p100
        $region14: #{mb_convtasnet_forward.4} parent=11 // pred_check_branch
          %442 = sbr.rel (%p440) target = $region16
        $region15: #{mb_convtasnet_forward.4} parent=11 // pred_region
          _
        $region16: #{mb_convtasnet_forward.4} parent=11 // pred_fallthru
          _
        // Predicated region
        $region17: #{mb_convtasnet_forward.4} parent=11 // pred_check
          %p443 = pneg %p121
        $region18: #{mb_convtasnet_forward.4} parent=11 // pred_check_branch
          %445 = sbr.rel (%p443) target = $region20
        $region19: #{mb_convtasnet_forward.4} parent=11 // pred_region
          _
        $region20: #{mb_convtasnet_forward.4} parent=11 // pred_fallthru
          _
        // Predicated region
        $region21: #{mb_convtasnet_forward.4} parent=11 // pred_check
          %p446 = pneg %p142
        $region22: #{mb_convtasnet_forward.4} parent=11 // pred_check_branch
          %448 = sbr.rel (%p446) target = $region24
        $region23: #{mb_convtasnet_forward.4} parent=11 // pred_region
          _
        $region24: #{mb_convtasnet_forward.4} parent=11 // pred_fallthru
          _
        // Predicated region
        $region25: #{mb_convtasnet_forward.4} parent=11 // pred_check
          %p449 = pneg %p163
        $region26: #{mb_convtasnet_forward.4} parent=11 // pred_check_branch
          %451 = sbr.rel (%p449) target = $region28
        $region27: #{mb_convtasnet_forward.4} parent=11 // pred_region
          _
        $region28: #{mb_convtasnet_forward.4} parent=11 // pred_fallthru
          _
        // Predicated region
        $region29: #{mb_convtasnet_forward.4} parent=11 // pred_check
          %p452 = pneg %p184
        $region30: #{mb_convtasnet_forward.4} parent=11 // pred_check_branch
          %454 = sbr.rel (%p452) target = $region32
        $region31: #{mb_convtasnet_forward.4} parent=11 // pred_region
          _
        $region32: #{mb_convtasnet_forward.4} parent=11 // pred_fallthru
          _
        // Predicated region
        $region33: #{mb_convtasnet_forward.4} parent=11 // pred_check
          %p455 = pneg %p205
        $region34: #{mb_convtasnet_forward.4} parent=11 // pred_check_branch
          %457 = sbr.rel (%p455) target = $region36
        $region35: #{mb_convtasnet_forward.4} parent=11 // pred_region
          _
        $region36: #{mb_convtasnet_forward.4} parent=11 // pred_fallthru
          _
        // Predicated region
        $region37: #{mb_convtasnet_forward.4} parent=11 // pred_check
          %p458 = pneg %p226
        $region38: #{mb_convtasnet_forward.4} parent=11 // pred_check_branch
          %460 = sbr.rel (%p458) target = $region40
        $region39: #{mb_convtasnet_forward.4} parent=11 // pred_region
          _
        $region40: #{mb_convtasnet_forward.4} parent=11 // pred_fallthru
          _
        // Predicated region
        $region41: #{mb_convtasnet_forward.4} parent=11 // pred_check
          %p461 = pneg %p247
        $region42: #{mb_convtasnet_forward.4} parent=11 // pred_check_branch
          %463 = sbr.rel (%p461) target = $region44
        $region43: #{mb_convtasnet_forward.4} parent=11 // pred_region
          _
        $region44: #{mb_convtasnet_forward.4} parent=11 // pred_fallthru
          _
        // Predicated region
        $region45: #{mb_convtasnet_forward.4} parent=11 // pred_check
          %p464 = pneg %p268
        $region46: #{mb_convtasnet_forward.4} parent=11 // pred_check_branch
          %466 = sbr.rel (%p464) target = $region48
        $region47: #{mb_convtasnet_forward.4} parent=11 // pred_region
          _
        $region48: #{mb_convtasnet_forward.4} parent=11 // pred_fallthru
          _
        // Predicated region
        $region49: #{mb_convtasnet_forward.4} parent=11 // pred_check
          %p467 = pneg %p289
        $region50: #{mb_convtasnet_forward.4} parent=11 // pred_check_branch
          %469 = sbr.rel (%p467) target = $region52
        $region51: #{mb_convtasnet_forward.4} parent=11 // pred_region
          _
        $region52: #{mb_convtasnet_forward.4} parent=11 // pred_fallthru
          _
        // Predicated region
        $region53: #{mb_convtasnet_forward.4} parent=11 // pred_check
          %p470 = pneg %p310
        $region54: #{mb_convtasnet_forward.4} parent=11 // pred_check_branch
          %472 = sbr.rel (%p470) target = $region56
        $region55: #{mb_convtasnet_forward.4} parent=11 // pred_region
          _
        $region56: #{mb_convtasnet_forward.4} parent=11 // pred_fallthru
          _
        // Predicated region
        $region57: #{mb_convtasnet_forward.4} parent=11 // pred_check
          %p473 = pneg %p331
        $region58: #{mb_convtasnet_forward.4} parent=11 // pred_check_branch
          %475 = sbr.rel (%p473) target = $region60
        $region59: #{mb_convtasnet_forward.4} parent=11 // pred_region
          _
        $region60: #{mb_convtasnet_forward.4} parent=11 // pred_fallthru
          _
        // Predicated region
        $region61: #{mb_convtasnet_forward.4} parent=11 // pred_check
          %p476 = pneg %p352
        $region62: #{mb_convtasnet_forward.4} parent=11 // pred_check_branch
          %478 = sbr.rel (%p476) target = $region64
        $region63: #{mb_convtasnet_forward.4} parent=11 // pred_region
          _
        $region64: #{mb_convtasnet_forward.4} parent=11 // pred_fallthru
          _
        // Predicated region
        $region65: #{mb_convtasnet_forward.4} parent=11 // pred_check
          %p479 = pneg %p373
        $region66: #{mb_convtasnet_forward.4} parent=11 // pred_check_branch
          %481 = sbr.rel (%p479) target = $region68
        $region67: #{mb_convtasnet_forward.4} parent=11 // pred_region
          _
        $region68: #{mb_convtasnet_forward.4} parent=11 // pred_fallthru
          _
      $region12: #{mb_convtasnet_forward.4} parent=5 // pred_fallthru
        _
      %p482 = scmp.lt.s32.totalorder %s27, 2
      // Predicated region
      $region69: #{mb_convtasnet_forward.4} parent=5 // pred_check
        %p483 = pneg %p482
      $region70: #{mb_convtasnet_forward.4} parent=5 // pred_check_branch
        %485 = sbr.rel (%p483) target = $region72
      $region71: #{mb_convtasnet_forward.4} parent=5 // pred_region
        // Predicated region
        $region73: #{mb_convtasnet_forward.4} parent=71 // pred_check
          %p486 = pneg %p47
        $region74: #{mb_convtasnet_forward.4} parent=71 // pred_check_branch
          %488 = sbr.rel (%p486) target = $region76
        $region75: #{mb_convtasnet_forward.4} parent=71 // pred_region
          %p489 = scmp.lt.s32.totalorder %s27, 1
          %s490 = scalar_select %p489, %s27, 1
          %s491 = smul.addr %s490, 8
          %s492 = scalar_lea.vmem %s0, %s491
        $region76: #{mb_convtasnet_forward.4} parent=71 // pred_fallthru
          _
        // Predicated region
        $region77: #{mb_convtasnet_forward.4} parent=71 // pred_check
          %p493 = pneg %p73
        $region78: #{mb_convtasnet_forward.4} parent=71 // pred_check_branch
          %495 = sbr.rel (%p493) target = $region80
        $region79: #{mb_convtasnet_forward.4} parent=71 // pred_region
          %p496 = scmp.lt.s32.totalorder %s27, 1
          %s497 = scalar_select %p496, %s27, 1
          %s498 = smul.addr %s497, 8
          %s499 = scalar_lea.vmem %s1, %s498
        $region80: #{mb_convtasnet_forward.4} parent=71 // pred_fallthru
          _
      $region72: #{mb_convtasnet_forward.4} parent=5 // pred_fallthru
        _
      %p500 = scmp.le.s32.totalorder 1, %s27
      %p501 = scmp.lt.s32.totalorder %s27, 3
      %p502 = pnand %p500, %p501
      %p503 = pneg %p502
      // Predicated region
      $region81: #{mb_convtasnet_forward.4} parent=5 // pred_check
        _
      $region82: #{mb_convtasnet_forward.4} parent=5 // pred_check_branch
        %505 = sbr.rel (%p502) target = $region84
      $region83: #{mb_convtasnet_forward.4} parent=5 // pred_region
        %s506 = ssub.s32 %s27, 1
        %p507 = scmp.lt.s32.totalorder %s32, 1
        %s508 = scalar_select %p507, %s32, 1
        %s509 = smul.addr %s508, 8
        %s510 = scalar_lea.vmem %s0, %s509
        %p511 = pneg %p53
        %p512 = pneg %p50
        %p513 = scmp.lt.s32.totalorder %s32, 1
        %s514 = scalar_select %p513, %s32, 1
        %s515 = smul.addr %s514, 8
        %s516 = scalar_lea.vmem %s1, %s515
        %p517 = pneg %p79
        %p518 = pneg %p76
        %p519 = pneg %p100
        %p520 = pneg %p97
        %p521 = pneg %p121
        %p522 = pneg %p118
        %p523 = pneg %p142
        %p524 = pneg %p139
        %p525 = pneg %p163
        %p526 = pneg %p160
        %p527 = pneg %p184
        %p528 = pneg %p181
        %p529 = pneg %p205
        %p530 = pneg %p202
        %p531 = pneg %p226
        %p532 = pneg %p223
        %p533 = pneg %p247
        %p534 = pneg %p244
        %p535 = pneg %p268
        %p536 = pneg %p265
        %p537 = pneg %p289
        %p538 = pneg %p286
        %p539 = pneg %p310
        %p540 = pneg %p307
        %p541 = pneg %p331
        %p542 = pneg %p328
        %p543 = pneg %p352
        %p544 = pneg %p349
        %p545 = pneg %p373
        %p546 = pneg %p370
        %p547 = pneg %p399
        %p548 = pneg %p396
        %s549 = sand.u32 %s386, 1
        %s550 = scalar_lea.sflag [#allocation3], %s549
        %s551 = sand.u32 %s386, 1
        %s552 = smul.addr %s551, 8
        %s553 = scalar_lea.vmem [#allocation2], %s552
        %p554 = pneg %p425
        %p555 = pneg %p422
        %p556 = scmp.lt.s32.totalorder %s32, 1
        %s557 = scalar_select %p556, %s32, 1
        %s558 = smul.addr %s557, 8
        %s559 = scalar_lea.vmem %s17, %s558
        %p560 = scmp.lt.s32.totalorder %s32, 1
        %s561 = scalar_select %p560, %s32, 1
        %s562 = smul.addr %s561, 8
        %s563 = scalar_lea.vmem %s0, %s562
        %p564 = scmp.lt.s32.totalorder %s32, 1
        %s565 = scalar_select %p564, %s32, 1
        %s566 = smul.addr %s565, 8
        %s567 = scalar_lea.vmem %s1, %s566
        %p568 = scmp.lt.s32.totalorder %s32, 1
        %s569 = scalar_select %p568, %s32, 1
        %s570 = smul.addr %s569, 8
        %s571 = scalar_lea.vmem %s17, %s570
        %v572 = vld [vmem:[%s563] sm:$0xff]
        %v573 = vld [vmem:[%s567] sm:$0xff]
        %v574 = vlaneseq
        %v575 = vshrl.u32 %v574, 7
        %v576 = vld [vmem:[%s2] sm:$0xff]
        %v577 = vld [vmem:[%s2 + $0x8] sm:$0xff]
        %v578 = vld [vmem:[%s3] sm:$0x1]
        %v580 = vlaneseq
        %v581 = vshrl.u32 %v580, 7
        %v582 = vsub.s32 0, %v581
        %v583 = vrot.slane %v578, %v582
        %vm585 = vcmask 130048
        %v587 = vsel %vm585, %v572, 0
        %589 = vmatprep.subr.mxu0 0.0
        %590 = vmatpush1.msra.mxu0 0.0
        %591 = vmatprep.subr.mxu0 0.0
        %592 = vmatpush1.msra.mxu0 0.0
        %593 = vmatprep.subr.mxu0 0.0
        %594 = vmatpush1.msra.mxu0 0.0
        %595 = vmatprep.subr.mxu0 0.0
        %596 = vmatpush1.msra.mxu0 0.0
        %597 = vmatprep.subr.mxu0 0.0
        %598 = vmatpush1.msra.mxu0 0.0
        %599 = vmatprep.subr.mxu0 0.0
        %600 = vmatpush1.msra.mxu0 0.0
        %601 = vmatprep.subr.mxu0 0.0
        %602 = vmatpush1.msra.mxu0 0.0
        %603 = vmatprep.subr.mxu0 0.0
        %604 = vmatpush1.msra.mxu0 0.0
        %605 = vmatprep.subr.mxu0 0.0
        %606 = vmatpush1.msra.mxu0 0.0
        %607 = vmatprep.subr.mxu0 0.0
        %608 = vmatpush1.msra.mxu0 0.0
        %609 = vmatprep.subr.mxu0 0.0
        %610 = vmatpush1.msra.mxu0 0.0
        %611 = vmatprep.subr.mxu0 0.0
        %612 = vmatpush1.msra.mxu0 0.0
        %613 = vmatprep.subr.mxu0 0.0
        %614 = vmatpush1.msra.mxu0 0.0
        %615 = vmatprep.subr.mxu0 0.0
        %616 = vmatpush1.msra.mxu0 0.0
        %617 = vmatprep.subr.mxu0 0.0
        %618 = vmatpush1.msra.mxu0 %v577
        %619 = vmatprep.subr.mxu0 0.0
        %620 = vmatpush1.msra.mxu0 %v576
        %621 = vmatprep.subr.mxu0 0.0
        %622 = vmatpush2.msra.mxu0 0.0
        %623 = vmatprep.subr.mxu0 0.0
        %624 = vmatpush2.msra.mxu0 0.0
        %625 = vmatprep.subr.mxu0 0.0
        %626 = vmatpush2.msra.mxu0 0.0
        %627 = vmatprep.subr.mxu0 0.0
        %628 = vmatpush2.msra.mxu0 0.0
        %629 = vmatprep.subr.mxu0 0.0
        %630 = vmatpush2.msra.mxu0 0.0
        %631 = vmatprep.subr.mxu0 0.0
        %632 = vmatpush2.msra.mxu0 0.0
        %633 = vmatprep.subr.mxu0 0.0
        %634 = vmatpush2.msra.mxu0 0.0
        %635 = vmatprep.subr.mxu0 0.0
        %636 = vmatpush2.msra.mxu0 0.0
        %637 = vmatprep.subr.mxu0 0.0
        %638 = vmatpush2.msra.mxu0 0.0
        %639 = vmatprep.subr.mxu0 0.0
        %640 = vmatpush2.msra.mxu0 0.0
        %641 = vmatprep.subr.mxu0 0.0
        %642 = vmatpush2.msra.mxu0 0.0
        %643 = vmatprep.subr.mxu0 0.0
        %644 = vmatpush2.msra.mxu0 0.0
        %645 = vmatprep.subr.mxu0 0.0
        %646 = vmatpush2.msra.mxu0 0.0
        %647 = vmatprep.subr.mxu0 0.0
        %648 = vmatpush2.msra.mxu0 0.0
        %649 = vmatprep.subr.mxu0 0.0
        %650 = vmatpush2.msra.mxu0 0.0
        %651 = vmatprep.subr.mxu0 0.0
        %652 = vmatpush2.msra.mxu0 0.0
        %653 = vmatprep.mubr.f32.mxu0 0.0
        %654 = vmatmul.mubr.f32.gmra.mxu0 %v587
        %v655 = vpop.f32.mrf.mxu0
        %v656 = vadd.f32 %v583, %v655
        %v657 = vpop.f32.mrf.mxu0
        %658 = vdwg.mxu0
        %vm659 = vcmp.ge.f32.partialorder %v656, 0.0
        %v660 = vld [vmem:[%s4] sm:$0x1]
        %v662 = vlaneseq
        %v663 = vshrl.u32 %v662, 7
        %v664 = vsub.s32 0, %v663
        %v665 = vrot.slane %v660, %v664
        %v667 = vmul.f32 %v665, %v656
        %v668 = vsel %vm659, %v656, %v667
        %vm669 = vcmask 261120
        %v670 = vsel %vm669, %v668, 0.0
        %671 = vadd.xlane.f32.xlu0 %v670
        %v672 = vpop.xlane.xlu0 %671
        %v673 = vrcp.pop 32.0
        %v674 = vmul.f32 %v672, %v673
        %v675 = vrot.slane %v674, 4
        %v676 = vadd.f32 %v674, %v675
        %v677 = vrot.slane %v676, 2
        %v678 = vadd.f32 %v676, %v677
        %v679 = vrot.slane %v678, 1
        %v680 = vadd.f32 %v678, %v679
        %v681 = vrcp.pop 8.0
        %v682 = vmul.f32 %v680, %v681
        %v683 = vsub.f32 %v668, %v682
        %v684 = vmul.f32 %v683, %v683
        %v685 = vsel %vm669, %v684, 0.0
        %686 = vadd.xlane.f32.xlu0 %v685
        %v687 = vpop.xlane.xlu0 %686
        %v688 = vmul.f32 %v687, %v673
        %v689 = vrot.slane %v688, 4
        %v690 = vadd.f32 %v688, %v689
        %v691 = vrot.slane %v690, 2
        %v692 = vadd.f32 %v690, %v691
        %v693 = vrot.slane %v692, 1
        %v694 = vadd.f32 %v692, %v693
        %v695 = vmul.f32 %v694, %v681
        %v696 = vld [vmem:[%s5] sm:$0x1]
        %v698 = vlaneseq
        %v699 = vshrl.u32 %v698, 7
        %v700 = vsub.s32 0, %v699
        %v701 = vrot.slane %v696, %v700
        %v703 = vmul.f32 %v701, %v683
        %v704 = vadd.f32 %v695, 1e-05
        %v705 = vrsqrt.pop %v704
        %v706 = vmul.f32 %v703, %v705
        %v707 = vld [vmem:[%s6] sm:$0x1]
        %v709 = vlaneseq
        %v710 = vshrl.u32 %v709, 7
        %v711 = vsub.s32 0, %v710
        %v712 = vrot.slane %v707, %v711
        %v714 = vadd.f32 %v706, %v712
        %v715 = vld [vmem:[%s7] sm:$0x7]
        %v716 = vld [vmem:[%s8] sm:$0x1]
        %v717 = vrot.slane %v714, 7
        %vm718 = vcmp.ge.s32.totalorder %v575, 1
        %v719 = vsel %vm718, 1, 0
        %vm720 = vcmp.eq.s32.totalorder %v719, 1
        %v721 = vsel %vm720, %v717, 0.0
        %v722 = vlaneseq
        %v723 = vshrl.u32 %v722, 7
        %v724 = vsub.s32 0, %v723
        %v725 = vrot.slane %v715, %v724
        %v726 = vmul.f32 %v725, %v721
        %v728 = vlaneseq
        %v729 = vshrl.u32 %v728, 7
        %v730 = vsub.s32 0, %v729
        %v731 = vrot.slane %v716, %v730
        %v733 = vadd.f32 %v731, %v726
        %v734 = vlaneseq
        %v735 = vshrl.u32 %v734, 7
        %v736 = vsub.s32 1, %v735
        %v737 = vrot.slane %v715, %v736
        %v738 = vmul.f32 %v737, %v714
        %v739 = vadd.f32 %v733, %v738
        %v740 = vrot.slane %v714, 1
        %vm741 = vcmp.lt.s32.totalorder %v575, 7
        %v742 = vsel %vm741, 1, 0
        %vm743 = vcmp.eq.s32.totalorder %v742, 1
        %v744 = vsel %vm743, %v740, 0.0
        %v745 = vlaneseq
        %v746 = vshrl.u32 %v745, 7
        %v747 = vsub.s32 2, %v746
        %v748 = vrot.slane %v715, %v747
        %v749 = vmul.f32 %v748, %v744
        %v750 = vadd.f32 %v739, %v749
        %vm751 = vcmp.ge.f32.partialorder %v750, 0.0
        %v752 = vld [vmem:[%s9] sm:$0x1]
        %v754 = vlaneseq
        %v755 = vshrl.u32 %v754, 7
        %v756 = vsub.s32 0, %v755
        %v757 = vrot.slane %v752, %v756
        %v759 = vmul.f32 %v757, %v750
        %v760 = vsel %vm751, %v750, %v759
        %v761 = vsel %vm669, %v760, 0.0
        %762 = vadd.xlane.f32.xlu0 %v761
        %v763 = vpop.xlane.xlu0 %762
        %v764 = vmul.f32 %v763, %v673
        %v765 = vrot.slane %v764, 4
        %v766 = vadd.f32 %v764, %v765
        %v767 = vrot.slane %v766, 2
        %v768 = vadd.f32 %v766, %v767
        %v769 = vrot.slane %v768, 1
        %v770 = vadd.f32 %v768, %v769
        %v771 = vmul.f32 %v770, %v681
        %v772 = vsub.f32 %v760, %v771
        %v773 = vmul.f32 %v772, %v772
        %v774 = vsel %vm669, %v773, 0.0
        %775 = vadd.xlane.f32.xlu0 %v774
        %v776 = vpop.xlane.xlu0 %775
        %v777 = vmul.f32 %v776, %v673
        %v778 = vrot.slane %v777, 4
        %v779 = vadd.f32 %v777, %v778
        %v780 = vrot.slane %v779, 2
        %v781 = vadd.f32 %v779, %v780
        %v782 = vrot.slane %v781, 1
        %v783 = vadd.f32 %v781, %v782
        %v784 = vmul.f32 %v783, %v681
        %v785 = vld [vmem:[%s10] sm:$0x1]
        %v787 = vlaneseq
        %v788 = vshrl.u32 %v787, 7
        %v789 = vsub.s32 0, %v788
        %v790 = vrot.slane %v785, %v789
        %v792 = vmul.f32 %v790, %v772
        %v793 = vadd.f32 %v784, 1e-05
        %v794 = vrsqrt.pop %v793
        %v795 = vmul.f32 %v792, %v794
        %v796 = vld [vmem:[%s11] sm:$0x1]
        %v798 = vlaneseq
        %v799 = vshrl.u32 %v798, 7
        %v800 = vsub.s32 0, %v799
        %v801 = vrot.slane %v796, %v800
        %v803 = vadd.f32 %v795, %v801
        %v804 = vld [vmem:[%s12] sm:$0xff]
        %v805 = vld [vmem:[%s12 + $0x8] sm:$0xff]
        %v806 = vld [vmem:[%s12 + $0x10] sm:$0xff]
        %v807 = vld [vmem:[%s12 + $0x18] sm:$0xff]
        %v809 = vsel %vm669, %v803, 0
        %811 = vmatprep.subr.mxu0 0.0
        %812 = vmatpush1.msra.mxu0 0.0
        %813 = vmatprep.subr.mxu0 0.0
        %814 = vmatpush1.msra.mxu0 0.0
        %815 = vmatprep.subr.mxu0 0.0
        %816 = vmatpush1.msra.mxu0 0.0
        %817 = vmatprep.subr.mxu0 0.0
        %818 = vmatpush1.msra.mxu0 0.0
        %819 = vmatprep.subr.mxu0 0.0
        %820 = vmatpush1.msra.mxu0 0.0
        %821 = vmatprep.subr.mxu0 0.0
        %822 = vmatpush1.msra.mxu0 0.0
        %823 = vmatprep.subr.mxu0 0.0
        %824 = vmatpush1.msra.mxu0 0.0
        %825 = vmatprep.subr.mxu0 0.0
        %826 = vmatpush1.msra.mxu0 0.0
        %827 = vmatprep.subr.mxu0 0.0
        %828 = vmatpush1.msra.mxu0 0.0
        %829 = vmatprep.subr.mxu0 0.0
        %830 = vmatpush1.msra.mxu0 0.0
        %831 = vmatprep.subr.mxu0 0.0
        %832 = vmatpush1.msra.mxu0 0.0
        %833 = vmatprep.subr.mxu0 0.0
        %834 = vmatpush1.msra.mxu0 0.0
        %835 = vmatprep.subr.mxu0 0.0
        %836 = vmatpush1.msra.mxu0 %v807
        %837 = vmatprep.subr.mxu0 0.0
        %838 = vmatpush1.msra.mxu0 %v806
        %839 = vmatprep.subr.mxu0 0.0
        %840 = vmatpush1.msra.mxu0 %v805
        %841 = vmatprep.subr.mxu0 0.0
        %842 = vmatpush1.msra.mxu0 %v804
        %843 = vmatprep.subr.mxu0 0.0
        %844 = vmatpush2.msra.mxu0 0.0
        %845 = vmatprep.subr.mxu0 0.0
        %846 = vmatpush2.msra.mxu0 0.0
        %847 = vmatprep.subr.mxu0 0.0
        %848 = vmatpush2.msra.mxu0 0.0
        %849 = vmatprep.subr.mxu0 0.0
        %850 = vmatpush2.msra.mxu0 0.0
        %851 = vmatprep.subr.mxu0 0.0
        %852 = vmatpush2.msra.mxu0 0.0
        %853 = vmatprep.subr.mxu0 0.0
        %854 = vmatpush2.msra.mxu0 0.0
        %855 = vmatprep.subr.mxu0 0.0
        %856 = vmatpush2.msra.mxu0 0.0
        %857 = vmatprep.subr.mxu0 0.0
        %858 = vmatpush2.msra.mxu0 0.0
        %859 = vmatprep.subr.mxu0 0.0
        %860 = vmatpush2.msra.mxu0 0.0
        %861 = vmatprep.subr.mxu0 0.0
        %862 = vmatpush2.msra.mxu0 0.0
        %863 = vmatprep.subr.mxu0 0.0
        %864 = vmatpush2.msra.mxu0 0.0
        %865 = vmatprep.subr.mxu0 0.0
        %866 = vmatpush2.msra.mxu0 0.0
        %867 = vmatprep.subr.mxu0 0.0
        %868 = vmatpush2.msra.mxu0 0.0
        %869 = vmatprep.subr.mxu0 0.0
        %870 = vmatpush2.msra.mxu0 0.0
        %871 = vmatprep.subr.mxu0 0.0
        %872 = vmatpush2.msra.mxu0 0.0
        %873 = vmatprep.subr.mxu0 0.0
        %874 = vmatpush2.msra.mxu0 0.0
        %875 = vmatprep.mubr.f32.mxu0 0.0
        %876 = vmatmul.mubr.f32.gmra.mxu0 %v809
        %v877 = vpop.f32.mrf.mxu0
        %v878 = vadd.f32 0.0, %v877
        %v879 = vpop.f32.mrf.mxu0
        %880 = vdwg.mxu0
        %v881 = vadd.f32 %v572, %v878
        %v882 = vld [vmem:[%s13] sm:$0x1]
        %v884 = vlaneseq
        %v885 = vshrl.u32 %v884, 7
        %v886 = vsub.s32 0, %v885
        %v887 = vrot.slane %v882, %v886
        %v889 = vadd.f32 %v881, %v887
        %v890 = vld [vmem:[%s14] sm:$0xff]
        %v891 = vld [vmem:[%s14 + $0x8] sm:$0xff]
        %v892 = vld [vmem:[%s14 + $0x10] sm:$0xff]
        %v893 = vld [vmem:[%s14 + $0x18] sm:$0xff]
        %894 = vmatprep.subr.mxu0 0.0
        %895 = vmatpush1.msra.mxu0 0.0
        %896 = vmatprep.subr.mxu0 0.0
        %897 = vmatpush1.msra.mxu0 0.0
        %898 = vmatprep.subr.mxu0 0.0
        %899 = vmatpush1.msra.mxu0 0.0
        %900 = vmatprep.subr.mxu0 0.0
        %901 = vmatpush1.msra.mxu0 0.0
        %902 = vmatprep.subr.mxu0 0.0
        %903 = vmatpush1.msra.mxu0 0.0
        %904 = vmatprep.subr.mxu0 0.0
        %905 = vmatpush1.msra.mxu0 0.0
        %906 = vmatprep.subr.mxu0 0.0
        %907 = vmatpush1.msra.mxu0 0.0
        %908 = vmatprep.subr.mxu0 0.0
        %909 = vmatpush1.msra.mxu0 0.0
        %910 = vmatprep.subr.mxu0 0.0
        %911 = vmatpush1.msra.mxu0 0.0
        %912 = vmatprep.subr.mxu0 0.0
        %913 = vmatpush1.msra.mxu0 0.0
        %914 = vmatprep.subr.mxu0 0.0
        %915 = vmatpush1.msra.mxu0 0.0
        %916 = vmatprep.subr.mxu0 0.0
        %917 = vmatpush1.msra.mxu0 0.0
        %918 = vmatprep.subr.mxu0 0.0
        %919 = vmatpush1.msra.mxu0 %v893
        %920 = vmatprep.subr.mxu0 0.0
        %921 = vmatpush1.msra.mxu0 %v892
        %922 = vmatprep.subr.mxu0 0.0
        %923 = vmatpush1.msra.mxu0 %v891
        %924 = vmatprep.subr.mxu0 0.0
        %925 = vmatpush1.msra.mxu0 %v890
        %926 = vmatprep.subr.mxu0 0.0
        %927 = vmatpush2.msra.mxu0 0.0
        %928 = vmatprep.subr.mxu0 0.0
        %929 = vmatpush2.msra.mxu0 0.0
        %930 = vmatprep.subr.mxu0 0.0
        %931 = vmatpush2.msra.mxu0 0.0
        %932 = vmatprep.subr.mxu0 0.0
        %933 = vmatpush2.msra.mxu0 0.0
        %934 = vmatprep.subr.mxu0 0.0
        %935 = vmatpush2.msra.mxu0 0.0
        %936 = vmatprep.subr.mxu0 0.0
        %937 = vmatpush2.msra.mxu0 0.0
        %938 = vmatprep.subr.mxu0 0.0
        %939 = vmatpush2.msra.mxu0 0.0
        %940 = vmatprep.subr.mxu0 0.0
        %941 = vmatpush2.msra.mxu0 0.0
        %942 = vmatprep.subr.mxu0 0.0
        %943 = vmatpush2.msra.mxu0 0.0
        %944 = vmatprep.subr.mxu0 0.0
        %945 = vmatpush2.msra.mxu0 0.0
        %946 = vmatprep.subr.mxu0 0.0
        %947 = vmatpush2.msra.mxu0 0.0
        %948 = vmatprep.subr.mxu0 0.0
        %949 = vmatpush2.msra.mxu0 0.0
        %950 = vmatprep.subr.mxu0 0.0
        %951 = vmatpush2.msra.mxu0 0.0
        %952 = vmatprep.subr.mxu0 0.0
        %953 = vmatpush2.msra.mxu0 0.0
        %954 = vmatprep.subr.mxu0 0.0
        %955 = vmatpush2.msra.mxu0 0.0
        %956 = vmatprep.subr.mxu0 0.0
        %957 = vmatpush2.msra.mxu0 0.0
        %958 = vmatprep.mubr.f32.mxu0 0.0
        %959 = vmatmul.mubr.f32.gmra.mxu0 %v809
        %v960 = vpop.f32.mrf.mxu0
        %v961 = vadd.f32 0.0, %v960
        %v962 = vpop.f32.mrf.mxu0
        %963 = vdwg.mxu0
        %v964 = vadd.f32 %v573, %v961
        %v965 = vld [vmem:[%s15] sm:$0x1]
        %v967 = vlaneseq
        %v968 = vshrl.u32 %v967, 7
        %v969 = vsub.s32 0, %v968
        %v970 = vrot.slane %v965, %v969
        %v972 = vadd.f32 %v964, %v970
        %s973 = scalar_lea.vmem %s2, 16
        %v974 = vld [vmem:[%s973] sm:$0xff]
        %v975 = vld [vmem:[%s973 + $0x8] sm:$0xff]
        %s976 = scalar_lea.vmem %s3, 1
        %v977 = vld [vmem:[%s976] sm:$0x1]
        %v979 = vlaneseq
        %v980 = vshrl.u32 %v979, 7
        %v981 = vsub.s32 0, %v980
        %v982 = vrot.slane %v977, %v981
        %v985 = vsel %vm585, %v889, 0
        %987 = vmatprep.subr.mxu0 0.0
        %988 = vmatpush1.msra.mxu0 0.0
        %989 = vmatprep.subr.mxu0 0.0
        %990 = vmatpush1.msra.mxu0 0.0
        %991 = vmatprep.subr.mxu0 0.0
        %992 = vmatpush1.msra.mxu0 0.0
        %993 = vmatprep.subr.mxu0 0.0
        %994 = vmatpush1.msra.mxu0 0.0
        %995 = vmatprep.subr.mxu0 0.0
        %996 = vmatpush1.msra.mxu0 0.0
        %997 = vmatprep.subr.mxu0 0.0
        %998 = vmatpush1.msra.mxu0 0.0
        %999 = vmatprep.subr.mxu0 0.0
        %1000 = vmatpush1.msra.mxu0 0.0
        %1001 = vmatprep.subr.mxu0 0.0
        %1002 = vmatpush1.msra.mxu0 0.0
        %1003 = vmatprep.subr.mxu0 0.0
        %1004 = vmatpush1.msra.mxu0 0.0
        %1005 = vmatprep.subr.mxu0 0.0
        %1006 = vmatpush1.msra.mxu0 0.0
        %1007 = vmatprep.subr.mxu0 0.0
        %1008 = vmatpush1.msra.mxu0 0.0
        %1009 = vmatprep.subr.mxu0 0.0
        %1010 = vmatpush1.msra.mxu0 0.0
        %1011 = vmatprep.subr.mxu0 0.0
        %1012 = vmatpush1.msra.mxu0 0.0
        %1013 = vmatprep.subr.mxu0 0.0
        %1014 = vmatpush1.msra.mxu0 0.0
        %1015 = vmatprep.subr.mxu0 0.0
        %1016 = vmatpush1.msra.mxu0 %v975
        %1017 = vmatprep.subr.mxu0 0.0
        %1018 = vmatpush1.msra.mxu0 %v974
        %1019 = vmatprep.subr.mxu0 0.0
        %1020 = vmatpush2.msra.mxu0 0.0
        %1021 = vmatprep.subr.mxu0 0.0
        %1022 = vmatpush2.msra.mxu0 0.0
        %1023 = vmatprep.subr.mxu0 0.0
        %1024 = vmatpush2.msra.mxu0 0.0
        %1025 = vmatprep.subr.mxu0 0.0
        %1026 = vmatpush2.msra.mxu0 0.0
        %1027 = vmatprep.subr.mxu0 0.0
        %1028 = vmatpush2.msra.mxu0 0.0
        %1029 = vmatprep.subr.mxu0 0.0
        %1030 = vmatpush2.msra.mxu0 0.0
        %1031 = vmatprep.subr.mxu0 0.0
        %1032 = vmatpush2.msra.mxu0 0.0
        %1033 = vmatprep.subr.mxu0 0.0
        %1034 = vmatpush2.msra.mxu0 0.0
        %1035 = vmatprep.subr.mxu0 0.0
        %1036 = vmatpush2.msra.mxu0 0.0
        %1037 = vmatprep.subr.mxu0 0.0
        %1038 = vmatpush2.msra.mxu0 0.0
        %1039 = vmatprep.subr.mxu0 0.0
        %1040 = vmatpush2.msra.mxu0 0.0
        %1041 = vmatprep.subr.mxu0 0.0
        %1042 = vmatpush2.msra.mxu0 0.0
        %1043 = vmatprep.subr.mxu0 0.0
        %1044 = vmatpush2.msra.mxu0 0.0
        %1045 = vmatprep.subr.mxu0 0.0
        %1046 = vmatpush2.msra.mxu0 0.0
        %1047 = vmatprep.subr.mxu0 0.0
        %1048 = vmatpush2.msra.mxu0 0.0
        %1049 = vmatprep.subr.mxu0 0.0
        %1050 = vmatpush2.msra.mxu0 0.0
        %1051 = vmatprep.mubr.f32.mxu0 0.0
        %1052 = vmatmul.mubr.f32.gmra.mxu0 %v985
        %v1053 = vpop.f32.mrf.mxu0
        %v1054 = vadd.f32 %v982, %v1053
        %v1055 = vpop.f32.mrf.mxu0
        %1056 = vdwg.mxu0
        %vm1057 = vcmp.ge.f32.partialorder %v1054, 0.0
        %s1058 = scalar_lea.vmem %s4, 1
        %v1059 = vld [vmem:[%s1058] sm:$0x1]
        %v1061 = vlaneseq
        %v1062 = vshrl.u32 %v1061, 7
        %v1063 = vsub.s32 0, %v1062
        %v1064 = vrot.slane %v1059, %v1063
        %v1066 = vmul.f32 %v1064, %v1054
        %v1067 = vsel %vm1057, %v1054, %v1066
        %v1068 = vsel %vm669, %v1067, 0.0
        %1069 = vadd.xlane.f32.xlu0 %v1068
        %v1070 = vpop.xlane.xlu0 %1069
        %v1071 = vmul.f32 %v1070, %v673
        %v1072 = vrot.slane %v1071, 4
        %v1073 = vadd.f32 %v1071, %v1072
        %v1074 = vrot.slane %v1073, 2
        %v1075 = vadd.f32 %v1073, %v1074
        %v1076 = vrot.slane %v1075, 1
        %v1077 = vadd.f32 %v1075, %v1076
        %v1078 = vmul.f32 %v1077, %v681
        %v1079 = vsub.f32 %v1067, %v1078
        %v1080 = vmul.f32 %v1079, %v1079
        %v1081 = vsel %vm669, %v1080, 0.0
        %1082 = vadd.xlane.f32.xlu0 %v1081
        %v1083 = vpop.xlane.xlu0 %1082
        %v1084 = vmul.f32 %v1083, %v673
        %v1085 = vrot.slane %v1084, 4
        %v1086 = vadd.f32 %v1084, %v1085
        %v1087 = vrot.slane %v1086, 2
        %v1088 = vadd.f32 %v1086, %v1087
        %v1089 = vrot.slane %v1088, 1
        %v1090 = vadd.f32 %v1088, %v1089
        %v1091 = vmul.f32 %v1090, %v681
        %s1092 = scalar_lea.vmem %s5, 1
        %v1093 = vld [vmem:[%s1092] sm:$0x1]
        %v1095 = vlaneseq
        %v1096 = vshrl.u32 %v1095, 7
        %v1097 = vsub.s32 0, %v1096
        %v1098 = vrot.slane %v1093, %v1097
        %v1100 = vmul.f32 %v1098, %v1079
        %v1101 = vadd.f32 %v1091, 1e-05
        %v1102 = vrsqrt.pop %v1101
        %v1103 = vmul.f32 %v1100, %v1102
        %s1104 = scalar_lea.vmem %s6, 1
        %v1105 = vld [vmem:[%s1104] sm:$0x1]
        %v1107 = vlaneseq
        %v1108 = vshrl.u32 %v1107, 7
        %v1109 = vsub.s32 0, %v1108
        %v1110 = vrot.slane %v1105, %v1109
        %v1112 = vadd.f32 %v1103, %v1110
        %s1113 = scalar_lea.vmem %s7, 4
        %v1114 = vld [vmem:[%s1113] sm:$0x7]
        %s1115 = scalar_lea.vmem %s8, 1
        %v1116 = vld [vmem:[%s1115] sm:$0x1]
        %v1117 = vrot.slane %v1112, 6
        %vm1118 = vcmp.ge.s32.totalorder %v575, 2
        %v1119 = vsel %vm1118, 1, 0
        %vm1120 = vcmp.eq.s32.totalorder %v1119, 1
        %v1121 = vsel %vm1120, %v1117, 0.0
        %v1122 = vlaneseq
        %v1123 = vshrl.u32 %v1122, 7
        %v1124 = vsub.s32 0, %v1123
        %v1125 = vrot.slane %v1114, %v1124
        %v1126 = vmul.f32 %v1125, %v1121
        %v1128 = vlaneseq
        %v1129 = vshrl.u32 %v1128, 7
        %v1130 = vsub.s32 0, %v1129
        %v1131 = vrot.slane %v1116, %v1130
        %v1133 = vadd.f32 %v1131, %v1126
        %v1134 = vlaneseq
        %v1135 = vshrl.u32 %v1134, 7
        %v1136 = vsub.s32 1, %v1135
        %v1137 = vrot.slane %v1114, %v1136
        %v1138 = vmul.f32 %v1137, %v1112
        %v1139 = vadd.f32 %v1133, %v1138
        %v1140 = vrot.slane %v1112, 2
        %vm1141 = vcmp.lt.s32.totalorder %v575, 6
        %v1142 = vsel %vm1141, 1, 0
        %vm1143 = vcmp.eq.s32.totalorder %v1142, 1
        %v1144 = vsel %vm1143, %v1140, 0.0
        %v1145 = vlaneseq
        %v1146 = vshrl.u32 %v1145, 7
        %v1147 = vsub.s32 2, %v1146
        %v1148 = vrot.slane %v1114, %v1147
        %v1149 = vmul.f32 %v1148, %v1144
        %v1150 = vadd.f32 %v1139, %v1149
        %vm1151 = vcmp.ge.f32.partialorder %v1150, 0.0
        %s1152 = scalar_lea.vmem %s9, 1
        %v1153 = vld [vmem:[%s1152] sm:$0x1]
        %v1155 = vlaneseq
        %v1156 = vshrl.u32 %v1155, 7
        %v1157 = vsub.s32 0, %v1156
        %v1158 = vrot.slane %v1153, %v1157
        %v1160 = vmul.f32 %v1158, %v1150
        %v1161 = vsel %vm1151, %v1150, %v1160
        %v1162 = vsel %vm669, %v1161, 0.0
        %1163 = vadd.xlane.f32.xlu0 %v1162
        %v1164 = vpop.xlane.xlu0 %1163
        %v1165 = vmul.f32 %v1164, %v673
        %v1166 = vrot.slane %v1165, 4
        %v1167 = vadd.f32 %v1165, %v1166
        %v1168 = vrot.slane %v1167, 2
        %v1169 = vadd.f32 %v1167, %v1168
        %v1170 = vrot.slane %v1169, 1
        %v1171 = vadd.f32 %v1169, %v1170
        %v1172 = vmul.f32 %v1171, %v681
        %v1173 = vsub.f32 %v1161, %v1172
        %v1174 = vmul.f32 %v1173, %v1173
        %v1175 = vsel %vm669, %v1174, 0.0
        %1176 = vadd.xlane.f32.xlu0 %v1175
        %v1177 = vpop.xlane.xlu0 %1176
        %v1178 = vmul.f32 %v1177, %v673
        %v1179 = vrot.slane %v1178, 4
        %v1180 = vadd.f32 %v1178, %v1179
        %v1181 = vrot.slane %v1180, 2
        %v1182 = vadd.f32 %v1180, %v1181
        %v1183 = vrot.slane %v1182, 1
        %v1184 = vadd.f32 %v1182, %v1183
        %v1185 = vmul.f32 %v1184, %v681
        %s1186 = scalar_lea.vmem %s10, 1
        %v1187 = vld [vmem:[%s1186] sm:$0x1]
        %v1189 = vlaneseq
        %v1190 = vshrl.u32 %v1189, 7
        %v1191 = vsub.s32 0, %v1190
        %v1192 = vrot.slane %v1187, %v1191
        %v1194 = vmul.f32 %v1192, %v1173
        %v1195 = vadd.f32 %v1185, 1e-05
        %v1196 = vrsqrt.pop %v1195
        %v1197 = vmul.f32 %v1194, %v1196
        %s1198 = scalar_lea.vmem %s11, 1
        %v1199 = vld [vmem:[%s1198] sm:$0x1]
        %v1201 = vlaneseq
        %v1202 = vshrl.u32 %v1201, 7
        %v1203 = vsub.s32 0, %v1202
        %v1204 = vrot.slane %v1199, %v1203
        %v1206 = vadd.f32 %v1197, %v1204
        %s1207 = scalar_lea.vmem %s12, 32
        %v1208 = vld [vmem:[%s1207] sm:$0xff]
        %v1209 = vld [vmem:[%s1207 + $0x8] sm:$0xff]
        %v1210 = vld [vmem:[%s1207 + $0x10] sm:$0xff]
        %v1211 = vld [vmem:[%s1207 + $0x18] sm:$0xff]
        %v1213 = vsel %vm669, %v1206, 0
        %1215 = vmatprep.subr.mxu0 0.0
        %1216 = vmatpush1.msra.mxu0 0.0
        %1217 = vmatprep.subr.mxu0 0.0
        %1218 = vmatpush1.msra.mxu0 0.0
        %1219 = vmatprep.subr.mxu0 0.0
        %1220 = vmatpush1.msra.mxu0 0.0
        %1221 = vmatprep.subr.mxu0 0.0
        %1222 = vmatpush1.msra.mxu0 0.0
        %1223 = vmatprep.subr.mxu0 0.0
        %1224 = vmatpush1.msra.mxu0 0.0
        %1225 = vmatprep.subr.mxu0 0.0
        %1226 = vmatpush1.msra.mxu0 0.0
        %1227 = vmatprep.subr.mxu0 0.0
        %1228 = vmatpush1.msra.mxu0 0.0
        %1229 = vmatprep.subr.mxu0 0.0
        %1230 = vmatpush1.msra.mxu0 0.0
        %1231 = vmatprep.subr.mxu0 0.0
        %1232 = vmatpush1.msra.mxu0 0.0
        %1233 = vmatprep.subr.mxu0 0.0
        %1234 = vmatpush1.msra.mxu0 0.0
        %1235 = vmatprep.subr.mxu0 0.0
        %1236 = vmatpush1.msra.mxu0 0.0
        %1237 = vmatprep.subr.mxu0 0.0
        %1238 = vmatpush1.msra.mxu0 0.0
        %1239 = vmatprep.subr.mxu0 0.0
        %1240 = vmatpush1.msra.mxu0 %v1211
        %1241 = vmatprep.subr.mxu0 0.0
        %1242 = vmatpush1.msra.mxu0 %v1210
        %1243 = vmatprep.subr.mxu0 0.0
        %1244 = vmatpush1.msra.mxu0 %v1209
        %1245 = vmatprep.subr.mxu0 0.0
        %1246 = vmatpush1.msra.mxu0 %v1208
        %1247 = vmatprep.subr.mxu0 0.0
        %1248 = vmatpush2.msra.mxu0 0.0
        %1249 = vmatprep.subr.mxu0 0.0
        %1250 = vmatpush2.msra.mxu0 0.0
        %1251 = vmatprep.subr.mxu0 0.0
        %1252 = vmatpush2.msra.mxu0 0.0
        %1253 = vmatprep.subr.mxu0 0.0
        %1254 = vmatpush2.msra.mxu0 0.0
        %1255 = vmatprep.subr.mxu0 0.0
        %1256 = vmatpush2.msra.mxu0 0.0
        %1257 = vmatprep.subr.mxu0 0.0
        %1258 = vmatpush2.msra.mxu0 0.0
        %1259 = vmatprep.subr.mxu0 0.0
        %1260 = vmatpush2.msra.mxu0 0.0
        %1261 = vmatprep.subr.mxu0 0.0
        %1262 = vmatpush2.msra.mxu0 0.0
        %1263 = vmatprep.subr.mxu0 0.0
        %1264 = vmatpush2.msra.mxu0 0.0
        %1265 = vmatprep.subr.mxu0 0.0
        %1266 = vmatpush2.msra.mxu0 0.0
        %1267 = vmatprep.subr.mxu0 0.0
        %1268 = vmatpush2.msra.mxu0 0.0
        %1269 = vmatprep.subr.mxu0 0.0
        %1270 = vmatpush2.msra.mxu0 0.0
        %1271 = vmatprep.subr.mxu0 0.0
        %1272 = vmatpush2.msra.mxu0 0.0
        %1273 = vmatprep.subr.mxu0 0.0
        %1274 = vmatpush2.msra.mxu0 0.0
        %1275 = vmatprep.subr.mxu0 0.0
        %1276 = vmatpush2.msra.mxu0 0.0
        %1277 = vmatprep.subr.mxu0 0.0
        %1278 = vmatpush2.msra.mxu0 0.0
        %1279 = vmatprep.mubr.f32.mxu0 0.0
        %1280 = vmatmul.mubr.f32.gmra.mxu0 %v1213
        %v1281 = vpop.f32.mrf.mxu0
        %v1282 = vadd.f32 0.0, %v1281
        %v1283 = vpop.f32.mrf.mxu0
        %1284 = vdwg.mxu0
        %v1285 = vadd.f32 %v889, %v1282
        %s1286 = scalar_lea.vmem %s13, 1
        %v1287 = vld [vmem:[%s1286] sm:$0x1]
        %v1289 = vlaneseq
        %v1290 = vshrl.u32 %v1289, 7
        %v1291 = vsub.s32 0, %v1290
        %v1292 = vrot.slane %v1287, %v1291
        %v1294 = vadd.f32 %v1285, %v1292
        %s1295 = scalar_lea.vmem %s14, 32
        %v1296 = vld [vmem:[%s1295] sm:$0xff]
        %v1297 = vld [vmem:[%s1295 + $0x8] sm:$0xff]
        %v1298 = vld [vmem:[%s1295 + $0x10] sm:$0xff]
        %v1299 = vld [vmem:[%s1295 + $0x18] sm:$0xff]
        %1300 = vmatprep.subr.mxu0 0.0
        %1301 = vmatpush1.msra.mxu0 0.0
        %1302 = vmatprep.subr.mxu0 0.0
        %1303 = vmatpush1.msra.mxu0 0.0
        %1304 = vmatprep.subr.mxu0 0.0
        %1305 = vmatpush1.msra.mxu0 0.0
        %1306 = vmatprep.subr.mxu0 0.0
        %1307 = vmatpush1.msra.mxu0 0.0
        %1308 = vmatprep.subr.mxu0 0.0
        %1309 = vmatpush1.msra.mxu0 0.0
        %1310 = vmatprep.subr.mxu0 0.0
        %1311 = vmatpush1.msra.mxu0 0.0
        %1312 = vmatprep.subr.mxu0 0.0
        %1313 = vmatpush1.msra.mxu0 0.0
        %1314 = vmatprep.subr.mxu0 0.0
        %1315 = vmatpush1.msra.mxu0 0.0
        %1316 = vmatprep.subr.mxu0 0.0
        %1317 = vmatpush1.msra.mxu0 0.0
        %1318 = vmatprep.subr.mxu0 0.0
        %1319 = vmatpush1.msra.mxu0 0.0
        %1320 = vmatprep.subr.mxu0 0.0
        %1321 = vmatpush1.msra.mxu0 0.0
        %1322 = vmatprep.subr.mxu0 0.0
        %1323 = vmatpush1.msra.mxu0 0.0
        %1324 = vmatprep.subr.mxu0 0.0
        %1325 = vmatpush1.msra.mxu0 %v1299
        %1326 = vmatprep.subr.mxu0 0.0
        %1327 = vmatpush1.msra.mxu0 %v1298
        %1328 = vmatprep.subr.mxu0 0.0
        %1329 = vmatpush1.msra.mxu0 %v1297
        %1330 = vmatprep.subr.mxu0 0.0
        %1331 = vmatpush1.msra.mxu0 %v1296
        %1332 = vmatprep.subr.mxu0 0.0
        %1333 = vmatpush2.msra.mxu0 0.0
        %1334 = vmatprep.subr.mxu0 0.0
        %1335 = vmatpush2.msra.mxu0 0.0
        %1336 = vmatprep.subr.mxu0 0.0
        %1337 = vmatpush2.msra.mxu0 0.0
        %1338 = vmatprep.subr.mxu0 0.0
        %1339 = vmatpush2.msra.mxu0 0.0
        %1340 = vmatprep.subr.mxu0 0.0
        %1341 = vmatpush2.msra.mxu0 0.0
        %1342 = vmatprep.subr.mxu0 0.0
        %1343 = vmatpush2.msra.mxu0 0.0
        %1344 = vmatprep.subr.mxu0 0.0
        %1345 = vmatpush2.msra.mxu0 0.0
        %1346 = vmatprep.subr.mxu0 0.0
        %1347 = vmatpush2.msra.mxu0 0.0
        %1348 = vmatprep.subr.mxu0 0.0
        %1349 = vmatpush2.msra.mxu0 0.0
        %1350 = vmatprep.subr.mxu0 0.0
        %1351 = vmatpush2.msra.mxu0 0.0
        %1352 = vmatprep.subr.mxu0 0.0
        %1353 = vmatpush2.msra.mxu0 0.0
        %1354 = vmatprep.subr.mxu0 0.0
        %1355 = vmatpush2.msra.mxu0 0.0
        %1356 = vmatprep.subr.mxu0 0.0
        %1357 = vmatpush2.msra.mxu0 0.0
        %1358 = vmatprep.subr.mxu0 0.0
        %1359 = vmatpush2.msra.mxu0 0.0
        %1360 = vmatprep.subr.mxu0 0.0
        %1361 = vmatpush2.msra.mxu0 0.0
        %1362 = vmatprep.subr.mxu0 0.0
        %1363 = vmatpush2.msra.mxu0 0.0
        %1364 = vmatprep.mubr.f32.mxu0 0.0
        %1365 = vmatmul.mubr.f32.gmra.mxu0 %v1213
        %v1366 = vpop.f32.mrf.mxu0
        %v1367 = vadd.f32 0.0, %v1366
        %v1368 = vpop.f32.mrf.mxu0
        %1369 = vdwg.mxu0
        %v1370 = vadd.f32 %v972, %v1367
        %s1371 = scalar_lea.vmem %s15, 1
        %v1372 = vld [vmem:[%s1371] sm:$0x1]
        %v1374 = vlaneseq
        %v1375 = vshrl.u32 %v1374, 7
        %v1376 = vsub.s32 0, %v1375
        %v1377 = vrot.slane %v1372, %v1376
        %v1379 = vadd.f32 %v1370, %v1377
        %s1380 = scalar_lea.vmem %s2, 32
        %v1381 = vld [vmem:[%s1380] sm:$0xff]
        %v1382 = vld [vmem:[%s1380 + $0x8] sm:$0xff]
        %s1383 = scalar_lea.vmem %s3, 2
        %v1384 = vld [vmem:[%s1383] sm:$0x1]
        %v1386 = vlaneseq
        %v1387 = vshrl.u32 %v1386, 7
        %v1388 = vsub.s32 0, %v1387
        %v1389 = vrot.slane %v1384, %v1388
        %v1392 = vsel %vm585, %v1294, 0
        %1394 = vmatprep.subr.mxu0 0.0
        %1395 = vmatpush1.msra.mxu0 0.0
        %1396 = vmatprep.subr.mxu0 0.0
        %1397 = vmatpush1.msra.mxu0 0.0
        %1398 = vmatprep.subr.mxu0 0.0
        %1399 = vmatpush1.msra.mxu0 0.0
        %1400 = vmatprep.subr.mxu0 0.0
        %1401 = vmatpush1.msra.mxu0 0.0
        %1402 = vmatprep.subr.mxu0 0.0
        %1403 = vmatpush1.msra.mxu0 0.0
        %1404 = vmatprep.subr.mxu0 0.0
        %1405 = vmatpush1.msra.mxu0 0.0
        %1406 = vmatprep.subr.mxu0 0.0
        %1407 = vmatpush1.msra.mxu0 0.0
        %1408 = vmatprep.subr.mxu0 0.0
        %1409 = vmatpush1.msra.mxu0 0.0
        %1410 = vmatprep.subr.mxu0 0.0
        %1411 = vmatpush1.msra.mxu0 0.0
        %1412 = vmatprep.subr.mxu0 0.0
        %1413 = vmatpush1.msra.mxu0 0.0
        %1414 = vmatprep.subr.mxu0 0.0
        %1415 = vmatpush1.msra.mxu0 0.0
        %1416 = vmatprep.subr.mxu0 0.0
        %1417 = vmatpush1.msra.mxu0 0.0
        %1418 = vmatprep.subr.mxu0 0.0
        %1419 = vmatpush1.msra.mxu0 0.0
        %1420 = vmatprep.subr.mxu0 0.0
        %1421 = vmatpush1.msra.mxu0 0.0
        %1422 = vmatprep.subr.mxu0 0.0
        %1423 = vmatpush1.msra.mxu0 %v1382
        %1424 = vmatprep.subr.mxu0 0.0
        %1425 = vmatpush1.msra.mxu0 %v1381
        %1426 = vmatprep.subr.mxu0 0.0
        %1427 = vmatpush2.msra.mxu0 0.0
        %1428 = vmatprep.subr.mxu0 0.0
        %1429 = vmatpush2.msra.mxu0 0.0
        %1430 = vmatprep.subr.mxu0 0.0
        %1431 = vmatpush2.msra.mxu0 0.0
        %1432 = vmatprep.subr.mxu0 0.0
        %1433 = vmatpush2.msra.mxu0 0.0
        %1434 = vmatprep.subr.mxu0 0.0
        %1435 = vmatpush2.msra.mxu0 0.0
        %1436 = vmatprep.subr.mxu0 0.0
        %1437 = vmatpush2.msra.mxu0 0.0
        %1438 = vmatprep.subr.mxu0 0.0
        %1439 = vmatpush2.msra.mxu0 0.0
        %1440 = vmatprep.subr.mxu0 0.0
        %1441 = vmatpush2.msra.mxu0 0.0
        %1442 = vmatprep.subr.mxu0 0.0
        %1443 = vmatpush2.msra.mxu0 0.0
        %1444 = vmatprep.subr.mxu0 0.0
        %1445 = vmatpush2.msra.mxu0 0.0
        %1446 = vmatprep.subr.mxu0 0.0
        %1447 = vmatpush2.msra.mxu0 0.0
        %1448 = vmatprep.subr.mxu0 0.0
        %1449 = vmatpush2.msra.mxu0 0.0
        %1450 = vmatprep.subr.mxu0 0.0
        %1451 = vmatpush2.msra.mxu0 0.0
        %1452 = vmatprep.subr.mxu0 0.0
        %1453 = vmatpush2.msra.mxu0 0.0
        %1454 = vmatprep.subr.mxu0 0.0
        %1455 = vmatpush2.msra.mxu0 0.0
        %1456 = vmatprep.subr.mxu0 0.0
        %1457 = vmatpush2.msra.mxu0 0.0
        %1458 = vmatprep.mubr.f32.mxu0 0.0
        %1459 = vmatmul.mubr.f32.gmra.mxu0 %v1392
        %v1460 = vpop.f32.mrf.mxu0
        %v1461 = vadd.f32 %v1389, %v1460
        %v1462 = vpop.f32.mrf.mxu0
        %1463 = vdwg.mxu0
        %vm1464 = vcmp.ge.f32.partialorder %v1461, 0.0
        %s1465 = scalar_lea.vmem %s4, 2
        %v1466 = vld [vmem:[%s1465] sm:$0x1]
        %v1468 = vlaneseq
        %v1469 = vshrl.u32 %v1468, 7
        %v1470 = vsub.s32 0, %v1469
        %v1471 = vrot.slane %v1466, %v1470
        %v1473 = vmul.f32 %v1471, %v1461
        %v1474 = vsel %vm1464, %v1461, %v1473
        %v1475 = vsel %vm669, %v1474, 0.0
        %1476 = vadd.xlane.f32.xlu0 %v1475
        %v1477 = vpop.xlane.xlu0 %1476
        %v1478 = vmul.f32 %v1477, %v673
        %v1479 = vrot.slane %v1478, 4
        %v1480 = vadd.f32 %v1478, %v1479
        %v1481 = vrot.slane %v1480, 2
        %v1482 = vadd.f32 %v1480, %v1481
        %v1483 = vrot.slane %v1482, 1
        %v1484 = vadd.f32 %v1482, %v1483
        %v1485 = vmul.f32 %v1484, %v681
        %v1486 = vsub.f32 %v1474, %v1485
        %v1487 = vmul.f32 %v1486, %v1486
        %v1488 = vsel %vm669, %v1487, 0.0
        %1489 = vadd.xlane.f32.xlu0 %v1488
        %v1490 = vpop.xlane.xlu0 %1489
        %v1491 = vmul.f32 %v1490, %v673
        %v1492 = vrot.slane %v1491, 4
        %v1493 = vadd.f32 %v1491, %v1492
        %v1494 = vrot.slane %v1493, 2
        %v1495 = vadd.f32 %v1493, %v1494
        %v1496 = vrot.slane %v1495, 1
        %v1497 = vadd.f32 %v1495, %v1496
        %v1498 = vmul.f32 %v1497, %v681
        %s1499 = scalar_lea.vmem %s5, 2
        %v1500 = vld [vmem:[%s1499] sm:$0x1]
        %v1502 = vlaneseq
        %v1503 = vshrl.u32 %v1502, 7
        %v1504 = vsub.s32 0, %v1503
        %v1505 = vrot.slane %v1500, %v1504
        %v1507 = vmul.f32 %v1505, %v1486
        %v1508 = vadd.f32 %v1498, 1e-05
        %v1509 = vrsqrt.pop %v1508
        %v1510 = vmul.f32 %v1507, %v1509
        %s1511 = scalar_lea.vmem %s6, 2
        %v1512 = vld [vmem:[%s1511] sm:$0x1]
        %v1514 = vlaneseq
        %v1515 = vshrl.u32 %v1514, 7
        %v1516 = vsub.s32 0, %v1515
        %v1517 = vrot.slane %v1512, %v1516
        %v1519 = vadd.f32 %v1510, %v1517
        %s1520 = scalar_lea.vmem %s7, 8
        %v1521 = vld [vmem:[%s1520] sm:$0x7]
        %s1522 = scalar_lea.vmem %s8, 2
        %v1523 = vld [vmem:[%s1522] sm:$0x1]
        %v1524 = vrot.slane %v1519, 4
        %vm1525 = vcmp.ge.s32.totalorder %v575, 4
        %v1526 = vsel %vm1525, 1, 0
        %vm1527 = vcmp.eq.s32.totalorder %v1526, 1
        %v1528 = vsel %vm1527, %v1524, 0.0
        %v1529 = vlaneseq
        %v1530 = vshrl.u32 %v1529, 7
        %v1531 = vsub.s32 0, %v1530
        %v1532 = vrot.slane %v1521, %v1531
        %v1533 = vmul.f32 %v1532, %v1528
        %v1535 = vlaneseq
        %v1536 = vshrl.u32 %v1535, 7
        %v1537 = vsub.s32 0, %v1536
        %v1538 = vrot.slane %v1523, %v1537
        %v1540 = vadd.f32 %v1538, %v1533
        %v1541 = vlaneseq
        %v1542 = vshrl.u32 %v1541, 7
        %v1543 = vsub.s32 1, %v1542
        %v1544 = vrot.slane %v1521, %v1543
        %v1545 = vmul.f32 %v1544, %v1519
        %v1546 = vadd.f32 %v1540, %v1545
        %vm1547 = vcmp.lt.s32.totalorder %v575, 4
        %v1548 = vsel %vm1547, 1, 0
        %vm1549 = vcmp.eq.s32.totalorder %v1548, 1
        %v1550 = vsel %vm1549, %v1524, 0.0
        %v1551 = vlaneseq
        %v1552 = vshrl.u32 %v1551, 7
        %v1553 = vsub.s32 2, %v1552
        %v1554 = vrot.slane %v1521, %v1553
        %v1555 = vmul.f32 %v1554, %v1550
        %v1556 = vadd.f32 %v1546, %v1555
        %vm1557 = vcmp.ge.f32.partialorder %v1556, 0.0
        %s1558 = scalar_lea.vmem %s9, 2
        %v1559 = vld [vmem:[%s1558] sm:$0x1]
        %v1561 = vlaneseq
        %v1562 = vshrl.u32 %v1561, 7
        %v1563 = vsub.s32 0, %v1562
        %v1564 = vrot.slane %v1559, %v1563
        %v1566 = vmul.f32 %v1564, %v1556
        %v1567 = vsel %vm1557, %v1556, %v1566
        %v1568 = vsel %vm669, %v1567, 0.0
        %1569 = vadd.xlane.f32.xlu0 %v1568
        %v1570 = vpop.xlane.xlu0 %1569
        %v1571 = vmul.f32 %v1570, %v673
        %v1572 = vrot.slane %v1571, 4
        %v1573 = vadd.f32 %v1571, %v1572
        %v1574 = vrot.slane %v1573, 2
        %v1575 = vadd.f32 %v1573, %v1574
        %v1576 = vrot.slane %v1575, 1
        %v1577 = vadd.f32 %v1575, %v1576
        %v1578 = vmul.f32 %v1577, %v681
        %v1579 = vsub.f32 %v1567, %v1578
        %v1580 = vmul.f32 %v1579, %v1579
        %v1581 = vsel %vm669, %v1580, 0.0
        %1582 = vadd.xlane.f32.xlu0 %v1581
        %v1583 = vpop.xlane.xlu0 %1582
        %v1584 = vmul.f32 %v1583, %v673
        %v1585 = vrot.slane %v1584, 4
        %v1586 = vadd.f32 %v1584, %v1585
        %v1587 = vrot.slane %v1586, 2
        %v1588 = vadd.f32 %v1586, %v1587
        %v1589 = vrot.slane %v1588, 1
        %v1590 = vadd.f32 %v1588, %v1589
        %v1591 = vmul.f32 %v1590, %v681
        %s1592 = scalar_lea.vmem %s10, 2
        %v1593 = vld [vmem:[%s1592] sm:$0x1]
        %v1595 = vlaneseq
        %v1596 = vshrl.u32 %v1595, 7
        %v1597 = vsub.s32 0, %v1596
        %v1598 = vrot.slane %v1593, %v1597
        %v1600 = vmul.f32 %v1598, %v1579
        %v1601 = vadd.f32 %v1591, 1e-05
        %v1602 = vrsqrt.pop %v1601
        %v1603 = vmul.f32 %v1600, %v1602
        %s1604 = scalar_lea.vmem %s11, 2
        %v1605 = vld [vmem:[%s1604] sm:$0x1]
        %v1607 = vlaneseq
        %v1608 = vshrl.u32 %v1607, 7
        %v1609 = vsub.s32 0, %v1608
        %v1610 = vrot.slane %v1605, %v1609
        %v1612 = vadd.f32 %v1603, %v1610
        %s1613 = scalar_lea.vmem %s12, 64
        %v1614 = vld [vmem:[%s1613] sm:$0xff]
        %v1615 = vld [vmem:[%s1613 + $0x8] sm:$0xff]
        %v1616 = vld [vmem:[%s1613 + $0x10] sm:$0xff]
        %v1617 = vld [vmem:[%s1613 + $0x18] sm:$0xff]
        %v1619 = vsel %vm669, %v1612, 0
        %1621 = vmatprep.subr.mxu0 0.0
        %1622 = vmatpush1.msra.mxu0 0.0
        %1623 = vmatprep.subr.mxu0 0.0
        %1624 = vmatpush1.msra.mxu0 0.0
        %1625 = vmatprep.subr.mxu0 0.0
        %1626 = vmatpush1.msra.mxu0 0.0
        %1627 = vmatprep.subr.mxu0 0.0
        %1628 = vmatpush1.msra.mxu0 0.0
        %1629 = vmatprep.subr.mxu0 0.0
        %1630 = vmatpush1.msra.mxu0 0.0
        %1631 = vmatprep.subr.mxu0 0.0
        %1632 = vmatpush1.msra.mxu0 0.0
        %1633 = vmatprep.subr.mxu0 0.0
        %1634 = vmatpush1.msra.mxu0 0.0
        %1635 = vmatprep.subr.mxu0 0.0
        %1636 = vmatpush1.msra.mxu0 0.0
        %1637 = vmatprep.subr.mxu0 0.0
        %1638 = vmatpush1.msra.mxu0 0.0
        %1639 = vmatprep.subr.mxu0 0.0
        %1640 = vmatpush1.msra.mxu0 0.0
        %1641 = vmatprep.subr.mxu0 0.0
        %1642 = vmatpush1.msra.mxu0 0.0
        %1643 = vmatprep.subr.mxu0 0.0
        %1644 = vmatpush1.msra.mxu0 0.0
        %1645 = vmatprep.subr.mxu0 0.0
        %1646 = vmatpush1.msra.mxu0 %v1617
        %1647 = vmatprep.subr.mxu0 0.0
        %1648 = vmatpush1.msra.mxu0 %v1616
        %1649 = vmatprep.subr.mxu0 0.0
        %1650 = vmatpush1.msra.mxu0 %v1615
        %1651 = vmatprep.subr.mxu0 0.0
        %1652 = vmatpush1.msra.mxu0 %v1614
        %1653 = vmatprep.subr.mxu0 0.0
        %1654 = vmatpush2.msra.mxu0 0.0
        %1655 = vmatprep.subr.mxu0 0.0
        %1656 = vmatpush2.msra.mxu0 0.0
        %1657 = vmatprep.subr.mxu0 0.0
        %1658 = vmatpush2.msra.mxu0 0.0
        %1659 = vmatprep.subr.mxu0 0.0
        %1660 = vmatpush2.msra.mxu0 0.0
        %1661 = vmatprep.subr.mxu0 0.0
        %1662 = vmatpush2.msra.mxu0 0.0
        %1663 = vmatprep.subr.mxu0 0.0
        %1664 = vmatpush2.msra.mxu0 0.0
        %1665 = vmatprep.subr.mxu0 0.0
        %1666 = vmatpush2.msra.mxu0 0.0
        %1667 = vmatprep.subr.mxu0 0.0
        %1668 = vmatpush2.msra.mxu0 0.0
        %1669 = vmatprep.subr.mxu0 0.0
        %1670 = vmatpush2.msra.mxu0 0.0
        %1671 = vmatprep.subr.mxu0 0.0
        %1672 = vmatpush2.msra.mxu0 0.0
        %1673 = vmatprep.subr.mxu0 0.0
        %1674 = vmatpush2.msra.mxu0 0.0
        %1675 = vmatprep.subr.mxu0 0.0
        %1676 = vmatpush2.msra.mxu0 0.0
        %1677 = vmatprep.subr.mxu0 0.0
        %1678 = vmatpush2.msra.mxu0 0.0
        %1679 = vmatprep.subr.mxu0 0.0
        %1680 = vmatpush2.msra.mxu0 0.0
        %1681 = vmatprep.subr.mxu0 0.0
        %1682 = vmatpush2.msra.mxu0 0.0
        %1683 = vmatprep.subr.mxu0 0.0
        %1684 = vmatpush2.msra.mxu0 0.0
        %1685 = vmatprep.mubr.f32.mxu0 0.0
        %1686 = vmatmul.mubr.f32.gmra.mxu0 %v1619
        %v1687 = vpop.f32.mrf.mxu0
        %v1688 = vadd.f32 0.0, %v1687
        %v1689 = vpop.f32.mrf.mxu0
        %1690 = vdwg.mxu0
        %v1691 = vadd.f32 %v1294, %v1688
        %s1692 = scalar_lea.vmem %s13, 2
        %v1693 = vld [vmem:[%s1692] sm:$0x1]
        %v1695 = vlaneseq
        %v1696 = vshrl.u32 %v1695, 7
        %v1697 = vsub.s32 0, %v1696
        %v1698 = vrot.slane %v1693, %v1697
        %v1700 = vadd.f32 %v1691, %v1698
        %s1701 = scalar_lea.vmem %s14, 64
        %v1702 = vld [vmem:[%s1701] sm:$0xff]
        %v1703 = vld [vmem:[%s1701 + $0x8] sm:$0xff]
        %v1704 = vld [vmem:[%s1701 + $0x10] sm:$0xff]
        %v1705 = vld [vmem:[%s1701 + $0x18] sm:$0xff]
        %1706 = vmatprep.subr.mxu0 0.0
        %1707 = vmatpush1.msra.mxu0 0.0
        %1708 = vmatprep.subr.mxu0 0.0
        %1709 = vmatpush1.msra.mxu0 0.0
        %1710 = vmatprep.subr.mxu0 0.0
        %1711 = vmatpush1.msra.mxu0 0.0
        %1712 = vmatprep.subr.mxu0 0.0
        %1713 = vmatpush1.msra.mxu0 0.0
        %1714 = vmatprep.subr.mxu0 0.0
        %1715 = vmatpush1.msra.mxu0 0.0
        %1716 = vmatprep.subr.mxu0 0.0
        %1717 = vmatpush1.msra.mxu0 0.0
        %1718 = vmatprep.subr.mxu0 0.0
        %1719 = vmatpush1.msra.mxu0 0.0
        %1720 = vmatprep.subr.mxu0 0.0
        %1721 = vmatpush1.msra.mxu0 0.0
        %1722 = vmatprep.subr.mxu0 0.0
        %1723 = vmatpush1.msra.mxu0 0.0
        %1724 = vmatprep.subr.mxu0 0.0
        %1725 = vmatpush1.msra.mxu0 0.0
        %1726 = vmatprep.subr.mxu0 0.0
        %1727 = vmatpush1.msra.mxu0 0.0
        %1728 = vmatprep.subr.mxu0 0.0
        %1729 = vmatpush1.msra.mxu0 0.0
        %1730 = vmatprep.subr.mxu0 0.0
        %1731 = vmatpush1.msra.mxu0 %v1705
        %1732 = vmatprep.subr.mxu0 0.0
        %1733 = vmatpush1.msra.mxu0 %v1704
        %1734 = vmatprep.subr.mxu0 0.0
        %1735 = vmatpush1.msra.mxu0 %v1703
        %1736 = vmatprep.subr.mxu0 0.0
        %1737 = vmatpush1.msra.mxu0 %v1702
        %1738 = vmatprep.subr.mxu0 0.0
        %1739 = vmatpush2.msra.mxu0 0.0
        %1740 = vmatprep.subr.mxu0 0.0
        %1741 = vmatpush2.msra.mxu0 0.0
        %1742 = vmatprep.subr.mxu0 0.0
        %1743 = vmatpush2.msra.mxu0 0.0
        %1744 = vmatprep.subr.mxu0 0.0
        %1745 = vmatpush2.msra.mxu0 0.0
        %1746 = vmatprep.subr.mxu0 0.0
        %1747 = vmatpush2.msra.mxu0 0.0
        %1748 = vmatprep.subr.mxu0 0.0
        %1749 = vmatpush2.msra.mxu0 0.0
        %1750 = vmatprep.subr.mxu0 0.0
        %1751 = vmatpush2.msra.mxu0 0.0
        %1752 = vmatprep.subr.mxu0 0.0
        %1753 = vmatpush2.msra.mxu0 0.0
        %1754 = vmatprep.subr.mxu0 0.0
        %1755 = vmatpush2.msra.mxu0 0.0
        %1756 = vmatprep.subr.mxu0 0.0
        %1757 = vmatpush2.msra.mxu0 0.0
        %1758 = vmatprep.subr.mxu0 0.0
        %1759 = vmatpush2.msra.mxu0 0.0
        %1760 = vmatprep.subr.mxu0 0.0
        %1761 = vmatpush2.msra.mxu0 0.0
        %1762 = vmatprep.subr.mxu0 0.0
        %1763 = vmatpush2.msra.mxu0 0.0
        %1764 = vmatprep.subr.mxu0 0.0
        %1765 = vmatpush2.msra.mxu0 0.0
        %1766 = vmatprep.subr.mxu0 0.0
        %1767 = vmatpush2.msra.mxu0 0.0
        %1768 = vmatprep.subr.mxu0 0.0
        %1769 = vmatpush2.msra.mxu0 0.0
        %1770 = vmatprep.mubr.f32.mxu0 0.0
        %1771 = vmatmul.mubr.f32.gmra.mxu0 %v1619
        %v1772 = vpop.f32.mrf.mxu0
        %v1773 = vadd.f32 0.0, %v1772
        %v1774 = vpop.f32.mrf.mxu0
        %1775 = vdwg.mxu0
        %v1776 = vadd.f32 %v1379, %v1773
        %s1777 = scalar_lea.vmem %s15, 2
        %v1778 = vld [vmem:[%s1777] sm:$0x1]
        %v1780 = vlaneseq
        %v1781 = vshrl.u32 %v1780, 7
        %v1782 = vsub.s32 0, %v1781
        %v1783 = vrot.slane %v1778, %v1782
        %v1785 = vadd.f32 %v1776, %v1783
        %1786 = vst.msk [vmem:[%s553] sm:$0xff] %vm585, %v1700
        %1787 = vst.msk [vmem:[%s571] sm:$0xff] %vm585, %v1785
        %s1788 = sand.u32 %s386, 1
        %s1789 = scalar_lea.sflag [#allocation3], %s1788
        %s1790 = sand.u32 %s386, 1
        %s1791 = smul.addr %s1790, 8
        %s1792 = scalar_lea.vmem [#allocation2], %s1791
        %p1793 = scmp.lt.s32.totalorder %s32, 1
        %s1794 = scalar_select %p1793, %s32, 1
        %s1795 = smul.addr %s1794, 8
        %s1796 = scalar_lea.vmem %s17, %s1795
        // Predicated region
        $region85: #{mb_convtasnet_forward.4} parent=83 // pred_check
          %p1797 = pneg %p396
        $region86: #{mb_convtasnet_forward.4} parent=83 // pred_check_branch
          %1799 = sbr.rel (%p1797) target = $region88
        $region87: #{mb_convtasnet_forward.4} parent=83 // pred_region
          %s1801 = ssub.s32 128, 128
          %1802 = vsyncadd %s1789, %s1801
          %s1803 = smul.addr %s32, 128
          %s1804 = scalar_lea.hbm %s16, %s1803
          %s1806 = sshll.u32 %s1792, 4
          %s1807 = int_to_ptr.vmem [resolvable:$true] %s1806
          %1809 = dma.vmem_to_hbm [thread:$0]  %s1807, 128, %s1804, %s1789
        $region88: #{mb_convtasnet_forward.4} parent=83 // pred_fallthru
          _
        // Predicated region
        $region89: #{mb_convtasnet_forward.4} parent=83 // pred_check
          %p1810 = pneg %p422
        $region90: #{mb_convtasnet_forward.4} parent=83 // pred_check_branch
          %1812 = sbr.rel (%p1810) target = $region92
        $region91: #{mb_convtasnet_forward.4} parent=83 // pred_region
          _
        $region92: #{mb_convtasnet_forward.4} parent=83 // pred_fallthru
          _
      $region84: #{mb_convtasnet_forward.4} parent=5 // pred_fallthru
        _
      %p1813 = scmp.le.s32.totalorder 2, %s27
      // Predicated region
      $region93: #{mb_convtasnet_forward.4} parent=5 // pred_check
        %p1814 = pneg %p1813
      $region94: #{mb_convtasnet_forward.4} parent=5 // pred_check_branch
        %1816 = sbr.rel (%p1814) target = $region96
      $region95: #{mb_convtasnet_forward.4} parent=5 // pred_region
        %s1817 = ssub.s32 %s27, 2
        // Predicated region
        $region97: #{mb_convtasnet_forward.4} parent=95 // pred_check
          %p1818 = pneg %p402
        $region98: #{mb_convtasnet_forward.4} parent=95 // pred_check_branch
          %1820 = sbr.rel (%p1818) target = $region100
        $region99: #{mb_convtasnet_forward.4} parent=95 // pred_region
          %s1821 = sand.u32 %s387, 1
          %s1822 = scalar_lea.sflag [#allocation3], %s1821
          %s1823 = sand.u32 %s387, 1
          %s1824 = smul.addr %s1823, 8
          %s1825 = scalar_lea.vmem [#allocation2], %s1824
          %1826 = dma.done %s1822, 128
        $region100: #{mb_convtasnet_forward.4} parent=95 // pred_fallthru
          _
        // Predicated region
        $region101: #{mb_convtasnet_forward.4} parent=95 // pred_check
          %p1827 = pneg %p428
        $region102: #{mb_convtasnet_forward.4} parent=95 // pred_check_branch
          %1829 = sbr.rel (%p1827) target = $region104
        $region103: #{mb_convtasnet_forward.4} parent=95 // pred_region
          %p1830 = scmp.lt.s32.totalorder %s33, 1
          %s1831 = scalar_select %p1830, %s33, 1
          %s1832 = smul.addr %s1831, 8
          %s1833 = scalar_lea.vmem %s17, %s1832
        $region104: #{mb_convtasnet_forward.4} parent=95 // pred_fallthru
          _
      $region96: #{mb_convtasnet_forward.4} parent=5 // pred_fallthru
        _
    $region6: #{mb_convtasnet_forward.4} parent=1 // loop_footer
      %s31 = sadd.s32 1, %s27
    $region7: #{mb_convtasnet_forward.4} parent=1 // loop_footer_branch
      %26 = sbr.rel target = $region3
    $region8: #{mb_convtasnet_forward.4} parent=1 // loop_exit
      _
    %1834 = vsyncpa [#allocation3], 1
    %s1835 = scalar_lea.sflag [#allocation3], 1
    %1836 = vsyncpa %s1835, 1

</llo_original>
